<compile_context>
chip_gen: v7x
topology: tpu7x:2x2x1
jax: 0.10.0
libtpu: 0.0.40
codegen_flags: <defaults>
</compile_context>

<pallas_src>
import jax
import jax.numpy as jnp
from jax.experimental import pallas as pl
from jax.experimental.pallas import tpu as pltpu

# --- module constants (from model.py) ---
BLOCK_SIZE = 64
N_EMBD = 384
NUM_HEADS = 6
HEAD_SIZE = N_EMBD // NUM_HEADS  # 64


# ---------------------------------------------------------------------------
# Fused kernel: one batch row per grid step.
#   qkv    = x @ Wqkv                                   (T, 3*C)  one wide matmul
#   per head h:
#     wei_h = softmax(mask(q_h k_h^T * C^-0.5))         (T, T)
#     acc  += (wei_h @ v_h) @ Wproj[h*hs:(h+1)*hs, :]   fused per-head projection
#   out    = acc + b_proj                               (T, C)    lane-dense store
# ---------------------------------------------------------------------------
def mha_fused_kernel(x_ref, wqkv_ref, wp_ref, bp_ref, o_ref):
    x = x_ref[0]                     # (T, C)
    T, C = x.shape

    # Single wide QKV projection: (T, C) @ (C, 3C) -> (T, 3C)
    qkv = jnp.dot(x, wqkv_ref[...], preferred_element_type=jnp.float32)

    # NB: PyTorch scales by C**-0.5 with C = n_embd (not head_size).
    scale = 1.0 / (float(C) ** 0.5)

    row = jax.lax.broadcasted_iota(jnp.int32, (T, T), 0)
    col = jax.lax.broadcasted_iota(jnp.int32, (T, T), 1)
    causal = row >= col

    # Start the accumulator with the broadcast projection bias; per-head
    # partial projections are summed into it (no lane-axis concat needed).
    acc = jnp.broadcast_to(bp_ref[...], (T, C)).astype(jnp.float32)

    for h in range(NUM_HEADS):
        lo = h * HEAD_SIZE
        hi = (h + 1) * HEAD_SIZE
        q = qkv[:, lo:hi]                    # (T, hs)
        k = qkv[:, C + lo:C + hi]            # (T, hs)
        v = qkv[:, 2 * C + lo:2 * C + hi]    # (T, hs)

        # q @ k^T without materializing a transposed k.
        scores = jax.lax.dot_general(
            q, k,
            dimension_numbers=(((1,), (1,)), ((), ())),
            preferred_element_type=jnp.float32) * scale                # (T, T)

        scores = jnp.where(causal, scores, -jnp.inf)

        m = jnp.max(scores, axis=-1, keepdims=True)
        e = jnp.exp(scores - m)
        # approx=False keeps full precision vs. the f32 reference (1e-4 tol).
        wei = e * pl.reciprocal(jnp.sum(e, axis=-1, keepdims=True), approx=False)

        o_h = jnp.dot(wei, v, preferred_element_type=jnp.float32)     # (T, hs)

        # Fused per-head output projection:  o_h @ Wproj[lo:hi, :] -> (T, C)
        acc = acc + jnp.dot(o_h, wp_ref[lo:hi, :],
                            preferred_element_type=jnp.float32)

    # Lane-dense (T, 384) store — full unmasked vst.
    o_ref[0] = acc


def multi_head_attention(x, wq, wk, wv, w_proj, b_proj):
    """x: (B, T, C);  wq/wk/wv: (H, C, hs);  w_proj: (C, C);  b_proj: (C,)."""
    B, T, C = x.shape
    H, _, hs = wq.shape

    # Pack per-head weights into one (C, 3*C) QKV matrix (wrapper-side, one-off):
    # columns [0:C)   = Q heads, head h occupies cols h*hs:(h+1)*hs
    # columns [C:2C)  = K heads, columns [2C:3C) = V heads (same layout).
    def flatten_heads(w):            # (H, C, hs) -> (C, H*hs)
        return jnp.transpose(w, (1, 0, 2)).reshape(C, H * hs)

    wqkv = jnp.concatenate(
        [flatten_heads(wq), flatten_heads(wk), flatten_heads(wv)], axis=1)  # (C, 3C)

    flops = (2 * B * T * C * (3 * C)          # QKV projection
             + 2 * B * H * (2 * T * T * hs)   # scores + wei @ v
             + 2 * B * T * C * C)             # output projection
    bytes_accessed = 4 * (B * T * C            # x
                          + C * 3 * C          # Wqkv
                          + C * C + C          # Wproj + bias
                          + B * T * C)         # out
    transcendentals = B * H * T * T            # exp

    return pl.pallas_call(
        mha_fused_kernel,
        out_shape=jax.ShapeDtypeStruct((B, T, C), jnp.float32),
        grid_spec=pltpu.PrefetchScalarGridSpec(
            num_scalar_prefetch=0,
            grid=(B,),
            in_specs=[
                pl.BlockSpec((1, T, C), lambda b: (b, 0, 0)),        # x row
                pl.BlockSpec((C, 3 * C), lambda b: (0, 0)),          # Wqkv
                pl.BlockSpec((C, C), lambda b: (0, 0)),              # Wproj
                pl.BlockSpec((1, C), lambda b: (0, 0)),              # bias
            ],
            out_specs=pl.BlockSpec((1, T, C), lambda b: (b, 0, 0)),
        ),
        compiler_params=pltpu.CompilerParams(
            dimension_semantics=("parallel",)),
        cost_estimate=pl.CostEstimate(
            flops=flops,
            transcendentals=transcendentals,
            bytes_accessed=bytes_accessed),
    )(x, wqkv, w_proj, b_proj.reshape(1, C))


def reference(x, wq, wk, wv, w_proj, b_proj):
    """Pure-JAX reference mirroring the PyTorch forward."""
    B, T, C = x.shape
    outs = []
    for h in range(wq.shape[0]):
        q = x @ wq[h]
        k = x @ wk[h]
        v = x @ wv[h]
        wei = (q @ jnp.swapaxes(k, -2, -1)) * (C ** -0.5)
        tril = jnp.tril(jnp.ones((T, T)))
        wei = jnp.where(tril == 0, -jnp.inf, wei)
        wei = jax.nn.softmax(wei, axis=-1)
        outs.append(wei @ v)
    cat = jnp.concatenate(outs, axis=-1)
    return cat @ w_proj + b_proj


if __name__ == "__main__":
    key = jax.random.PRNGKey(0)
    k_x, k_q, k_k, k_v, k_p, k_b = jax.random.split(key, 6)

    B, T, C = 2, BLOCK_SIZE, N_EMBD  # T = block_size = 64, C = n_embd = 384

    x = jax.random.normal(k_x, (B, T, C), dtype=jnp.float32)

    # deterministic synthetic parameters (nn.Linear stored transposed: (in, out))
    wq = jax.random.normal(k_q, (NUM_HEADS, C, HEAD_SIZE), dtype=jnp.float32) * 0.02
    wk = jax.random.normal(k_k, (NUM_HEADS, C, HEAD_SIZE), dtype=jnp.float32) * 0.02
    wv = jax.random.normal(k_v, (NUM_HEADS, C, HEAD_SIZE), dtype=jnp.float32) * 0.02
    w_proj = jax.random.normal(k_p, (C, C), dtype=jnp.float32) * 0.02
    b_proj = jax.random.normal(k_b, (C,), dtype=jnp.float32) * 0.02

    out = jax.jit(multi_head_attention)(x, wq, wk, wv, w_proj, b_proj)
    out = jax.block_until_ready(out)

    ref = reference(x, wq, wk, wv, w_proj, b_proj)
    assert out.shape == (B, T, C)
    assert jnp.allclose(out, ref, atol=1e-4, rtol=1e-4), "mismatch vs reference"

    print("KERNEL_OK")
</pallas_src>

<mosaic_0001>
module attributes {stable_mosaic.version = 11 : i64} {
  func.func @mha_fused_kernel(%arg0: i32, %arg1: memref<1x64x384xf32, #tpu.memory_space<vmem>>, %arg2: memref<384x1152xf32, #tpu.memory_space<vmem>>, %arg3: memref<384x384xf32, #tpu.memory_space<vmem>>, %arg4: memref<1x384xf32, #tpu.memory_space<vmem>>, %arg5: memref<1x64x384xf32, #tpu.memory_space<vmem>>) attributes {dimension_semantics = [#tpu.dimension_semantics<parallel>], iteration_bounds = array<i64: 2>, scalar_prefetch = 0 : i64, scratch_operands = 0 : i64, tpu.core_type = #tpu.core_type<tc>, window_params = [{transform_indices = @transform_0, window_bounds = array<i64: 1, 64, 384>}, {pipeline_mode = #tpu.pipeline_mode<synchronous>, transform_indices = @transform_1, window_bounds = array<i64: 384, 1152>}, {pipeline_mode = #tpu.pipeline_mode<synchronous>, transform_indices = @transform_2, window_bounds = array<i64: 384, 384>}, {pipeline_mode = #tpu.pipeline_mode<synchronous>, transform_indices = @transform_3, window_bounds = array<i64: 1, 384>}, {transform_indices = @transform_4, window_bounds = array<i64: 1, 64, 384>}]} {
    %c0 = arith.constant 0 : index
    %c0_0 = arith.constant 0 : index
    %c0_1 = arith.constant 0 : index
    %0 = vector.load %arg1[%c0, %c0_0, %c0_1] : memref<1x64x384xf32, #tpu.memory_space<vmem>>, vector<1x64x384xf32>
    %1 = vector.shape_cast %0 : vector<1x64x384xf32> to vector<64x384xf32>
    %c0_2 = arith.constant 0 : index
    %c0_3 = arith.constant 0 : index
    %2 = vector.load %arg2[%c0_2, %c0_3] : memref<384x1152xf32, #tpu.memory_space<vmem>>, vector<384x1152xf32>
    %cst = arith.constant dense<0.000000e+00> : vector<64x1152xf32>
    %3 = tpu.matmul %1, %2, %cst {dimension_numbers = #tpu.dot_dimension_numbers<[1], [0], [0], [1], [0, 0, 1, 1], [], []>} : vector<64x384xf32>, vector<384x1152xf32>, vector<64x1152xf32> -> vector<64x1152xf32>
    %4 = tpu.iota {dimensions = array<i32: 0>} : vector<64x64xi32>
    %5 = tpu.iota {dimensions = array<i32: 1>} : vector<64x64xi32>
    %6 = arith.cmpi sge, %4, %5 : vector<64x64xi32>
    %c0_4 = arith.constant 0 : index
    %c0_5 = arith.constant 0 : index
    %7 = vector.load %arg4[%c0_4, %c0_5] : memref<1x384xf32, #tpu.memory_space<vmem>>, vector<1x384xf32>
    %8 = vector.shape_cast %7 : vector<1x384xf32> to vector<1x384xf32>
    %9 = vector.broadcast %8 : vector<1x384xf32> to vector<64x384xf32>
    %10 = vector.extract_strided_slice %3 {offsets = [0, 0], sizes = [64, 64], strides = [1, 1]} : vector<64x1152xf32> to vector<64x64xf32>
    %11 = vector.extract_strided_slice %3 {offsets = [0, 384], sizes = [64, 64], strides = [1, 1]} : vector<64x1152xf32> to vector<64x64xf32>
    %12 = vector.extract_strided_slice %3 {offsets = [0, 768], sizes = [64, 64], strides = [1, 1]} : vector<64x1152xf32> to vector<64x64xf32>
    %cst_6 = arith.constant dense<0.000000e+00> : vector<64x64xf32>
    %13 = tpu.matmul %10, %11, %cst_6 {dimension_numbers = #tpu.dot_dimension_numbers<[1], [1], [0], [0], [0, 0, 1, 0], [], []>} : vector<64x64xf32>, vector<64x64xf32>, vector<64x64xf32> -> vector<64x64xf32>
    %cst_7 = arith.constant 0.0510310382 : f32
    %14 = vector.broadcast %cst_7 : f32 to vector<64x64xf32>
    %15 = arith.mulf %13, %14 : vector<64x64xf32>
    %cst_8 = arith.constant 0xFF800000 : f32
    %16 = vector.broadcast %cst_8 : f32 to vector<64x64xf32>
    %17 = arith.select %6, %15, %16 : vector<64x64xi1>, vector<64x64xf32>
    %cst_9 = arith.constant dense<0xFF800000> : vector<64xf32>
    %18 = vector.multi_reduction <maximumf>, %17, %cst_9 [1] : vector<64x64xf32> to vector<64xf32>
    %19 = vector.shape_cast %18 : vector<64xf32> to vector<64x1xf32>
    %20 = vector.broadcast %19 : vector<64x1xf32> to vector<64x64xf32>
    %21 = arith.subf %17, %20 : vector<64x64xf32>
    %22 = math.exp %21 : vector<64x64xf32>
    %cst_10 = arith.constant dense<0.000000e+00> : vector<64xf32>
    %23 = vector.multi_reduction <add>, %22, %cst_10 [1] : vector<64x64xf32> to vector<64xf32>
    %24 = vector.shape_cast %23 : vector<64xf32> to vector<64x1xf32>
    %25 = tpu.reciprocal %24 : vector<64x1xf32> -> vector<64x1xf32>
    %26 = vector.broadcast %25 : vector<64x1xf32> to vector<64x64xf32>
    %27 = arith.mulf %22, %26 : vector<64x64xf32>
    %cst_11 = arith.constant dense<0.000000e+00> : vector<64x64xf32>
    %28 = tpu.matmul %27, %12, %cst_11 {dimension_numbers = #tpu.dot_dimension_numbers<[1], [0], [0], [1], [0, 0, 1, 1], [], []>} : vector<64x64xf32>, vector<64x64xf32>, vector<64x64xf32> -> vector<64x64xf32>
    %c0_12 = arith.constant 0 : index
    %c0_13 = arith.constant 0 : index
    %29 = vector.load %arg3[%c0_12, %c0_13] : memref<384x384xf32, #tpu.memory_space<vmem>>, vector<64x384xf32>
    %cst_14 = arith.constant dense<0.000000e+00> : vector<64x384xf32>
    %30 = tpu.matmul %28, %29, %cst_14 {dimension_numbers = #tpu.dot_dimension_numbers<[1], [0], [0], [1], [0, 0, 1, 1], [], []>} : vector<64x64xf32>, vector<64x384xf32>, vector<64x384xf32> -> vector<64x384xf32>
    %31 = arith.addf %9, %30 : vector<64x384xf32>
    %32 = vector.extract_strided_slice %3 {offsets = [0, 64], sizes = [64, 64], strides = [1, 1]} : vector<64x1152xf32> to vector<64x64xf32>
    %33 = vector.extract_strided_slice %3 {offsets = [0, 448], sizes = [64, 64], strides = [1, 1]} : vector<64x1152xf32> to vector<64x64xf32>
    %34 = vector.extract_strided_slice %3 {offsets = [0, 832], sizes = [64, 64], strides = [1, 1]} : vector<64x1152xf32> to vector<64x64xf32>
    %cst_15 = arith.constant dense<0.000000e+00> : vector<64x64xf32>
    %35 = tpu.matmul %32, %33, %cst_15 {dimension_numbers = #tpu.dot_dimension_numbers<[1], [1], [0], [0], [0, 0, 1, 0], [], []>} : vector<64x64xf32>, vector<64x64xf32>, vector<64x64xf32> -> vector<64x64xf32>
    %cst_16 = arith.constant 0.0510310382 : f32
    %36 = vector.broadcast %cst_16 : f32 to vector<64x64xf32>
    %37 = arith.mulf %35, %36 : vector<64x64xf32>
    %cst_17 = arith.constant 0xFF800000 : f32
    %38 = vector.broadcast %cst_17 : f32 to vector<64x64xf32>
    %39 = arith.select %6, %37, %38 : vector<64x64xi1>, vector<64x64xf32>
    %cst_18 = arith.constant dense<0xFF800000> : vector<64xf32>
    %40 = vector.multi_reduction <maximumf>, %39, %cst_18 [1] : vector<64x64xf32> to vector<64xf32>
    %41 = vector.shape_cast %40 : vector<64xf32> to vector<64x1xf32>
    %42 = vector.broadcast %41 : vector<64x1xf32> to vector<64x64xf32>
    %43 = arith.subf %39, %42 : vector<64x64xf32>
    %44 = math.exp %43 : vector<64x64xf32>
    %cst_19 = arith.constant dense<0.000000e+00> : vector<64xf32>
    %45 = vector.multi_reduction <add>, %44, %cst_19 [1] : vector<64x64xf32> to vector<64xf32>
    %46 = vector.shape_cast %45 : vector<64xf32> to vector<64x1xf32>
    %47 = tpu.reciprocal %46 : vector<64x1xf32> -> vector<64x1xf32>
    %48 = vector.broadcast %47 : vector<64x1xf32> to vector<64x64xf32>
    %49 = arith.mulf %44, %48 : vector<64x64xf32>
    %cst_20 = arith.constant dense<0.000000e+00> : vector<64x64xf32>
    %50 = tpu.matmul %49, %34, %cst_20 {dimension_numbers = #tpu.dot_dimension_numbers<[1], [0], [0], [1], [0, 0, 1, 1], [], []>} : vector<64x64xf32>, vector<64x64xf32>, vector<64x64xf32> -> vector<64x64xf32>
    %c64 = arith.constant 64 : index
    %c0_21 = arith.constant 0 : index
    %51 = vector.load %arg3[%c64, %c0_21] : memref<384x384xf32, #tpu.memory_space<vmem>>, vector<64x384xf32>
    %cst_22 = arith.constant dense<0.000000e+00> : vector<64x384xf32>
    %52 = tpu.matmul %50, %51, %cst_22 {dimension_numbers = #tpu.dot_dimension_numbers<[1], [0], [0], [1], [0, 0, 1, 1], [], []>} : vector<64x64xf32>, vector<64x384xf32>, vector<64x384xf32> -> vector<64x384xf32>
    %53 = arith.addf %31, %52 : vector<64x384xf32>
    %54 = vector.extract_strided_slice %3 {offsets = [0, 128], sizes = [64, 64], strides = [1, 1]} : vector<64x1152xf32> to vector<64x64xf32>
    %55 = vector.extract_strided_slice %3 {offsets = [0, 512], sizes = [64, 64], strides = [1, 1]} : vector<64x1152xf32> to vector<64x64xf32>
    %56 = vector.extract_strided_slice %3 {offsets = [0, 896], sizes = [64, 64], strides = [1, 1]} : vector<64x1152xf32> to vector<64x64xf32>
    %cst_23 = arith.constant dense<0.000000e+00> : vector<64x64xf32>
    %57 = tpu.matmul %54, %55, %cst_23 {dimension_numbers = #tpu.dot_dimension_numbers<[1], [1], [0], [0], [0, 0, 1, 0], [], []>} : vector<64x64xf32>, vector<64x64xf32>, vector<64x64xf32> -> vector<64x64xf32>
    %cst_24 = arith.constant 0.0510310382 : f32
    %58 = vector.broadcast %cst_24 : f32 to vector<64x64xf32>
    %59 = arith.mulf %57, %58 : vector<64x64xf32>
    %cst_25 = arith.constant 0xFF800000 : f32
    %60 = vector.broadcast %cst_25 : f32 to vector<64x64xf32>
    %61 = arith.select %6, %59, %60 : vector<64x64xi1>, vector<64x64xf32>
    %cst_26 = arith.constant dense<0xFF800000> : vector<64xf32>
    %62 = vector.multi_reduction <maximumf>, %61, %cst_26 [1] : vector<64x64xf32> to vector<64xf32>
    %63 = vector.shape_cast %62 : vector<64xf32> to vector<64x1xf32>
    %64 = vector.broadcast %63 : vector<64x1xf32> to vector<64x64xf32>
    %65 = arith.subf %61, %64 : vector<64x64xf32>
    %66 = math.exp %65 : vector<64x64xf32>
    %cst_27 = arith.constant dense<0.000000e+00> : vector<64xf32>
    %67 = vector.multi_reduction <add>, %66, %cst_27 [1] : vector<64x64xf32> to vector<64xf32>
    %68 = vector.shape_cast %67 : vector<64xf32> to vector<64x1xf32>
    %69 = tpu.reciprocal %68 : vector<64x1xf32> -> vector<64x1xf32>
    %70 = vector.broadcast %69 : vector<64x1xf32> to vector<64x64xf32>
    %71 = arith.mulf %66, %70 : vector<64x64xf32>
    %cst_28 = arith.constant dense<0.000000e+00> : vector<64x64xf32>
    %72 = tpu.matmul %71, %56, %cst_28 {dimension_numbers = #tpu.dot_dimension_numbers<[1], [0], [0], [1], [0, 0, 1, 1], [], []>} : vector<64x64xf32>, vector<64x64xf32>, vector<64x64xf32> -> vector<64x64xf32>
    %c128 = arith.constant 128 : index
    %c0_29 = arith.constant 0 : index
    %73 = vector.load %arg3[%c128, %c0_29] : memref<384x384xf32, #tpu.memory_space<vmem>>, vector<64x384xf32>
    %cst_30 = arith.constant dense<0.000000e+00> : vector<64x384xf32>
    %74 = tpu.matmul %72, %73, %cst_30 {dimension_numbers = #tpu.dot_dimension_numbers<[1], [0], [0], [1], [0, 0, 1, 1], [], []>} : vector<64x64xf32>, vector<64x384xf32>, vector<64x384xf32> -> vector<64x384xf32>
    %75 = arith.addf %53, %74 : vector<64x384xf32>
    %76 = vector.extract_strided_slice %3 {offsets = [0, 192], sizes = [64, 64], strides = [1, 1]} : vector<64x1152xf32> to vector<64x64xf32>
    %77 = vector.extract_strided_slice %3 {offsets = [0, 576], sizes = [64, 64], strides = [1, 1]} : vector<64x1152xf32> to vector<64x64xf32>
    %78 = vector.extract_strided_slice %3 {offsets = [0, 960], sizes = [64, 64], strides = [1, 1]} : vector<64x1152xf32> to vector<64x64xf32>
    %cst_31 = arith.constant dense<0.000000e+00> : vector<64x64xf32>
    %79 = tpu.matmul %76, %77, %cst_31 {dimension_numbers = #tpu.dot_dimension_numbers<[1], [1], [0], [0], [0, 0, 1, 0], [], []>} : vector<64x64xf32>, vector<64x64xf32>, vector<64x64xf32> -> vector<64x64xf32>
    %cst_32 = arith.constant 0.0510310382 : f32
    %80 = vector.broadcast %cst_32 : f32 to vector<64x64xf32>
    %81 = arith.mulf %79, %80 : vector<64x64xf32>
    %cst_33 = arith.constant 0xFF800000 : f32
    %82 = vector.broadcast %cst_33 : f32 to vector<64x64xf32>
    %83 = arith.select %6, %81, %82 : vector<64x64xi1>, vector<64x64xf32>
    %cst_34 = arith.constant dense<0xFF800000> : vector<64xf32>
    %84 = vector.multi_reduction <maximumf>, %83, %cst_34 [1] : vector<64x64xf32> to vector<64xf32>
    %85 = vector.shape_cast %84 : vector<64xf32> to vector<64x1xf32>
    %86 = vector.broadcast %85 : vector<64x1xf32> to vector<64x64xf32>
    %87 = arith.subf %83, %86 : vector<64x64xf32>
    %88 = math.exp %87 : vector<64x64xf32>
    %cst_35 = arith.constant dense<0.000000e+00> : vector<64xf32>
    %89 = vector.multi_reduction <add>, %88, %cst_35 [1] : vector<64x64xf32> to vector<64xf32>
    %90 = vector.shape_cast %89 : vector<64xf32> to vector<64x1xf32>
    %91 = tpu.reciprocal %90 : vector<64x1xf32> -> vector<64x1xf32>
    %92 = vector.broadcast %91 : vector<64x1xf32> to vector<64x64xf32>
    %93 = arith.mulf %88, %92 : vector<64x64xf32>
    %cst_36 = arith.constant dense<0.000000e+00> : vector<64x64xf32>
    %94 = tpu.matmul %93, %78, %cst_36 {dimension_numbers = #tpu.dot_dimension_numbers<[1], [0], [0], [1], [0, 0, 1, 1], [], []>} : vector<64x64xf32>, vector<64x64xf32>, vector<64x64xf32> -> vector<64x64xf32>
    %c192 = arith.constant 192 : index
    %c0_37 = arith.constant 0 : index
    %95 = vector.load %arg3[%c192, %c0_37] : memref<384x384xf32, #tpu.memory_space<vmem>>, vector<64x384xf32>
    %cst_38 = arith.constant dense<0.000000e+00> : vector<64x384xf32>
    %96 = tpu.matmul %94, %95, %cst_38 {dimension_numbers = #tpu.dot_dimension_numbers<[1], [0], [0], [1], [0, 0, 1, 1], [], []>} : vector<64x64xf32>, vector<64x384xf32>, vector<64x384xf32> -> vector<64x384xf32>
    %97 = arith.addf %75, %96 : vector<64x384xf32>
    %98 = vector.extract_strided_slice %3 {offsets = [0, 256], sizes = [64, 64], strides = [1, 1]} : vector<64x1152xf32> to vector<64x64xf32>
    %99 = vector.extract_strided_slice %3 {offsets = [0, 640], sizes = [64, 64], strides = [1, 1]} : vector<64x1152xf32> to vector<64x64xf32>
    %100 = vector.extract_strided_slice %3 {offsets = [0, 1024], sizes = [64, 64], strides = [1, 1]} : vector<64x1152xf32> to vector<64x64xf32>
    %cst_39 = arith.constant dense<0.000000e+00> : vector<64x64xf32>
    %101 = tpu.matmul %98, %99, %cst_39 {dimension_numbers = #tpu.dot_dimension_numbers<[1], [1], [0], [0], [0, 0, 1, 0], [], []>} : vector<64x64xf32>, vector<64x64xf32>, vector<64x64xf32> -> vector<64x64xf32>
    %cst_40 = arith.constant 0.0510310382 : f32
    %102 = vector.broadcast %cst_40 : f32 to vector<64x64xf32>
    %103 = arith.mulf %101, %102 : vector<64x64xf32>
    %cst_41 = arith.constant 0xFF800000 : f32
    %104 = vector.broadcast %cst_41 : f32 to vector<64x64xf32>
    %105 = arith.select %6, %103, %104 : vector<64x64xi1>, vector<64x64xf32>
    %cst_42 = arith.constant dense<0xFF800000> : vector<64xf32>
    %106 = vector.multi_reduction <maximumf>, %105, %cst_42 [1] : vector<64x64xf32> to vector<64xf32>
    %107 = vector.shape_cast %106 : vector<64xf32> to vector<64x1xf32>
    %108 = vector.broadcast %107 : vector<64x1xf32> to vector<64x64xf32>
    %109 = arith.subf %105, %108 : vector<64x64xf32>
    %110 = math.exp %109 : vector<64x64xf32>
    %cst_43 = arith.constant dense<0.000000e+00> : vector<64xf32>
    %111 = vector.multi_reduction <add>, %110, %cst_43 [1] : vector<64x64xf32> to vector<64xf32>
    %112 = vector.shape_cast %111 : vector<64xf32> to vector<64x1xf32>
    %113 = tpu.reciprocal %112 : vector<64x1xf32> -> vector<64x1xf32>
    %114 = vector.broadcast %113 : vector<64x1xf32> to vector<64x64xf32>
    %115 = arith.mulf %110, %114 : vector<64x64xf32>
    %cst_44 = arith.constant dense<0.000000e+00> : vector<64x64xf32>
    %116 = tpu.matmul %115, %100, %cst_44 {dimension_numbers = #tpu.dot_dimension_numbers<[1], [0], [0], [1], [0, 0, 1, 1], [], []>} : vector<64x64xf32>, vector<64x64xf32>, vector<64x64xf32> -> vector<64x64xf32>
    %c256 = arith.constant 256 : index
    %c0_45 = arith.constant 0 : index
    %117 = vector.load %arg3[%c256, %c0_45] : memref<384x384xf32, #tpu.memory_space<vmem>>, vector<64x384xf32>
    %cst_46 = arith.constant dense<0.000000e+00> : vector<64x384xf32>
    %118 = tpu.matmul %116, %117, %cst_46 {dimension_numbers = #tpu.dot_dimension_numbers<[1], [0], [0], [1], [0, 0, 1, 1], [], []>} : vector<64x64xf32>, vector<64x384xf32>, vector<64x384xf32> -> vector<64x384xf32>
    %119 = arith.addf %97, %118 : vector<64x384xf32>
    %120 = vector.extract_strided_slice %3 {offsets = [0, 320], sizes = [64, 64], strides = [1, 1]} : vector<64x1152xf32> to vector<64x64xf32>
    %121 = vector.extract_strided_slice %3 {offsets = [0, 704], sizes = [64, 64], strides = [1, 1]} : vector<64x1152xf32> to vector<64x64xf32>
    %122 = vector.extract_strided_slice %3 {offsets = [0, 1088], sizes = [64, 64], strides = [1, 1]} : vector<64x1152xf32> to vector<64x64xf32>
    %cst_47 = arith.constant dense<0.000000e+00> : vector<64x64xf32>
    %123 = tpu.matmul %120, %121, %cst_47 {dimension_numbers = #tpu.dot_dimension_numbers<[1], [1], [0], [0], [0, 0, 1, 0], [], []>} : vector<64x64xf32>, vector<64x64xf32>, vector<64x64xf32> -> vector<64x64xf32>
    %cst_48 = arith.constant 0.0510310382 : f32
    %124 = vector.broadcast %cst_48 : f32 to vector<64x64xf32>
    %125 = arith.mulf %123, %124 : vector<64x64xf32>
    %cst_49 = arith.constant 0xFF800000 : f32
    %126 = vector.broadcast %cst_49 : f32 to vector<64x64xf32>
    %127 = arith.select %6, %125, %126 : vector<64x64xi1>, vector<64x64xf32>
    %cst_50 = arith.constant dense<0xFF800000> : vector<64xf32>
    %128 = vector.multi_reduction <maximumf>, %127, %cst_50 [1] : vector<64x64xf32> to vector<64xf32>
    %129 = vector.shape_cast %128 : vector<64xf32> to vector<64x1xf32>
    %130 = vector.broadcast %129 : vector<64x1xf32> to vector<64x64xf32>
    %131 = arith.subf %127, %130 : vector<64x64xf32>
    %132 = math.exp %131 : vector<64x64xf32>
    %cst_51 = arith.constant dense<0.000000e+00> : vector<64xf32>
    %133 = vector.multi_reduction <add>, %132, %cst_51 [1] : vector<64x64xf32> to vector<64xf32>
    %134 = vector.shape_cast %133 : vector<64xf32> to vector<64x1xf32>
    %135 = tpu.reciprocal %134 : vector<64x1xf32> -> vector<64x1xf32>
    %136 = vector.broadcast %135 : vector<64x1xf32> to vector<64x64xf32>
    %137 = arith.mulf %132, %136 : vector<64x64xf32>
    %cst_52 = arith.constant dense<0.000000e+00> : vector<64x64xf32>
    %138 = tpu.matmul %137, %122, %cst_52 {dimension_numbers = #tpu.dot_dimension_numbers<[1], [0], [0], [1], [0, 0, 1, 1], [], []>} : vector<64x64xf32>, vector<64x64xf32>, vector<64x64xf32> -> vector<64x64xf32>
    %c320 = arith.constant 320 : index
    %c0_53 = arith.constant 0 : index
    %139 = vector.load %arg3[%c320, %c0_53] : memref<384x384xf32, #tpu.memory_space<vmem>>, vector<64x384xf32>
    %cst_54 = arith.constant dense<0.000000e+00> : vector<64x384xf32>
    %140 = tpu.matmul %138, %139, %cst_54 {dimension_numbers = #tpu.dot_dimension_numbers<[1], [0], [0], [1], [0, 0, 1, 1], [], []>} : vector<64x64xf32>, vector<64x384xf32>, vector<64x384xf32> -> vector<64x384xf32>
    %141 = arith.addf %119, %140 : vector<64x384xf32>
    %c0_55 = arith.constant 0 : index
    %c0_56 = arith.constant 0 : index
    %c0_57 = arith.constant 0 : index
    %142 = vector.load %arg5[%c0_55, %c0_56, %c0_57] : memref<1x64x384xf32, #tpu.memory_space<vmem>>, vector<1x64x384xf32>
    %143 = vector.shape_cast %142 : vector<1x64x384xf32> to vector<64x384xf32>
    %144 = vector.shape_cast %141 : vector<64x384xf32> to vector<1x64x384xf32>
    tpu.vector_store %arg5[%c0_55, %c0_56, %c0_57], %144 {strides = array<i32>} : memref<1x64x384xf32, #tpu.memory_space<vmem>>, vector<1x64x384xf32>,
    return
  }
  func.func @transform_0(%arg0: i32) -> (i32, i32, i32) {
    %c0_i32 = arith.constant 0 : i32
    %c0_i32_0 = arith.constant 0 : i32
    %c0_i32_1 = arith.constant 0 : i32
    return %arg0, %c0_i32, %c0_i32_0 : i32, i32, i32
  }
  func.func @transform_1(%arg0: i32) -> (i32, i32) {
    %c0_i32 = arith.constant 0 : i32
    %c0_i32_0 = arith.constant 0 : i32
    %c0_i32_1 = arith.constant 0 : i32
    return %c0_i32, %c0_i32_0 : i32, i32
  }
  func.func @transform_2(%arg0: i32) -> (i32, i32) {
    %c0_i32 = arith.constant 0 : i32
    %c0_i32_0 = arith.constant 0 : i32
    %c0_i32_1 = arith.constant 0 : i32
    return %c0_i32, %c0_i32_0 : i32, i32
  }
  func.func @transform_3(%arg0: i32) -> (i32, i32) {
    %c0_i32 = arith.constant 0 : i32
    %c0_i32_0 = arith.constant 0 : i32
    %c0_i32_1 = arith.constant 0 : i32
    return %c0_i32, %c0_i32_0 : i32, i32
  }
  func.func @transform_4(%arg0: i32) -> (i32, i32, i32) {
    %c0_i32 = arith.constant 0 : i32
    %c0_i32_0 = arith.constant 0 : i32
    %c0_i32_1 = arith.constant 0 : i32
    return %arg0, %c0_i32, %c0_i32_0 : i32, i32, i32
  }
}

</mosaic_0001>

<llo_original>
// kernel: multi_head_attention.1
$region0: #{multi_head_attention.1}
  #allocation0 [shape = 'u32[]', space=smem, size = 0x4, offset = 0x4, fixed_abs, tag = 'smem constant byte address 0x4 - core index']
  #allocation1 [shape = 'u32[144,128]{1,0:T(1,128)}', space=vmem, size = 0x12000, scoped, tag = 'internal scratch']
  %s0 = inlined_call_operand.vmem [shape: f32[2,64,384], index: 0, kind: input, shape index: {}]
  %s1 = inlined_call_operand.vmem [shape: f32[384,1152], index: 1, kind: input, shape index: {}]
  %s2 = inlined_call_operand.vmem [shape: f32[384,384], index: 2, kind: input, shape index: {}]
  %s3 = inlined_call_operand.vmem [shape: f32[1,384], index: 3, kind: input, shape index: {}]
  %s4 = inlined_call_operand.hbm [shape: f32[2,64,384], index: 4, kind: output, shape index: {}]
  %s5 = sld [smem:[#allocation0]]
  $region49: #{multi_head_attention.1} parent=0
    _
  %s7 = ssub.s32 1, %s5
  %s8 = scalar_select 0, %s7, %s5
  $region1: #{multi_head_attention.1} parent=0
    #allocation2 [shape = 'u8[196608]{0}', space=vmem, size = 0x30000, scoped, tag = 'output window, operand 0']
    #allocation3 [shape = 's32[2]{0}', space=sflag, size = 0x8, scoped, tag = 'scoped memory for multi_head_attention.1']
    %9 = vsyncpa [#allocation3], 0
    %s10 = scalar_lea.sflag [#allocation3], 1
    %11 = vsyncpa %s10, 0
    loop: start=0, step=1, limit=4
    $region2: #{multi_head_attention.1} parent=1 // loop_pre_header
      _
    $region3: #{multi_head_attention.1} parent=1 // loop_header
      %s13 = sphi 0, %s17
      %p14 = scmp.ge.s32.totalorder %s13, 4
      %s23 = sphi 0, %s25
      %s26 = sphi 0, %s23
      %s27 = sphi 0, %s26
      %s43 = sphi 0, %s27
      %s47 = sphi 0, %s47
      %s49 = sphi 0, %s47
      %s50 = sphi 0, %s49
      %s64 = sphi 0, %s50
      %s68 = sphi 0, %s68
      %s70 = sphi 0, %s68
      %s71 = sphi 0, %s70
      %s85 = sphi 0, %s71
      %s89 = sphi 0, %s89
      %s91 = sphi 0, %s89
      %s92 = sphi 0, %s91
      %s106 = sphi 0, %s92
      %s112 = sphi 0, %s114
      %s115 = sphi 0, %s112
      %s116 = sphi 0, %s115
      %s132 = sphi 0, %s116
    $region4: #{multi_head_attention.1} parent=1 // loop_header_branch
      %16 = sbr.rel (%p14) target = $region8
    $region5: #{multi_head_attention.1} parent=1 // loop_body
      %s18 = ssub.s32 %s13, 1
      %s19 = ssub.s32 %s13, 2
      %s20 = sadd.s32 %s13, 1
      %s21 = ssub.s32 %s13, %s20
      %p22 = scmp.eq.s32.totalorder %s21, 0
      %s24 = sadd.s32 %s23, 1
      %s25 = scalar_select %p22, %s23, %s24
      %p28 = pneg %p22
      %p29 = scmp.eq.s32.totalorder %s13, 1
      %p30 = por %p28, %p29
      %p31 = scmp.ne.s32.totalorder %s23, %s26
      %p32 = scmp.eq.s32.totalorder %s13, 0
      %p33 = por %p31, %p32
      %p34 = scmp.ne.s32.totalorder %s23, %s26
      %p35 = scmp.eq.s32.totalorder %s18, 1
      %p36 = por %p34, %p35
      %p37 = scmp.ne.s32.totalorder %s26, %s27
      %p38 = scmp.eq.s32.totalorder %s18, 0
      %p39 = por %p37, %p38
      %p40 = scmp.ne.s32.totalorder %s26, %s27
      %p41 = scmp.eq.s32.totalorder %s19, 1
      %p42 = por %p40, %p41
      %p44 = scmp.ne.s32.totalorder %s27, %s43
      %p45 = scmp.eq.s32.totalorder %s19, 0
      %p46 = por %p44, %p45
      %s48 = sadd.s32 %s47, 1
      %p51 = scmp.eq.s32.totalorder %s13, 1
      %p52 = scmp.ne.s32.totalorder %s47, %s49
      %p53 = scmp.eq.s32.totalorder %s13, 0
      %p54 = por %p52, %p53
      %p55 = scmp.ne.s32.totalorder %s47, %s49
      %p56 = scmp.eq.s32.totalorder %s18, 1
      %p57 = por %p55, %p56
      %p58 = scmp.ne.s32.totalorder %s49, %s50
      %p59 = scmp.eq.s32.totalorder %s18, 0
      %p60 = por %p58, %p59
      %p61 = scmp.ne.s32.totalorder %s49, %s50
      %p62 = scmp.eq.s32.totalorder %s19, 1
      %p63 = por %p61, %p62
      %p65 = scmp.ne.s32.totalorder %s50, %s64
      %p66 = scmp.eq.s32.totalorder %s19, 0
      %p67 = por %p65, %p66
      %s69 = sadd.s32 %s68, 1
      %p72 = scmp.eq.s32.totalorder %s13, 1
      %p73 = scmp.ne.s32.totalorder %s68, %s70
      %p74 = scmp.eq.s32.totalorder %s13, 0
      %p75 = por %p73, %p74
      %p76 = scmp.ne.s32.totalorder %s68, %s70
      %p77 = scmp.eq.s32.totalorder %s18, 1
      %p78 = por %p76, %p77
      %p79 = scmp.ne.s32.totalorder %s70, %s71
      %p80 = scmp.eq.s32.totalorder %s18, 0
      %p81 = por %p79, %p80
      %p82 = scmp.ne.s32.totalorder %s70, %s71
      %p83 = scmp.eq.s32.totalorder %s19, 1
      %p84 = por %p82, %p83
      %p86 = scmp.ne.s32.totalorder %s71, %s85
      %p87 = scmp.eq.s32.totalorder %s19, 0
      %p88 = por %p86, %p87
      %s90 = sadd.s32 %s89, 1
      %p93 = scmp.eq.s32.totalorder %s13, 1
      %p94 = scmp.ne.s32.totalorder %s89, %s91
      %p95 = scmp.eq.s32.totalorder %s13, 0
      %p96 = por %p94, %p95
      %p97 = scmp.ne.s32.totalorder %s89, %s91
      %p98 = scmp.eq.s32.totalorder %s18, 1
      %p99 = por %p97, %p98
      %p100 = scmp.ne.s32.totalorder %s91, %s92
      %p101 = scmp.eq.s32.totalorder %s18, 0
      %p102 = por %p100, %p101
      %p103 = scmp.ne.s32.totalorder %s91, %s92
      %p104 = scmp.eq.s32.totalorder %s19, 1
      %p105 = por %p103, %p104
      %p107 = scmp.ne.s32.totalorder %s92, %s106
      %p108 = scmp.eq.s32.totalorder %s19, 0
      %p109 = por %p107, %p108
      %s110 = ssub.s32 %s13, %s20
      %p111 = scmp.eq.s32.totalorder %s110, 0
      %s113 = sadd.s32 %s112, 1
      %s114 = scalar_select %p111, %s112, %s113
      %p117 = pneg %p111
      %p118 = scmp.eq.s32.totalorder %s13, 1
      %p119 = por %p117, %p118
      %p120 = scmp.ne.s32.totalorder %s112, %s115
      %p121 = scmp.eq.s32.totalorder %s13, 0
      %p122 = por %p120, %p121
      %p123 = scmp.ne.s32.totalorder %s112, %s115
      %p124 = scmp.eq.s32.totalorder %s18, 1
      %p125 = por %p123, %p124
      %p126 = scmp.ne.s32.totalorder %s115, %s116
      %p127 = scmp.eq.s32.totalorder %s18, 0
      %p128 = por %p126, %p127
      %p129 = scmp.ne.s32.totalorder %s115, %s116
      %p130 = scmp.eq.s32.totalorder %s19, 1
      %p131 = por %p129, %p130
      %p133 = scmp.ne.s32.totalorder %s116, %s132
      %p134 = scmp.eq.s32.totalorder %s19, 0
      %p135 = por %p133, %p134
      %p136 = scmp.le.s32.totalorder 1, %s13
      %p137 = scmp.lt.s32.totalorder %s13, 3
      %p138 = pnand %p136, %p137
      %p139 = pneg %p138
      // Predicated region
      $region9: #{multi_head_attention.1} parent=5 // pred_check
        _
      $region10: #{multi_head_attention.1} parent=5 // pred_check_branch
        %141 = sbr.rel (%p138) target = $region12
      $region11: #{multi_head_attention.1} parent=5 // pred_region
        %s142 = ssub.s32 %s13, 1
        // Predicated region
        $region13: #{multi_head_attention.1} parent=11 // pred_check
          %p143 = pneg %p60
        $region14: #{multi_head_attention.1} parent=11 // pred_check_branch
          %145 = sbr.rel (%p143) target = $region16
        $region15: #{multi_head_attention.1} parent=11 // pred_region
          _
        $region16: #{multi_head_attention.1} parent=11 // pred_fallthru
          _
        // Predicated region
        $region17: #{multi_head_attention.1} parent=11 // pred_check
          %p146 = pneg %p81
        $region18: #{multi_head_attention.1} parent=11 // pred_check_branch
          %148 = sbr.rel (%p146) target = $region20
        $region19: #{multi_head_attention.1} parent=11 // pred_region
          _
        $region20: #{multi_head_attention.1} parent=11 // pred_fallthru
          _
        // Predicated region
        $region21: #{multi_head_attention.1} parent=11 // pred_check
          %p149 = pneg %p102
        $region22: #{multi_head_attention.1} parent=11 // pred_check_branch
          %151 = sbr.rel (%p149) target = $region24
        $region23: #{multi_head_attention.1} parent=11 // pred_region
          _
        $region24: #{multi_head_attention.1} parent=11 // pred_fallthru
          _
      $region12: #{multi_head_attention.1} parent=5 // pred_fallthru
        _
      %p152 = scmp.lt.s32.totalorder %s13, 2
      // Predicated region
      $region25: #{multi_head_attention.1} parent=5 // pred_check
        %p153 = pneg %p152
      $region26: #{multi_head_attention.1} parent=5 // pred_check_branch
        %155 = sbr.rel (%p153) target = $region28
      $region27: #{multi_head_attention.1} parent=5 // pred_region
        // Predicated region
        $region29: #{multi_head_attention.1} parent=27 // pred_check
          %p156 = pneg %p33
        $region30: #{multi_head_attention.1} parent=27 // pred_check_branch
          %158 = sbr.rel (%p156) target = $region32
        $region31: #{multi_head_attention.1} parent=27 // pred_region
          %p159 = scmp.lt.s32.totalorder %s13, 1
          %s160 = scalar_select %p159, %s13, 1
          %s161 = smul.addr %s160, 24
          %s162 = smul.addr %s161, 8
          %s163 = scalar_lea.vmem %s0, %s162
        $region32: #{multi_head_attention.1} parent=27 // pred_fallthru
          _
      $region28: #{multi_head_attention.1} parent=5 // pred_fallthru
        _
      %p164 = scmp.le.s32.totalorder 1, %s13
      %p165 = scmp.lt.s32.totalorder %s13, 3
      %p166 = pnand %p164, %p165
      %p167 = pneg %p166
      // Predicated region
      $region33: #{multi_head_attention.1} parent=5 // pred_check
        _
      $region34: #{multi_head_attention.1} parent=5 // pred_check_branch
        %169 = sbr.rel (%p166) target = $region36
      $region35: #{multi_head_attention.1} parent=5 // pred_region
        %s170 = ssub.s32 %s13, 1
        %p171 = scmp.lt.s32.totalorder %s18, 1
        %s172 = scalar_select %p171, %s18, 1
        %s173 = smul.addr %s172, 24
        %s174 = smul.addr %s173, 8
        %s175 = scalar_lea.vmem %s0, %s174
        %p176 = pneg %p39
        %p177 = pneg %p36
        %p178 = pneg %p60
        %p179 = pneg %p57
        %p180 = pneg %p81
        %p181 = pneg %p78
        %p182 = pneg %p102
        %p183 = pneg %p99
        %p184 = pneg %p128
        %p185 = pneg %p125
        %s186 = sand.u32 %s115, 1
        %s187 = scalar_lea.sflag [#allocation3], %s186
        %s188 = sand.u32 %s115, 1
        %s189 = smul.addr %s188, 192
        %s190 = scalar_lea.vmem [#allocation2], %s189
        %p191 = scmp.lt.s32.totalorder %s18, 1
        %s192 = scalar_select %p191, %s18, 1
        %s193 = smul.addr %s192, 24
        %s194 = smul.addr %s193, 8
        %s195 = scalar_lea.vmem %s0, %s194
        %v196 = vld [vmem:[%s195] sm:$0xff]
        %v197 = vld [vmem:[%s195 + $0x8] sm:$0xff]
        %v198 = vld [vmem:[%s195 + $0x10] sm:$0xff]
        %v199 = vld [vmem:[%s195 + $0x18] sm:$0xff]
        %v200 = vld [vmem:[%s195 + $0x20] sm:$0xff]
        %v201 = vld [vmem:[%s195 + $0x28] sm:$0xff]
        %v202 = vld [vmem:[%s195 + $0x30] sm:$0xff]
        %v203 = vld [vmem:[%s195 + $0x38] sm:$0xff]
        %v204 = vld [vmem:[%s195 + $0x40] sm:$0xff]
        %v205 = vld [vmem:[%s195 + $0x48] sm:$0xff]
        %v206 = vld [vmem:[%s195 + $0x50] sm:$0xff]
        %v207 = vld [vmem:[%s195 + $0x58] sm:$0xff]
        %v208 = vld [vmem:[%s195 + $0x60] sm:$0xff]
        %v209 = vld [vmem:[%s195 + $0x68] sm:$0xff]
        %v210 = vld [vmem:[%s195 + $0x70] sm:$0xff]
        %v211 = vld [vmem:[%s195 + $0x78] sm:$0xff]
        %v212 = vld [vmem:[%s195 + $0x80] sm:$0xff]
        %v213 = vld [vmem:[%s195 + $0x88] sm:$0xff]
        %v214 = vld [vmem:[%s195 + $0x90] sm:$0xff]
        %v215 = vld [vmem:[%s195 + $0x98] sm:$0xff]
        %v216 = vld [vmem:[%s195 + $0xa0] sm:$0xff]
        %v217 = vld [vmem:[%s195 + $0xa8] sm:$0xff]
        %v218 = vld [vmem:[%s195 + $0xb0] sm:$0xff]
        %v219 = vld [vmem:[%s195 + $0xb8] sm:$0xff]
        %v220 = vld [vmem:[%s1] sm:$0xff]
        %v221 = vld [vmem:[%s1 + $0x8] sm:$0xff]
        %v222 = vld [vmem:[%s1 + $0x10] sm:$0xff]
        %v223 = vld [vmem:[%s1 + $0x18] sm:$0xff]
        %v224 = vld [vmem:[%s1 + $0x20] sm:$0xff]
        %v225 = vld [vmem:[%s1 + $0x28] sm:$0xff]
        %v226 = vld [vmem:[%s1 + $0x30] sm:$0xff]
        %v227 = vld [vmem:[%s1 + $0x38] sm:$0xff]
        %v228 = vld [vmem:[%s1 + $0x40] sm:$0xff]
        %v229 = vld [vmem:[%s1 + $0x48] sm:$0xff]
        %v230 = vld [vmem:[%s1 + $0x50] sm:$0xff]
        %v231 = vld [vmem:[%s1 + $0x58] sm:$0xff]
        %v232 = vld [vmem:[%s1 + $0x60] sm:$0xff]
        %v233 = vld [vmem:[%s1 + $0x68] sm:$0xff]
        %v234 = vld [vmem:[%s1 + $0x70] sm:$0xff]
        %v235 = vld [vmem:[%s1 + $0x78] sm:$0xff]
        %v236 = vld [vmem:[%s1 + $0x80] sm:$0xff]
        %v237 = vld [vmem:[%s1 + $0x88] sm:$0xff]
        %v238 = vld [vmem:[%s1 + $0x90] sm:$0xff]
        %v239 = vld [vmem:[%s1 + $0x98] sm:$0xff]
        %v240 = vld [vmem:[%s1 + $0xa0] sm:$0xff]
        %v241 = vld [vmem:[%s1 + $0xa8] sm:$0xff]
        %v242 = vld [vmem:[%s1 + $0xb0] sm:$0xff]
        %v243 = vld [vmem:[%s1 + $0xb8] sm:$0xff]
        %v244 = vld [vmem:[%s1 + $0xc0] sm:$0xff]
        %v245 = vld [vmem:[%s1 + $0xc8] sm:$0xff]
        %v246 = vld [vmem:[%s1 + $0xd0] sm:$0xff]
        %v247 = vld [vmem:[%s1 + $0xd8] sm:$0xff]
        %v248 = vld [vmem:[%s1 + $0xe0] sm:$0xff]
        %v249 = vld [vmem:[%s1 + $0xe8] sm:$0xff]
        %v250 = vld [vmem:[%s1 + $0xf0] sm:$0xff]
        %v251 = vld [vmem:[%s1 + $0xf8] sm:$0xff]
        %v252 = vld [vmem:[%s1 + $0x100] sm:$0xff]
        %v253 = vld [vmem:[%s1 + $0x108] sm:$0xff]
        %v254 = vld [vmem:[%s1 + $0x110] sm:$0xff]
        %v255 = vld [vmem:[%s1 + $0x118] sm:$0xff]
        %v256 = vld [vmem:[%s1 + $0x120] sm:$0xff]
        %v257 = vld [vmem:[%s1 + $0x128] sm:$0xff]
        %v258 = vld [vmem:[%s1 + $0x130] sm:$0xff]
        %v259 = vld [vmem:[%s1 + $0x138] sm:$0xff]
        %v260 = vld [vmem:[%s1 + $0x140] sm:$0xff]
        %v261 = vld [vmem:[%s1 + $0x148] sm:$0xff]
        %v262 = vld [vmem:[%s1 + $0x150] sm:$0xff]
        %v263 = vld [vmem:[%s1 + $0x158] sm:$0xff]
        %v264 = vld [vmem:[%s1 + $0x160] sm:$0xff]
        %v265 = vld [vmem:[%s1 + $0x168] sm:$0xff]
        %v266 = vld [vmem:[%s1 + $0x170] sm:$0xff]
        %v267 = vld [vmem:[%s1 + $0x178] sm:$0xff]
        %v268 = vld [vmem:[%s1 + $0x180] sm:$0xff]
        %v269 = vld [vmem:[%s1 + $0x188] sm:$0xff]
        %v270 = vld [vmem:[%s1 + $0x190] sm:$0xff]
        %v271 = vld [vmem:[%s1 + $0x198] sm:$0xff]
        %v272 = vld [vmem:[%s1 + $0x1a0] sm:$0xff]
        %v273 = vld [vmem:[%s1 + $0x1a8] sm:$0xff]
        %v274 = vld [vmem:[%s1 + $0x1b0] sm:$0xff]
        %v275 = vld [vmem:[%s1 + $0x1b8] sm:$0xff]
        %v276 = vld [vmem:[%s1 + $0x1c0] sm:$0xff]
        %v277 = vld [vmem:[%s1 + $0x1c8] sm:$0xff]
        %v278 = vld [vmem:[%s1 + $0x1d0] sm:$0xff]
        %v279 = vld [vmem:[%s1 + $0x1d8] sm:$0xff]
        %v280 = vld [vmem:[%s1 + $0x1e0] sm:$0xff]
        %v281 = vld [vmem:[%s1 + $0x1e8] sm:$0xff]
        %v282 = vld [vmem:[%s1 + $0x1f0] sm:$0xff]
        %v283 = vld [vmem:[%s1 + $0x1f8] sm:$0xff]
        %v284 = vld [vmem:[%s1 + $0x200] sm:$0xff]
        %v285 = vld [vmem:[%s1 + $0x208] sm:$0xff]
        %v286 = vld [vmem:[%s1 + $0x210] sm:$0xff]
        %v287 = vld [vmem:[%s1 + $0x218] sm:$0xff]
        %v288 = vld [vmem:[%s1 + $0x220] sm:$0xff]
        %v289 = vld [vmem:[%s1 + $0x228] sm:$0xff]
        %v290 = vld [vmem:[%s1 + $0x230] sm:$0xff]
        %v291 = vld [vmem:[%s1 + $0x238] sm:$0xff]
        %v292 = vld [vmem:[%s1 + $0x240] sm:$0xff]
        %v293 = vld [vmem:[%s1 + $0x248] sm:$0xff]
        %v294 = vld [vmem:[%s1 + $0x250] sm:$0xff]
        %v295 = vld [vmem:[%s1 + $0x258] sm:$0xff]
        %v296 = vld [vmem:[%s1 + $0x260] sm:$0xff]
        %v297 = vld [vmem:[%s1 + $0x268] sm:$0xff]
        %v298 = vld [vmem:[%s1 + $0x270] sm:$0xff]
        %v299 = vld [vmem:[%s1 + $0x278] sm:$0xff]
        %v300 = vld [vmem:[%s1 + $0x280] sm:$0xff]
        %v301 = vld [vmem:[%s1 + $0x288] sm:$0xff]
        %v302 = vld [vmem:[%s1 + $0x290] sm:$0xff]
        %v303 = vld [vmem:[%s1 + $0x298] sm:$0xff]
        %v304 = vld [vmem:[%s1 + $0x2a0] sm:$0xff]
        %v305 = vld [vmem:[%s1 + $0x2a8] sm:$0xff]
        %v306 = vld [vmem:[%s1 + $0x2b0] sm:$0xff]
        %v307 = vld [vmem:[%s1 + $0x2b8] sm:$0xff]
        %v308 = vld [vmem:[%s1 + $0x2c0] sm:$0xff]
        %v309 = vld [vmem:[%s1 + $0x2c8] sm:$0xff]
        %v310 = vld [vmem:[%s1 + $0x2d0] sm:$0xff]
        %v311 = vld [vmem:[%s1 + $0x2d8] sm:$0xff]
        %v312 = vld [vmem:[%s1 + $0x2e0] sm:$0xff]
        %v313 = vld [vmem:[%s1 + $0x2e8] sm:$0xff]
        %v314 = vld [vmem:[%s1 + $0x2f0] sm:$0xff]
        %v315 = vld [vmem:[%s1 + $0x2f8] sm:$0xff]
        %v316 = vld [vmem:[%s1 + $0x300] sm:$0xff]
        %v317 = vld [vmem:[%s1 + $0x308] sm:$0xff]
        %v318 = vld [vmem:[%s1 + $0x310] sm:$0xff]
        %v319 = vld [vmem:[%s1 + $0x318] sm:$0xff]
        %v320 = vld [vmem:[%s1 + $0x320] sm:$0xff]
        %v321 = vld [vmem:[%s1 + $0x328] sm:$0xff]
        %v322 = vld [vmem:[%s1 + $0x330] sm:$0xff]
        %v323 = vld [vmem:[%s1 + $0x338] sm:$0xff]
        %v324 = vld [vmem:[%s1 + $0x340] sm:$0xff]
        %v325 = vld [vmem:[%s1 + $0x348] sm:$0xff]
        %v326 = vld [vmem:[%s1 + $0x350] sm:$0xff]
        %v327 = vld [vmem:[%s1 + $0x358] sm:$0xff]
        %v328 = vld [vmem:[%s1 + $0x360] sm:$0xff]
        %v329 = vld [vmem:[%s1 + $0x368] sm:$0xff]
        %v330 = vld [vmem:[%s1 + $0x370] sm:$0xff]
        %v331 = vld [vmem:[%s1 + $0x378] sm:$0xff]
        %v332 = vld [vmem:[%s1 + $0x380] sm:$0xff]
        %v333 = vld [vmem:[%s1 + $0x388] sm:$0xff]
        %v334 = vld [vmem:[%s1 + $0x390] sm:$0xff]
        %v335 = vld [vmem:[%s1 + $0x398] sm:$0xff]
        %v336 = vld [vmem:[%s1 + $0x3a0] sm:$0xff]
        %v337 = vld [vmem:[%s1 + $0x3a8] sm:$0xff]
        %v338 = vld [vmem:[%s1 + $0x3b0] sm:$0xff]
        %v339 = vld [vmem:[%s1 + $0x3b8] sm:$0xff]
        %v340 = vld [vmem:[%s1 + $0x3c0] sm:$0xff]
        %v341 = vld [vmem:[%s1 + $0x3c8] sm:$0xff]
        %v342 = vld [vmem:[%s1 + $0x3d0] sm:$0xff]
        %v343 = vld [vmem:[%s1 + $0x3d8] sm:$0xff]
        %v344 = vld [vmem:[%s1 + $0x3e0] sm:$0xff]
        %v345 = vld [vmem:[%s1 + $0x3e8] sm:$0xff]
        %v346 = vld [vmem:[%s1 + $0x3f0] sm:$0xff]
        %v347 = vld [vmem:[%s1 + $0x3f8] sm:$0xff]
        %v348 = vld [vmem:[%s1 + $0x400] sm:$0xff]
        %v349 = vld [vmem:[%s1 + $0x408] sm:$0xff]
        %v350 = vld [vmem:[%s1 + $0x410] sm:$0xff]
        %v351 = vld [vmem:[%s1 + $0x418] sm:$0xff]
        %v352 = vld [vmem:[%s1 + $0x420] sm:$0xff]
        %v353 = vld [vmem:[%s1 + $0x428] sm:$0xff]
        %v354 = vld [vmem:[%s1 + $0x430] sm:$0xff]
        %v355 = vld [vmem:[%s1 + $0x438] sm:$0xff]
        %v356 = vld [vmem:[%s1 + $0x440] sm:$0xff]
        %v357 = vld [vmem:[%s1 + $0x448] sm:$0xff]
        %v358 = vld [vmem:[%s1 + $0x450] sm:$0xff]
        %v359 = vld [vmem:[%s1 + $0x458] sm:$0xff]
        %v360 = vld [vmem:[%s1 + $0x460] sm:$0xff]
        %v361 = vld [vmem:[%s1 + $0x468] sm:$0xff]
        %v362 = vld [vmem:[%s1 + $0x470] sm:$0xff]
        %v363 = vld [vmem:[%s1 + $0x478] sm:$0xff]
        %v364 = vld [vmem:[%s1 + $0x480] sm:$0xff]
        %v365 = vld [vmem:[%s1 + $0x488] sm:$0xff]
        %v366 = vld [vmem:[%s1 + $0x490] sm:$0xff]
        %v367 = vld [vmem:[%s1 + $0x498] sm:$0xff]
        %v368 = vld [vmem:[%s1 + $0x4a0] sm:$0xff]
        %v369 = vld [vmem:[%s1 + $0x4a8] sm:$0xff]
        %v370 = vld [vmem:[%s1 + $0x4b0] sm:$0xff]
        %v371 = vld [vmem:[%s1 + $0x4b8] sm:$0xff]
        %v372 = vld [vmem:[%s1 + $0x4c0] sm:$0xff]
        %v373 = vld [vmem:[%s1 + $0x4c8] sm:$0xff]
        %v374 = vld [vmem:[%s1 + $0x4d0] sm:$0xff]
        %v375 = vld [vmem:[%s1 + $0x4d8] sm:$0xff]
        %v376 = vld [vmem:[%s1 + $0x4e0] sm:$0xff]
        %v377 = vld [vmem:[%s1 + $0x4e8] sm:$0xff]
        %v378 = vld [vmem:[%s1 + $0x4f0] sm:$0xff]
        %v379 = vld [vmem:[%s1 + $0x4f8] sm:$0xff]
        %v380 = vld [vmem:[%s1 + $0x500] sm:$0xff]
        %v381 = vld [vmem:[%s1 + $0x508] sm:$0xff]
        %v382 = vld [vmem:[%s1 + $0x510] sm:$0xff]
        %v383 = vld [vmem:[%s1 + $0x518] sm:$0xff]
        %v384 = vld [vmem:[%s1 + $0x520] sm:$0xff]
        %v385 = vld [vmem:[%s1 + $0x528] sm:$0xff]
        %v386 = vld [vmem:[%s1 + $0x530] sm:$0xff]
        %v387 = vld [vmem:[%s1 + $0x538] sm:$0xff]
        %v388 = vld [vmem:[%s1 + $0x540] sm:$0xff]
        %v389 = vld [vmem:[%s1 + $0x548] sm:$0xff]
        %v390 = vld [vmem:[%s1 + $0x550] sm:$0xff]
        %v391 = vld [vmem:[%s1 + $0x558] sm:$0xff]
        %v392 = vld [vmem:[%s1 + $0x560] sm:$0xff]
        %v393 = vld [vmem:[%s1 + $0x568] sm:$0xff]
        %v394 = vld [vmem:[%s1 + $0x570] sm:$0xff]
        %v395 = vld [vmem:[%s1 + $0x578] sm:$0xff]
        %v396 = vld [vmem:[%s1 + $0x580] sm:$0xff]
        %v397 = vld [vmem:[%s1 + $0x588] sm:$0xff]
        %v398 = vld [vmem:[%s1 + $0x590] sm:$0xff]
        %v399 = vld [vmem:[%s1 + $0x598] sm:$0xff]
        %v400 = vld [vmem:[%s1 + $0x5a0] sm:$0xff]
        %v401 = vld [vmem:[%s1 + $0x5a8] sm:$0xff]
        %v402 = vld [vmem:[%s1 + $0x5b0] sm:$0xff]
        %v403 = vld [vmem:[%s1 + $0x5b8] sm:$0xff]
        %v404 = vld [vmem:[%s1 + $0x5c0] sm:$0xff]
        %v405 = vld [vmem:[%s1 + $0x5c8] sm:$0xff]
        %v406 = vld [vmem:[%s1 + $0x5d0] sm:$0xff]
        %v407 = vld [vmem:[%s1 + $0x5d8] sm:$0xff]
        %v408 = vld [vmem:[%s1 + $0x5e0] sm:$0xff]
        %v409 = vld [vmem:[%s1 + $0x5e8] sm:$0xff]
        %v410 = vld [vmem:[%s1 + $0x5f0] sm:$0xff]
        %v411 = vld [vmem:[%s1 + $0x5f8] sm:$0xff]
        %v412 = vld [vmem:[%s1 + $0x600] sm:$0xff]
        %v413 = vld [vmem:[%s1 + $0x608] sm:$0xff]
        %v414 = vld [vmem:[%s1 + $0x610] sm:$0xff]
        %v415 = vld [vmem:[%s1 + $0x618] sm:$0xff]
        %v416 = vld [vmem:[%s1 + $0x620] sm:$0xff]
        %v417 = vld [vmem:[%s1 + $0x628] sm:$0xff]
        %v418 = vld [vmem:[%s1 + $0x630] sm:$0xff]
        %v419 = vld [vmem:[%s1 + $0x638] sm:$0xff]
        %v420 = vld [vmem:[%s1 + $0x640] sm:$0xff]
        %v421 = vld [vmem:[%s1 + $0x648] sm:$0xff]
        %v422 = vld [vmem:[%s1 + $0x650] sm:$0xff]
        %v423 = vld [vmem:[%s1 + $0x658] sm:$0xff]
        %v424 = vld [vmem:[%s1 + $0x660] sm:$0xff]
        %v425 = vld [vmem:[%s1 + $0x668] sm:$0xff]
        %v426 = vld [vmem:[%s1 + $0x670] sm:$0xff]
        %v427 = vld [vmem:[%s1 + $0x678] sm:$0xff]
        %v428 = vld [vmem:[%s1 + $0x680] sm:$0xff]
        %v429 = vld [vmem:[%s1 + $0x688] sm:$0xff]
        %v430 = vld [vmem:[%s1 + $0x690] sm:$0xff]
        %v431 = vld [vmem:[%s1 + $0x698] sm:$0xff]
        %v432 = vld [vmem:[%s1 + $0x6a0] sm:$0xff]
        %v433 = vld [vmem:[%s1 + $0x6a8] sm:$0xff]
        %v434 = vld [vmem:[%s1 + $0x6b0] sm:$0xff]
        %v435 = vld [vmem:[%s1 + $0x6b8] sm:$0xff]
        %v436 = vld [vmem:[%s1 + $0x6c0] sm:$0xff]
        %v437 = vld [vmem:[%s1 + $0x6c8] sm:$0xff]
        %v438 = vld [vmem:[%s1 + $0x6d0] sm:$0xff]
        %v439 = vld [vmem:[%s1 + $0x6d8] sm:$0xff]
        %v440 = vld [vmem:[%s1 + $0x6e0] sm:$0xff]
        %v441 = vld [vmem:[%s1 + $0x6e8] sm:$0xff]
        %v442 = vld [vmem:[%s1 + $0x6f0] sm:$0xff]
        %v443 = vld [vmem:[%s1 + $0x6f8] sm:$0xff]
        %v444 = vld [vmem:[%s1 + $0x700] sm:$0xff]
        %v445 = vld [vmem:[%s1 + $0x708] sm:$0xff]
        %v446 = vld [vmem:[%s1 + $0x710] sm:$0xff]
        %v447 = vld [vmem:[%s1 + $0x718] sm:$0xff]
        %v448 = vld [vmem:[%s1 + $0x720] sm:$0xff]
        %v449 = vld [vmem:[%s1 + $0x728] sm:$0xff]
        %v450 = vld [vmem:[%s1 + $0x730] sm:$0xff]
        %v451 = vld [vmem:[%s1 + $0x738] sm:$0xff]
        %v452 = vld [vmem:[%s1 + $0x740] sm:$0xff]
        %v453 = vld [vmem:[%s1 + $0x748] sm:$0xff]
        %v454 = vld [vmem:[%s1 + $0x750] sm:$0xff]
        %v455 = vld [vmem:[%s1 + $0x758] sm:$0xff]
        %v456 = vld [vmem:[%s1 + $0x760] sm:$0xff]
        %v457 = vld [vmem:[%s1 + $0x768] sm:$0xff]
        %v458 = vld [vmem:[%s1 + $0x770] sm:$0xff]
        %v459 = vld [vmem:[%s1 + $0x778] sm:$0xff]
        %v460 = vld [vmem:[%s1 + $0x780] sm:$0xff]
        %v461 = vld [vmem:[%s1 + $0x788] sm:$0xff]
        %v462 = vld [vmem:[%s1 + $0x790] sm:$0xff]
        %v463 = vld [vmem:[%s1 + $0x798] sm:$0xff]
        %v464 = vld [vmem:[%s1 + $0x7a0] sm:$0xff]
        %v465 = vld [vmem:[%s1 + $0x7a8] sm:$0xff]
        %v466 = vld [vmem:[%s1 + $0x7b0] sm:$0xff]
        %v467 = vld [vmem:[%s1 + $0x7b8] sm:$0xff]
        %v468 = vld [vmem:[%s1 + $0x7c0] sm:$0xff]
        %v469 = vld [vmem:[%s1 + $0x7c8] sm:$0xff]
        %v470 = vld [vmem:[%s1 + $0x7d0] sm:$0xff]
        %v471 = vld [vmem:[%s1 + $0x7d8] sm:$0xff]
        %v472 = vld [vmem:[%s1 + $0x7e0] sm:$0xff]
        %v473 = vld [vmem:[%s1 + $0x7e8] sm:$0xff]
        %v474 = vld [vmem:[%s1 + $0x7f0] sm:$0xff]
        %v475 = vld [vmem:[%s1 + $0x7f8] sm:$0xff]
        %v476 = vld [vmem:[%s1 + $0x800] sm:$0xff]
        %v477 = vld [vmem:[%s1 + $0x808] sm:$0xff]
        %v478 = vld [vmem:[%s1 + $0x810] sm:$0xff]
        %v479 = vld [vmem:[%s1 + $0x818] sm:$0xff]
        %v480 = vld [vmem:[%s1 + $0x820] sm:$0xff]
        %v481 = vld [vmem:[%s1 + $0x828] sm:$0xff]
        %v482 = vld [vmem:[%s1 + $0x830] sm:$0xff]
        %v483 = vld [vmem:[%s1 + $0x838] sm:$0xff]
        %v484 = vld [vmem:[%s1 + $0x840] sm:$0xff]
        %v485 = vld [vmem:[%s1 + $0x848] sm:$0xff]
        %v486 = vld [vmem:[%s1 + $0x850] sm:$0xff]
        %v487 = vld [vmem:[%s1 + $0x858] sm:$0xff]
        %v488 = vld [vmem:[%s1 + $0x860] sm:$0xff]
        %v489 = vld [vmem:[%s1 + $0x868] sm:$0xff]
        %v490 = vld [vmem:[%s1 + $0x870] sm:$0xff]
        %v491 = vld [vmem:[%s1 + $0x878] sm:$0xff]
        %v492 = vld [vmem:[%s1 + $0x880] sm:$0xff]
        %v493 = vld [vmem:[%s1 + $0x888] sm:$0xff]
        %v494 = vld [vmem:[%s1 + $0x890] sm:$0xff]
        %v495 = vld [vmem:[%s1 + $0x898] sm:$0xff]
        %v496 = vld [vmem:[%s1 + $0x8a0] sm:$0xff]
        %v497 = vld [vmem:[%s1 + $0x8a8] sm:$0xff]
        %v498 = vld [vmem:[%s1 + $0x8b0] sm:$0xff]
        %v499 = vld [vmem:[%s1 + $0x8b8] sm:$0xff]
        %v500 = vld [vmem:[%s1 + $0x8c0] sm:$0xff]
        %v501 = vld [vmem:[%s1 + $0x8c8] sm:$0xff]
        %v502 = vld [vmem:[%s1 + $0x8d0] sm:$0xff]
        %v503 = vld [vmem:[%s1 + $0x8d8] sm:$0xff]
        %v504 = vld [vmem:[%s1 + $0x8e0] sm:$0xff]
        %v505 = vld [vmem:[%s1 + $0x8e8] sm:$0xff]
        %v506 = vld [vmem:[%s1 + $0x8f0] sm:$0xff]
        %v507 = vld [vmem:[%s1 + $0x8f8] sm:$0xff]
        %v508 = vld [vmem:[%s1 + $0x900] sm:$0xff]
        %v509 = vld [vmem:[%s1 + $0x908] sm:$0xff]
        %v510 = vld [vmem:[%s1 + $0x910] sm:$0xff]
        %v511 = vld [vmem:[%s1 + $0x918] sm:$0xff]
        %v512 = vld [vmem:[%s1 + $0x920] sm:$0xff]
        %v513 = vld [vmem:[%s1 + $0x928] sm:$0xff]
        %v514 = vld [vmem:[%s1 + $0x930] sm:$0xff]
        %v515 = vld [vmem:[%s1 + $0x938] sm:$0xff]
        %v516 = vld [vmem:[%s1 + $0x940] sm:$0xff]
        %v517 = vld [vmem:[%s1 + $0x948] sm:$0xff]
        %v518 = vld [vmem:[%s1 + $0x950] sm:$0xff]
        %v519 = vld [vmem:[%s1 + $0x958] sm:$0xff]
        %v520 = vld [vmem:[%s1 + $0x960] sm:$0xff]
        %v521 = vld [vmem:[%s1 + $0x968] sm:$0xff]
        %v522 = vld [vmem:[%s1 + $0x970] sm:$0xff]
        %v523 = vld [vmem:[%s1 + $0x978] sm:$0xff]
        %v524 = vld [vmem:[%s1 + $0x980] sm:$0xff]
        %v525 = vld [vmem:[%s1 + $0x988] sm:$0xff]
        %v526 = vld [vmem:[%s1 + $0x990] sm:$0xff]
        %v527 = vld [vmem:[%s1 + $0x998] sm:$0xff]
        %v528 = vld [vmem:[%s1 + $0x9a0] sm:$0xff]
        %v529 = vld [vmem:[%s1 + $0x9a8] sm:$0xff]
        %v530 = vld [vmem:[%s1 + $0x9b0] sm:$0xff]
        %v531 = vld [vmem:[%s1 + $0x9b8] sm:$0xff]
        %v532 = vld [vmem:[%s1 + $0x9c0] sm:$0xff]
        %v533 = vld [vmem:[%s1 + $0x9c8] sm:$0xff]
        %v534 = vld [vmem:[%s1 + $0x9d0] sm:$0xff]
        %v535 = vld [vmem:[%s1 + $0x9d8] sm:$0xff]
        %v536 = vld [vmem:[%s1 + $0x9e0] sm:$0xff]
        %v537 = vld [vmem:[%s1 + $0x9e8] sm:$0xff]
        %v538 = vld [vmem:[%s1 + $0x9f0] sm:$0xff]
        %v539 = vld [vmem:[%s1 + $0x9f8] sm:$0xff]
        %v540 = vld [vmem:[%s1 + $0xa00] sm:$0xff]
        %v541 = vld [vmem:[%s1 + $0xa08] sm:$0xff]
        %v542 = vld [vmem:[%s1 + $0xa10] sm:$0xff]
        %v543 = vld [vmem:[%s1 + $0xa18] sm:$0xff]
        %v544 = vld [vmem:[%s1 + $0xa20] sm:$0xff]
        %v545 = vld [vmem:[%s1 + $0xa28] sm:$0xff]
        %v546 = vld [vmem:[%s1 + $0xa30] sm:$0xff]
        %v547 = vld [vmem:[%s1 + $0xa38] sm:$0xff]
        %v548 = vld [vmem:[%s1 + $0xa40] sm:$0xff]
        %v549 = vld [vmem:[%s1 + $0xa48] sm:$0xff]
        %v550 = vld [vmem:[%s1 + $0xa50] sm:$0xff]
        %v551 = vld [vmem:[%s1 + $0xa58] sm:$0xff]
        %v552 = vld [vmem:[%s1 + $0xa60] sm:$0xff]
        %v553 = vld [vmem:[%s1 + $0xa68] sm:$0xff]
        %v554 = vld [vmem:[%s1 + $0xa70] sm:$0xff]
        %v555 = vld [vmem:[%s1 + $0xa78] sm:$0xff]
        %v556 = vld [vmem:[%s1 + $0xa80] sm:$0xff]
        %v557 = vld [vmem:[%s1 + $0xa88] sm:$0xff]
        %v558 = vld [vmem:[%s1 + $0xa90] sm:$0xff]
        %v559 = vld [vmem:[%s1 + $0xa98] sm:$0xff]
        %v560 = vld [vmem:[%s1 + $0xaa0] sm:$0xff]
        %v561 = vld [vmem:[%s1 + $0xaa8] sm:$0xff]
        %v562 = vld [vmem:[%s1 + $0xab0] sm:$0xff]
        %v563 = vld [vmem:[%s1 + $0xab8] sm:$0xff]
        %v564 = vld [vmem:[%s1 + $0xac0] sm:$0xff]
        %v565 = vld [vmem:[%s1 + $0xac8] sm:$0xff]
        %v566 = vld [vmem:[%s1 + $0xad0] sm:$0xff]
        %v567 = vld [vmem:[%s1 + $0xad8] sm:$0xff]
        %v568 = vld [vmem:[%s1 + $0xae0] sm:$0xff]
        %v569 = vld [vmem:[%s1 + $0xae8] sm:$0xff]
        %v570 = vld [vmem:[%s1 + $0xaf0] sm:$0xff]
        %v571 = vld [vmem:[%s1 + $0xaf8] sm:$0xff]
        %v572 = vld [vmem:[%s1 + $0xb00] sm:$0xff]
        %v573 = vld [vmem:[%s1 + $0xb08] sm:$0xff]
        %v574 = vld [vmem:[%s1 + $0xb10] sm:$0xff]
        %v575 = vld [vmem:[%s1 + $0xb18] sm:$0xff]
        %v576 = vld [vmem:[%s1 + $0xb20] sm:$0xff]
        %v577 = vld [vmem:[%s1 + $0xb28] sm:$0xff]
        %v578 = vld [vmem:[%s1 + $0xb30] sm:$0xff]
        %v579 = vld [vmem:[%s1 + $0xb38] sm:$0xff]
        %v580 = vld [vmem:[%s1 + $0xb40] sm:$0xff]
        %v581 = vld [vmem:[%s1 + $0xb48] sm:$0xff]
        %v582 = vld [vmem:[%s1 + $0xb50] sm:$0xff]
        %v583 = vld [vmem:[%s1 + $0xb58] sm:$0xff]
        %v584 = vld [vmem:[%s1 + $0xb60] sm:$0xff]
        %v585 = vld [vmem:[%s1 + $0xb68] sm:$0xff]
        %v586 = vld [vmem:[%s1 + $0xb70] sm:$0xff]
        %v587 = vld [vmem:[%s1 + $0xb78] sm:$0xff]
        %v588 = vld [vmem:[%s1 + $0xb80] sm:$0xff]
        %v589 = vld [vmem:[%s1 + $0xb88] sm:$0xff]
        %v590 = vld [vmem:[%s1 + $0xb90] sm:$0xff]
        %v591 = vld [vmem:[%s1 + $0xb98] sm:$0xff]
        %v592 = vld [vmem:[%s1 + $0xba0] sm:$0xff]
        %v593 = vld [vmem:[%s1 + $0xba8] sm:$0xff]
        %v594 = vld [vmem:[%s1 + $0xbb0] sm:$0xff]
        %v595 = vld [vmem:[%s1 + $0xbb8] sm:$0xff]
        %v596 = vld [vmem:[%s1 + $0xbc0] sm:$0xff]
        %v597 = vld [vmem:[%s1 + $0xbc8] sm:$0xff]
        %v598 = vld [vmem:[%s1 + $0xbd0] sm:$0xff]
        %v599 = vld [vmem:[%s1 + $0xbd8] sm:$0xff]
        %v600 = vld [vmem:[%s1 + $0xbe0] sm:$0xff]
        %v601 = vld [vmem:[%s1 + $0xbe8] sm:$0xff]
        %v602 = vld [vmem:[%s1 + $0xbf0] sm:$0xff]
        %v603 = vld [vmem:[%s1 + $0xbf8] sm:$0xff]
        %v604 = vld [vmem:[%s1 + $0xc00] sm:$0xff]
        %v605 = vld [vmem:[%s1 + $0xc08] sm:$0xff]
        %v606 = vld [vmem:[%s1 + $0xc10] sm:$0xff]
        %v607 = vld [vmem:[%s1 + $0xc18] sm:$0xff]
        %v608 = vld [vmem:[%s1 + $0xc20] sm:$0xff]
        %v609 = vld [vmem:[%s1 + $0xc28] sm:$0xff]
        %v610 = vld [vmem:[%s1 + $0xc30] sm:$0xff]
        %v611 = vld [vmem:[%s1 + $0xc38] sm:$0xff]
        %v612 = vld [vmem:[%s1 + $0xc40] sm:$0xff]
        %v613 = vld [vmem:[%s1 + $0xc48] sm:$0xff]
        %v614 = vld [vmem:[%s1 + $0xc50] sm:$0xff]
        %v615 = vld [vmem:[%s1 + $0xc58] sm:$0xff]
        %v616 = vld [vmem:[%s1 + $0xc60] sm:$0xff]
        %v617 = vld [vmem:[%s1 + $0xc68] sm:$0xff]
        %v618 = vld [vmem:[%s1 + $0xc70] sm:$0xff]
        %v619 = vld [vmem:[%s1 + $0xc78] sm:$0xff]
        %v620 = vld [vmem:[%s1 + $0xc80] sm:$0xff]
        %v621 = vld [vmem:[%s1 + $0xc88] sm:$0xff]
        %v622 = vld [vmem:[%s1 + $0xc90] sm:$0xff]
        %v623 = vld [vmem:[%s1 + $0xc98] sm:$0xff]
        %v624 = vld [vmem:[%s1 + $0xca0] sm:$0xff]
        %v625 = vld [vmem:[%s1 + $0xca8] sm:$0xff]
        %v626 = vld [vmem:[%s1 + $0xcb0] sm:$0xff]
        %v627 = vld [vmem:[%s1 + $0xcb8] sm:$0xff]
        %v628 = vld [vmem:[%s1 + $0xcc0] sm:$0xff]
        %v629 = vld [vmem:[%s1 + $0xcc8] sm:$0xff]
        %v630 = vld [vmem:[%s1 + $0xcd0] sm:$0xff]
        %v631 = vld [vmem:[%s1 + $0xcd8] sm:$0xff]
        %v632 = vld [vmem:[%s1 + $0xce0] sm:$0xff]
        %v633 = vld [vmem:[%s1 + $0xce8] sm:$0xff]
        %v634 = vld [vmem:[%s1 + $0xcf0] sm:$0xff]
        %v635 = vld [vmem:[%s1 + $0xcf8] sm:$0xff]
        %v636 = vld [vmem:[%s1 + $0xd00] sm:$0xff]
        %v637 = vld [vmem:[%s1 + $0xd08] sm:$0xff]
        %v638 = vld [vmem:[%s1 + $0xd10] sm:$0xff]
        %v639 = vld [vmem:[%s1 + $0xd18] sm:$0xff]
        %v640 = vld [vmem:[%s1 + $0xd20] sm:$0xff]
        %v641 = vld [vmem:[%s1 + $0xd28] sm:$0xff]
        %v642 = vld [vmem:[%s1 + $0xd30] sm:$0xff]
        %v643 = vld [vmem:[%s1 + $0xd38] sm:$0xff]
        %v644 = vld [vmem:[%s1 + $0xd40] sm:$0xff]
        %v645 = vld [vmem:[%s1 + $0xd48] sm:$0xff]
        %v646 = vld [vmem:[%s1 + $0xd50] sm:$0xff]
        %v647 = vld [vmem:[%s1 + $0xd58] sm:$0xff]
        %v648 = vld [vmem:[%s1 + $0xd60] sm:$0xff]
        %v649 = vld [vmem:[%s1 + $0xd68] sm:$0xff]
        %v650 = vld [vmem:[%s1 + $0xd70] sm:$0xff]
        %v651 = vld [vmem:[%s1 + $0xd78] sm:$0xff]
        %652 = vmatprep.subr.mxu0 %v221
        %653 = vmatpush1.msra.mxu0 %v220
        %654 = vmatprep.subr.mxu0 %v230
        %655 = vmatpush1.msra.mxu0 %v229
        %656 = vmatprep.subr.mxu0 %v239
        %657 = vmatpush1.msra.mxu0 %v238
        %658 = vmatprep.subr.mxu0 %v248
        %659 = vmatpush1.msra.mxu0 %v247
        %660 = vmatprep.subr.mxu0 %v257
        %661 = vmatpush1.msra.mxu0 %v256
        %662 = vmatprep.subr.mxu0 %v266
        %663 = vmatpush1.msra.mxu0 %v265
        %664 = vmatprep.subr.mxu0 %v275
        %665 = vmatpush1.msra.mxu0 %v274
        %666 = vmatprep.subr.mxu0 %v284
        %667 = vmatpush1.msra.mxu0 %v283
        %668 = vmatprep.subr.mxu0 %v293
        %669 = vmatpush1.msra.mxu0 %v292
        %670 = vmatprep.subr.mxu0 %v302
        %671 = vmatpush1.msra.mxu0 %v301
        %672 = vmatprep.subr.mxu0 %v311
        %673 = vmatpush1.msra.mxu0 %v310
        %674 = vmatprep.subr.mxu0 %v320
        %675 = vmatpush1.msra.mxu0 %v319
        %676 = vmatprep.subr.mxu0 %v329
        %677 = vmatpush1.msra.mxu0 %v328
        %678 = vmatprep.subr.mxu0 %v338
        %679 = vmatpush1.msra.mxu0 %v337
        %680 = vmatprep.subr.mxu0 %v347
        %681 = vmatpush1.msra.mxu0 %v346
        %682 = vmatprep.subr.mxu0 %v356
        %683 = vmatpush1.msra.mxu0 %v355
        %684 = vmatprep.subr.mxu0 %v365
        %685 = vmatpush1.msra.mxu0 %v364
        %686 = vmatprep.subr.mxu0 %v374
        %687 = vmatpush1.msra.mxu0 %v373
        %688 = vmatprep.subr.mxu0 %v383
        %689 = vmatpush1.msra.mxu0 %v382
        %690 = vmatprep.subr.mxu0 %v392
        %691 = vmatpush1.msra.mxu0 %v391
        %692 = vmatprep.subr.mxu0 %v401
        %693 = vmatpush1.msra.mxu0 %v400
        %694 = vmatprep.subr.mxu0 %v410
        %695 = vmatpush1.msra.mxu0 %v409
        %696 = vmatprep.subr.mxu0 %v419
        %697 = vmatpush1.msra.mxu0 %v418
        %698 = vmatprep.subr.mxu0 %v428
        %699 = vmatpush1.msra.mxu0 %v427
        %700 = vmatprep.subr.mxu0 %v437
        %701 = vmatpush1.msra.mxu0 %v436
        %702 = vmatprep.subr.mxu0 %v446
        %703 = vmatpush1.msra.mxu0 %v445
        %704 = vmatprep.subr.mxu0 %v455
        %705 = vmatpush1.msra.mxu0 %v454
        %706 = vmatprep.subr.mxu0 %v464
        %707 = vmatpush1.msra.mxu0 %v463
        %708 = vmatprep.subr.mxu0 %v473
        %709 = vmatpush1.msra.mxu0 %v472
        %710 = vmatprep.subr.mxu0 %v482
        %711 = vmatpush1.msra.mxu0 %v481
        %712 = vmatprep.subr.mxu0 %v491
        %713 = vmatpush1.msra.mxu0 %v490
        %714 = vmatprep.subr.mxu0 %v500
        %715 = vmatpush1.msra.mxu0 %v499
        %716 = vmatprep.mubr.f32.mxu0 %v197
        %717 = vmatmul.mubr.f32.gmra.mrb[0].mxu0 %v196
        %v718 = vpop.f32.mrb[0].mxu0
        %v719 = vadd.f32 0.0, %v718
        %v720 = vpop.f32.mrb[0].mxu0
        %v721 = vadd.f32 0.0, %v720
        %722 = vmatprep.mubr.f32.mxu0 %v200
        %723 = vmatmul.mubr.f32.gmra.mrb[0].mxu0 %v199
        %v724 = vpop.f32.mrb[0].mxu0
        %v725 = vadd.f32 0.0, %v724
        %v726 = vpop.f32.mrb[0].mxu0
        %v727 = vadd.f32 0.0, %v726
        %728 = vmatprep.mubr.f32.mxu0 %v203
        %729 = vmatmul.mubr.f32.gmra.mrb[0].mxu0 %v202
        %v730 = vpop.f32.mrb[0].mxu0
        %v731 = vadd.f32 0.0, %v730
        %v732 = vpop.f32.mrb[0].mxu0
        %v733 = vadd.f32 0.0, %v732
        %734 = vmatprep.mubr.f32.mxu0 %v206
        %735 = vmatmul.mubr.f32.gmra.mrb[0].mxu0 %v205
        %v736 = vpop.f32.mrb[0].mxu0
        %v737 = vadd.f32 0.0, %v736
        %v738 = vpop.f32.mrb[0].mxu0
        %v739 = vadd.f32 0.0, %v738
        %740 = vmatprep.mubr.f32.mxu0 %v209
        %741 = vmatmul.mubr.f32.gmra.mrb[0].mxu0 %v208
        %v742 = vpop.f32.mrb[0].mxu0
        %v743 = vadd.f32 0.0, %v742
        %v744 = vpop.f32.mrb[0].mxu0
        %v745 = vadd.f32 0.0, %v744
        %746 = vmatprep.mubr.f32.mxu0 %v212
        %747 = vmatmul.mubr.f32.gmra.mrb[0].mxu0 %v211
        %v748 = vpop.f32.mrb[0].mxu0
        %v749 = vadd.f32 0.0, %v748
        %v750 = vpop.f32.mrb[0].mxu0
        %v751 = vadd.f32 0.0, %v750
        %752 = vmatprep.mubr.f32.mxu0 %v215
        %753 = vmatmul.mubr.f32.gmra.mrb[0].mxu0 %v214
        %v754 = vpop.f32.mrb[0].mxu0
        %v755 = vadd.f32 0.0, %v754
        %v756 = vpop.f32.mrb[0].mxu0
        %v757 = vadd.f32 0.0, %v756
        %758 = vmatprep.mubr.f32.mxu0 %v218
        %759 = vmatmul.mubr.f32.gmra.mrb[0].mxu0 %v217
        %v760 = vpop.f32.mrb[0].mxu0
        %v761 = vadd.f32 0.0, %v760
        %v762 = vpop.f32.mrb[0].mxu0
        %v763 = vadd.f32 0.0, %v762
        %764 = vdwg.mxu0
        %765 = vmatprep.subr.mxu0 %v509
        %766 = vmatpush1.msra.mxu0 %v508
        %767 = vmatprep.subr.mxu0 %v518
        %768 = vmatpush1.msra.mxu0 %v517
        %769 = vmatprep.subr.mxu0 %v527
        %770 = vmatpush1.msra.mxu0 %v526
        %771 = vmatprep.subr.mxu0 %v536
        %772 = vmatpush1.msra.mxu0 %v535
        %773 = vmatprep.subr.mxu0 %v545
        %774 = vmatpush1.msra.mxu0 %v544
        %775 = vmatprep.subr.mxu0 %v554
        %776 = vmatpush1.msra.mxu0 %v553
        %777 = vmatprep.subr.mxu0 %v563
        %778 = vmatpush1.msra.mxu0 %v562
        %779 = vmatprep.subr.mxu0 %v572
        %780 = vmatpush1.msra.mxu0 %v571
        %781 = vmatprep.subr.mxu0 %v581
        %782 = vmatpush1.msra.mxu0 %v580
        %783 = vmatprep.subr.mxu0 %v590
        %784 = vmatpush1.msra.mxu0 %v589
        %785 = vmatprep.subr.mxu0 %v599
        %786 = vmatpush1.msra.mxu0 %v598
        %787 = vmatprep.subr.mxu0 %v608
        %788 = vmatpush1.msra.mxu0 %v607
        %789 = vmatprep.subr.mxu0 %v617
        %790 = vmatpush1.msra.mxu0 %v616
        %791 = vmatprep.subr.mxu0 %v626
        %792 = vmatpush1.msra.mxu0 %v625
        %793 = vmatprep.subr.mxu0 %v635
        %794 = vmatpush1.msra.mxu0 %v634
        %795 = vmatprep.subr.mxu0 %v644
        %796 = vmatpush1.msra.mxu0 %v643
        %797 = vmatprep.subr.mxu0 0.0
        %798 = vmatpush1.msra.mxu0 0.0
        %799 = vmatprep.subr.mxu0 0.0
        %800 = vmatpush1.msra.mxu0 0.0
        %801 = vmatprep.subr.mxu0 0.0
        %802 = vmatpush1.msra.mxu0 0.0
        %803 = vmatprep.subr.mxu0 0.0
        %804 = vmatpush1.msra.mxu0 0.0
        %805 = vmatprep.subr.mxu0 0.0
        %806 = vmatpush1.msra.mxu0 0.0
        %807 = vmatprep.subr.mxu0 0.0
        %808 = vmatpush1.msra.mxu0 0.0
        %809 = vmatprep.subr.mxu0 0.0
        %810 = vmatpush1.msra.mxu0 0.0
        %811 = vmatprep.subr.mxu0 0.0
        %812 = vmatpush1.msra.mxu0 0.0
        %813 = vmatprep.subr.mxu0 0.0
        %814 = vmatpush1.msra.mxu0 0.0
        %815 = vmatprep.subr.mxu0 0.0
        %816 = vmatpush1.msra.mxu0 0.0
        %817 = vmatprep.subr.mxu0 0.0
        %818 = vmatpush1.msra.mxu0 0.0
        %819 = vmatprep.subr.mxu0 0.0
        %820 = vmatpush1.msra.mxu0 0.0
        %821 = vmatprep.subr.mxu0 0.0
        %822 = vmatpush1.msra.mxu0 0.0
        %823 = vmatprep.subr.mxu0 0.0
        %824 = vmatpush1.msra.mxu0 0.0
        %825 = vmatprep.subr.mxu0 0.0
        %826 = vmatpush1.msra.mxu0 0.0
        %827 = vmatprep.subr.mxu0 0.0
        %828 = vmatpush1.msra.mxu0 0.0
        %829 = vmatprep.mubr.f32.mxu0 0.0
        %830 = vmatmul.mubr.f32.gmra.mrb[0].mxu0 %v198
        %v831 = vpop.f32.mrb[0].mxu0
        %v832 = vadd.f32 %v719, %v831
        %v833 = vpop.f32.mrb[0].mxu0
        %v834 = vadd.f32 %v721, %v833
        %835 = vmatprep.mubr.f32.mxu0 0.0
        %836 = vmatmul.mubr.f32.gmra.mrb[0].mxu0 %v201
        %v837 = vpop.f32.mrb[0].mxu0
        %v838 = vadd.f32 %v725, %v837
        %v839 = vpop.f32.mrb[0].mxu0
        %v840 = vadd.f32 %v727, %v839
        %841 = vmatprep.mubr.f32.mxu0 0.0
        %842 = vmatmul.mubr.f32.gmra.mrb[0].mxu0 %v204
        %v843 = vpop.f32.mrb[0].mxu0
        %v844 = vadd.f32 %v731, %v843
        %v845 = vpop.f32.mrb[0].mxu0
        %v846 = vadd.f32 %v733, %v845
        %847 = vmatprep.mubr.f32.mxu0 0.0
        %848 = vmatmul.mubr.f32.gmra.mrb[0].mxu0 %v207
        %v849 = vpop.f32.mrb[0].mxu0
        %v850 = vadd.f32 %v737, %v849
        %v851 = vpop.f32.mrb[0].mxu0
        %v852 = vadd.f32 %v739, %v851
        %853 = vmatprep.mubr.f32.mxu0 0.0
        %854 = vmatmul.mubr.f32.gmra.mrb[0].mxu0 %v210
        %v855 = vpop.f32.mrb[0].mxu0
        %v856 = vadd.f32 %v743, %v855
        %v857 = vpop.f32.mrb[0].mxu0
        %v858 = vadd.f32 %v745, %v857
        %859 = vmatprep.mubr.f32.mxu0 0.0
        %860 = vmatmul.mubr.f32.gmra.mrb[0].mxu0 %v213
        %v861 = vpop.f32.mrb[0].mxu0
        %v862 = vadd.f32 %v749, %v861
        %v863 = vpop.f32.mrb[0].mxu0
        %v864 = vadd.f32 %v751, %v863
        %865 = vmatprep.mubr.f32.mxu0 0.0
        %866 = vmatmul.mubr.f32.gmra.mrb[0].mxu0 %v216
        %v867 = vpop.f32.mrb[0].mxu0
        %v868 = vadd.f32 %v755, %v867
        %v869 = vpop.f32.mrb[0].mxu0
        %v870 = vadd.f32 %v757, %v869
        %871 = vmatprep.mubr.f32.mxu0 0.0
        %872 = vmatmul.mubr.f32.gmra.mrb[0].mxu0 %v219
        %v873 = vpop.f32.mrb[0].mxu0
        %v874 = vadd.f32 %v761, %v873
        %v875 = vpop.f32.mrb[0].mxu0
        %v876 = vadd.f32 %v763, %v875
        %877 = vdwg.mxu0
        %878 = vmatprep.subr.mxu0 %v223
        %879 = vmatpush1.msra.mxu0 %v222
        %880 = vmatprep.subr.mxu0 %v232
        %881 = vmatpush1.msra.mxu0 %v231
        %882 = vmatprep.subr.mxu0 %v241
        %883 = vmatpush1.msra.mxu0 %v240
        %884 = vmatprep.subr.mxu0 %v250
        %885 = vmatpush1.msra.mxu0 %v249
        %886 = vmatprep.subr.mxu0 %v259
        %887 = vmatpush1.msra.mxu0 %v258
        %888 = vmatprep.subr.mxu0 %v268
        %889 = vmatpush1.msra.mxu0 %v267
        %890 = vmatprep.subr.mxu0 %v277
        %891 = vmatpush1.msra.mxu0 %v276
        %892 = vmatprep.subr.mxu0 %v286
        %893 = vmatpush1.msra.mxu0 %v285
        %894 = vmatprep.subr.mxu0 %v295
        %895 = vmatpush1.msra.mxu0 %v294
        %896 = vmatprep.subr.mxu0 %v304
        %897 = vmatpush1.msra.mxu0 %v303
        %898 = vmatprep.subr.mxu0 %v313
        %899 = vmatpush1.msra.mxu0 %v312
        %900 = vmatprep.subr.mxu0 %v322
        %901 = vmatpush1.msra.mxu0 %v321
        %902 = vmatprep.subr.mxu0 %v331
        %903 = vmatpush1.msra.mxu0 %v330
        %904 = vmatprep.subr.mxu0 %v340
        %905 = vmatpush1.msra.mxu0 %v339
        %906 = vmatprep.subr.mxu0 %v349
        %907 = vmatpush1.msra.mxu0 %v348
        %908 = vmatprep.subr.mxu0 %v358
        %909 = vmatpush1.msra.mxu0 %v357
        %910 = vmatprep.subr.mxu0 %v367
        %911 = vmatpush1.msra.mxu0 %v366
        %912 = vmatprep.subr.mxu0 %v376
        %913 = vmatpush1.msra.mxu0 %v375
        %914 = vmatprep.subr.mxu0 %v385
        %915 = vmatpush1.msra.mxu0 %v384
        %916 = vmatprep.subr.mxu0 %v394
        %917 = vmatpush1.msra.mxu0 %v393
        %918 = vmatprep.subr.mxu0 %v403
        %919 = vmatpush1.msra.mxu0 %v402
        %920 = vmatprep.subr.mxu0 %v412
        %921 = vmatpush1.msra.mxu0 %v411
        %922 = vmatprep.subr.mxu0 %v421
        %923 = vmatpush1.msra.mxu0 %v420
        %924 = vmatprep.subr.mxu0 %v430
        %925 = vmatpush1.msra.mxu0 %v429
        %926 = vmatprep.subr.mxu0 %v439
        %927 = vmatpush1.msra.mxu0 %v438
        %928 = vmatprep.subr.mxu0 %v448
        %929 = vmatpush1.msra.mxu0 %v447
        %930 = vmatprep.subr.mxu0 %v457
        %931 = vmatpush1.msra.mxu0 %v456
        %932 = vmatprep.subr.mxu0 %v466
        %933 = vmatpush1.msra.mxu0 %v465
        %934 = vmatprep.subr.mxu0 %v475
        %935 = vmatpush1.msra.mxu0 %v474
        %936 = vmatprep.subr.mxu0 %v484
        %937 = vmatpush1.msra.mxu0 %v483
        %938 = vmatprep.subr.mxu0 %v493
        %939 = vmatpush1.msra.mxu0 %v492
        %940 = vmatprep.subr.mxu0 %v502
        %941 = vmatpush1.msra.mxu0 %v501
        %942 = vmatprep.mubr.f32.mxu0 %v197
        %943 = vmatmul.mubr.f32.gmra.mrb[0].mxu0 %v196
        %v944 = vpop.f32.mrb[0].mxu0
        %v945 = vadd.f32 0.0, %v944
        %v946 = vpop.f32.mrb[0].mxu0
        %v947 = vadd.f32 0.0, %v946
        %948 = vmatprep.mubr.f32.mxu0 %v200
        %949 = vmatmul.mubr.f32.gmra.mrb[0].mxu0 %v199
        %v950 = vpop.f32.mrb[0].mxu0
        %v951 = vadd.f32 0.0, %v950
        %v952 = vpop.f32.mrb[0].mxu0
        %v953 = vadd.f32 0.0, %v952
        %954 = vmatprep.mubr.f32.mxu0 %v203
        %955 = vmatmul.mubr.f32.gmra.mrb[0].mxu0 %v202
        %v956 = vpop.f32.mrb[0].mxu0
        %v957 = vadd.f32 0.0, %v956
        %v958 = vpop.f32.mrb[0].mxu0
        %v959 = vadd.f32 0.0, %v958
        %960 = vmatprep.mubr.f32.mxu0 %v206
        %961 = vmatmul.mubr.f32.gmra.mrb[0].mxu0 %v205
        %v962 = vpop.f32.mrb[0].mxu0
        %v963 = vadd.f32 0.0, %v962
        %v964 = vpop.f32.mrb[0].mxu0
        %v965 = vadd.f32 0.0, %v964
        %966 = vmatprep.mubr.f32.mxu0 %v209
        %967 = vmatmul.mubr.f32.gmra.mrb[0].mxu0 %v208
        %v968 = vpop.f32.mrb[0].mxu0
        %v969 = vadd.f32 0.0, %v968
        %v970 = vpop.f32.mrb[0].mxu0
        %v971 = vadd.f32 0.0, %v970
        %972 = vmatprep.mubr.f32.mxu0 %v212
        %973 = vmatmul.mubr.f32.gmra.mrb[0].mxu0 %v211
        %v974 = vpop.f32.mrb[0].mxu0
        %v975 = vadd.f32 0.0, %v974
        %v976 = vpop.f32.mrb[0].mxu0
        %v977 = vadd.f32 0.0, %v976
        %978 = vmatprep.mubr.f32.mxu0 %v215
        %979 = vmatmul.mubr.f32.gmra.mrb[0].mxu0 %v214
        %v980 = vpop.f32.mrb[0].mxu0
        %v981 = vadd.f32 0.0, %v980
        %v982 = vpop.f32.mrb[0].mxu0
        %v983 = vadd.f32 0.0, %v982
        %984 = vmatprep.mubr.f32.mxu0 %v218
        %985 = vmatmul.mubr.f32.gmra.mrb[0].mxu0 %v217
        %v986 = vpop.f32.mrb[0].mxu0
        %v987 = vadd.f32 0.0, %v986
        %v988 = vpop.f32.mrb[0].mxu0
        %v989 = vadd.f32 0.0, %v988
        %990 = vdwg.mxu0
        %991 = vmatprep.subr.mxu0 %v511
        %992 = vmatpush1.msra.mxu0 %v510
        %993 = vmatprep.subr.mxu0 %v520
        %994 = vmatpush1.msra.mxu0 %v519
        %995 = vmatprep.subr.mxu0 %v529
        %996 = vmatpush1.msra.mxu0 %v528
        %997 = vmatprep.subr.mxu0 %v538
        %998 = vmatpush1.msra.mxu0 %v537
        %999 = vmatprep.subr.mxu0 %v547
        %1000 = vmatpush1.msra.mxu0 %v546
        %1001 = vmatprep.subr.mxu0 %v556
        %1002 = vmatpush1.msra.mxu0 %v555
        %1003 = vmatprep.subr.mxu0 %v565
        %1004 = vmatpush1.msra.mxu0 %v564
        %1005 = vmatprep.subr.mxu0 %v574
        %1006 = vmatpush1.msra.mxu0 %v573
        %1007 = vmatprep.subr.mxu0 %v583
        %1008 = vmatpush1.msra.mxu0 %v582
        %1009 = vmatprep.subr.mxu0 %v592
        %1010 = vmatpush1.msra.mxu0 %v591
        %1011 = vmatprep.subr.mxu0 %v601
        %1012 = vmatpush1.msra.mxu0 %v600
        %1013 = vmatprep.subr.mxu0 %v610
        %1014 = vmatpush1.msra.mxu0 %v609
        %1015 = vmatprep.subr.mxu0 %v619
        %1016 = vmatpush1.msra.mxu0 %v618
        %1017 = vmatprep.subr.mxu0 %v628
        %1018 = vmatpush1.msra.mxu0 %v627
        %1019 = vmatprep.subr.mxu0 %v637
        %1020 = vmatpush1.msra.mxu0 %v636
        %1021 = vmatprep.subr.mxu0 %v646
        %1022 = vmatpush1.msra.mxu0 %v645
        %1023 = vmatprep.subr.mxu0 0.0
        %1024 = vmatpush1.msra.mxu0 0.0
        %1025 = vmatprep.subr.mxu0 0.0
        %1026 = vmatpush1.msra.mxu0 0.0
        %1027 = vmatprep.subr.mxu0 0.0
        %1028 = vmatpush1.msra.mxu0 0.0
        %1029 = vmatprep.subr.mxu0 0.0
        %1030 = vmatpush1.msra.mxu0 0.0
        %1031 = vmatprep.subr.mxu0 0.0
        %1032 = vmatpush1.msra.mxu0 0.0
        %1033 = vmatprep.subr.mxu0 0.0
        %1034 = vmatpush1.msra.mxu0 0.0
        %1035 = vmatprep.subr.mxu0 0.0
        %1036 = vmatpush1.msra.mxu0 0.0
        %1037 = vmatprep.subr.mxu0 0.0
        %1038 = vmatpush1.msra.mxu0 0.0
        %1039 = vmatprep.subr.mxu0 0.0
        %1040 = vmatpush1.msra.mxu0 0.0
        %1041 = vmatprep.subr.mxu0 0.0
        %1042 = vmatpush1.msra.mxu0 0.0
        %1043 = vmatprep.subr.mxu0 0.0
        %1044 = vmatpush1.msra.mxu0 0.0
        %1045 = vmatprep.subr.mxu0 0.0
        %1046 = vmatpush1.msra.mxu0 0.0
        %1047 = vmatprep.subr.mxu0 0.0
        %1048 = vmatpush1.msra.mxu0 0.0
        %1049 = vmatprep.subr.mxu0 0.0
        %1050 = vmatpush1.msra.mxu0 0.0
        %1051 = vmatprep.subr.mxu0 0.0
        %1052 = vmatpush1.msra.mxu0 0.0
        %1053 = vmatprep.subr.mxu0 0.0
        %1054 = vmatpush1.msra.mxu0 0.0
        %1055 = vmatprep.mubr.f32.mxu0 0.0
        %1056 = vmatmul.mubr.f32.gmra.mrb[0].mxu0 %v198
        %v1057 = vpop.f32.mrb[0].mxu0
        %v1058 = vadd.f32 %v945, %v1057
        %v1059 = vpop.f32.mrb[0].mxu0
        %v1060 = vadd.f32 %v947, %v1059
        %1061 = vmatprep.mubr.f32.mxu0 0.0
        %1062 = vmatmul.mubr.f32.gmra.mrb[0].mxu0 %v201
        %v1063 = vpop.f32.mrb[0].mxu0
        %v1064 = vadd.f32 %v951, %v1063
        %v1065 = vpop.f32.mrb[0].mxu0
        %v1066 = vadd.f32 %v953, %v1065
        %1067 = vmatprep.mubr.f32.mxu0 0.0
        %1068 = vmatmul.mubr.f32.gmra.mrb[0].mxu0 %v204
        %v1069 = vpop.f32.mrb[0].mxu0
        %v1070 = vadd.f32 %v957, %v1069
        %v1071 = vpop.f32.mrb[0].mxu0
        %v1072 = vadd.f32 %v959, %v1071
        %1073 = vmatprep.mubr.f32.mxu0 0.0
        %1074 = vmatmul.mubr.f32.gmra.mrb[0].mxu0 %v207
        %v1075 = vpop.f32.mrb[0].mxu0
        %v1076 = vadd.f32 %v963, %v1075
        %v1077 = vpop.f32.mrb[0].mxu0
        %v1078 = vadd.f32 %v965, %v1077
        %1079 = vmatprep.mubr.f32.mxu0 0.0
        %1080 = vmatmul.mubr.f32.gmra.mrb[0].mxu0 %v210
        %v1081 = vpop.f32.mrb[0].mxu0
        %v1082 = vadd.f32 %v969, %v1081
        %v1083 = vpop.f32.mrb[0].mxu0
        %v1084 = vadd.f32 %v971, %v1083
        %1085 = vmatprep.mubr.f32.mxu0 0.0
        %1086 = vmatmul.mubr.f32.gmra.mrb[0].mxu0 %v213
        %v1087 = vpop.f32.mrb[0].mxu0
        %v1088 = vadd.f32 %v975, %v1087
        %v1089 = vpop.f32.mrb[0].mxu0
        %v1090 = vadd.f32 %v977, %v1089
        %1091 = vmatprep.mubr.f32.mxu0 0.0
        %1092 = vmatmul.mubr.f32.gmra.mrb[0].mxu0 %v216
        %v1093 = vpop.f32.mrb[0].mxu0
        %v1094 = vadd.f32 %v981, %v1093
        %v1095 = vpop.f32.mrb[0].mxu0
        %v1096 = vadd.f32 %v983, %v1095
        %1097 = vmatprep.mubr.f32.mxu0 0.0
        %1098 = vmatmul.mubr.f32.gmra.mrb[0].mxu0 %v219
        %v1099 = vpop.f32.mrb[0].mxu0
        %v1100 = vadd.f32 %v987, %v1099
        %v1101 = vpop.f32.mrb[0].mxu0
        %v1102 = vadd.f32 %v989, %v1101
        %1103 = vdwg.mxu0
        %1104 = vmatprep.subr.mxu0 %v225
        %1105 = vmatpush1.msra.mxu0 %v224
        %1106 = vmatprep.subr.mxu0 %v234
        %1107 = vmatpush1.msra.mxu0 %v233
        %1108 = vmatprep.subr.mxu0 %v243
        %1109 = vmatpush1.msra.mxu0 %v242
        %1110 = vmatprep.subr.mxu0 %v252
        %1111 = vmatpush1.msra.mxu0 %v251
        %1112 = vmatprep.subr.mxu0 %v261
        %1113 = vmatpush1.msra.mxu0 %v260
        %1114 = vmatprep.subr.mxu0 %v270
        %1115 = vmatpush1.msra.mxu0 %v269
        %1116 = vmatprep.subr.mxu0 %v279
        %1117 = vmatpush1.msra.mxu0 %v278
        %1118 = vmatprep.subr.mxu0 %v288
        %1119 = vmatpush1.msra.mxu0 %v287
        %1120 = vmatprep.subr.mxu0 %v297
        %1121 = vmatpush1.msra.mxu0 %v296
        %1122 = vmatprep.subr.mxu0 %v306
        %1123 = vmatpush1.msra.mxu0 %v305
        %1124 = vmatprep.subr.mxu0 %v315
        %1125 = vmatpush1.msra.mxu0 %v314
        %1126 = vmatprep.subr.mxu0 %v324
        %1127 = vmatpush1.msra.mxu0 %v323
        %1128 = vmatprep.subr.mxu0 %v333
        %1129 = vmatpush1.msra.mxu0 %v332
        %1130 = vmatprep.subr.mxu0 %v342
        %1131 = vmatpush1.msra.mxu0 %v341
        %1132 = vmatprep.subr.mxu0 %v351
        %1133 = vmatpush1.msra.mxu0 %v350
        %1134 = vmatprep.subr.mxu0 %v360
        %1135 = vmatpush1.msra.mxu0 %v359
        %1136 = vmatprep.subr.mxu0 %v369
        %1137 = vmatpush1.msra.mxu0 %v368
        %1138 = vmatprep.subr.mxu0 %v378
        %1139 = vmatpush1.msra.mxu0 %v377
        %1140 = vmatprep.subr.mxu0 %v387
        %1141 = vmatpush1.msra.mxu0 %v386
        %1142 = vmatprep.subr.mxu0 %v396
        %1143 = vmatpush1.msra.mxu0 %v395
        %1144 = vmatprep.subr.mxu0 %v405
        %1145 = vmatpush1.msra.mxu0 %v404
        %1146 = vmatprep.subr.mxu0 %v414
        %1147 = vmatpush1.msra.mxu0 %v413
        %1148 = vmatprep.subr.mxu0 %v423
        %1149 = vmatpush1.msra.mxu0 %v422
        %1150 = vmatprep.subr.mxu0 %v432
        %1151 = vmatpush1.msra.mxu0 %v431
        %1152 = vmatprep.subr.mxu0 %v441
        %1153 = vmatpush1.msra.mxu0 %v440
        %1154 = vmatprep.subr.mxu0 %v450
        %1155 = vmatpush1.msra.mxu0 %v449
        %1156 = vmatprep.subr.mxu0 %v459
        %1157 = vmatpush1.msra.mxu0 %v458
        %1158 = vmatprep.subr.mxu0 %v468
        %1159 = vmatpush1.msra.mxu0 %v467
        %1160 = vmatprep.subr.mxu0 %v477
        %1161 = vmatpush1.msra.mxu0 %v476
        %1162 = vmatprep.subr.mxu0 %v486
        %1163 = vmatpush1.msra.mxu0 %v485
        %1164 = vmatprep.subr.mxu0 %v495
        %1165 = vmatpush1.msra.mxu0 %v494
        %1166 = vmatprep.subr.mxu0 %v504
        %1167 = vmatpush1.msra.mxu0 %v503
        %1168 = vmatprep.mubr.f32.mxu0 %v197
        %1169 = vmatmul.mubr.f32.gmra.mrb[0].mxu0 %v196
        %v1170 = vpop.f32.mrb[0].mxu0
        %v1171 = vadd.f32 0.0, %v1170
        %v1172 = vpop.f32.mrb[0].mxu0
        %v1173 = vadd.f32 0.0, %v1172
        %1174 = vmatprep.mubr.f32.mxu0 %v200
        %1175 = vmatmul.mubr.f32.gmra.mrb[0].mxu0 %v199
        %v1176 = vpop.f32.mrb[0].mxu0
        %v1177 = vadd.f32 0.0, %v1176
        %v1178 = vpop.f32.mrb[0].mxu0
        %v1179 = vadd.f32 0.0, %v1178
        %1180 = vmatprep.mubr.f32.mxu0 %v203
        %1181 = vmatmul.mubr.f32.gmra.mrb[0].mxu0 %v202
        %v1182 = vpop.f32.mrb[0].mxu0
        %v1183 = vadd.f32 0.0, %v1182
        %v1184 = vpop.f32.mrb[0].mxu0
        %v1185 = vadd.f32 0.0, %v1184
        %1186 = vmatprep.mubr.f32.mxu0 %v206
        %1187 = vmatmul.mubr.f32.gmra.mrb[0].mxu0 %v205
        %v1188 = vpop.f32.mrb[0].mxu0
        %v1189 = vadd.f32 0.0, %v1188
        %v1190 = vpop.f32.mrb[0].mxu0
        %v1191 = vadd.f32 0.0, %v1190
        %1192 = vmatprep.mubr.f32.mxu0 %v209
        %1193 = vmatmul.mubr.f32.gmra.mrb[0].mxu0 %v208
        %v1194 = vpop.f32.mrb[0].mxu0
        %v1195 = vadd.f32 0.0, %v1194
        %v1196 = vpop.f32.mrb[0].mxu0
        %v1197 = vadd.f32 0.0, %v1196
        %1198 = vmatprep.mubr.f32.mxu0 %v212
        %1199 = vmatmul.mubr.f32.gmra.mrb[0].mxu0 %v211
        %v1200 = vpop.f32.mrb[0].mxu0
        %v1201 = vadd.f32 0.0, %v1200
        %v1202 = vpop.f32.mrb[0].mxu0
        %v1203 = vadd.f32 0.0, %v1202
        %1204 = vmatprep.mubr.f32.mxu0 %v215
        %1205 = vmatmul.mubr.f32.gmra.mrb[0].mxu0 %v214
        %v1206 = vpop.f32.mrb[0].mxu0
        %v1207 = vadd.f32 0.0, %v1206
        %v1208 = vpop.f32.mrb[0].mxu0
        %v1209 = vadd.f32 0.0, %v1208
        %1210 = vmatprep.mubr.f32.mxu0 %v218
        %1211 = vmatmul.mubr.f32.gmra.mrb[0].mxu0 %v217
        %v1212 = vpop.f32.mrb[0].mxu0
        %v1213 = vadd.f32 0.0, %v1212
        %v1214 = vpop.f32.mrb[0].mxu0
        %v1215 = vadd.f32 0.0, %v1214
        %1216 = vdwg.mxu0
        %1217 = vmatprep.subr.mxu0 %v513
        %1218 = vmatpush1.msra.mxu0 %v512
        %1219 = vmatprep.subr.mxu0 %v522
        %1220 = vmatpush1.msra.mxu0 %v521
        %1221 = vmatprep.subr.mxu0 %v531
        %1222 = vmatpush1.msra.mxu0 %v530
        %1223 = vmatprep.subr.mxu0 %v540
        %1224 = vmatpush1.msra.mxu0 %v539
        %1225 = vmatprep.subr.mxu0 %v549
        %1226 = vmatpush1.msra.mxu0 %v548
        %1227 = vmatprep.subr.mxu0 %v558
        %1228 = vmatpush1.msra.mxu0 %v557
        %1229 = vmatprep.subr.mxu0 %v567
        %1230 = vmatpush1.msra.mxu0 %v566
        %1231 = vmatprep.subr.mxu0 %v576
        %1232 = vmatpush1.msra.mxu0 %v575
        %1233 = vmatprep.subr.mxu0 %v585
        %1234 = vmatpush1.msra.mxu0 %v584
        %1235 = vmatprep.subr.mxu0 %v594
        %1236 = vmatpush1.msra.mxu0 %v593
        %1237 = vmatprep.subr.mxu0 %v603
        %1238 = vmatpush1.msra.mxu0 %v602
        %1239 = vmatprep.subr.mxu0 %v612
        %1240 = vmatpush1.msra.mxu0 %v611
        %1241 = vmatprep.subr.mxu0 %v621
        %1242 = vmatpush1.msra.mxu0 %v620
        %1243 = vmatprep.subr.mxu0 %v630
        %1244 = vmatpush1.msra.mxu0 %v629
        %1245 = vmatprep.subr.mxu0 %v639
        %1246 = vmatpush1.msra.mxu0 %v638
        %1247 = vmatprep.subr.mxu0 %v648
        %1248 = vmatpush1.msra.mxu0 %v647
        %1249 = vmatprep.subr.mxu0 0.0
        %1250 = vmatpush1.msra.mxu0 0.0
        %1251 = vmatprep.subr.mxu0 0.0
        %1252 = vmatpush1.msra.mxu0 0.0
        %1253 = vmatprep.subr.mxu0 0.0
        %1254 = vmatpush1.msra.mxu0 0.0
        %1255 = vmatprep.subr.mxu0 0.0
        %1256 = vmatpush1.msra.mxu0 0.0
        %1257 = vmatprep.subr.mxu0 0.0
        %1258 = vmatpush1.msra.mxu0 0.0
        %1259 = vmatprep.subr.mxu0 0.0
        %1260 = vmatpush1.msra.mxu0 0.0
        %1261 = vmatprep.subr.mxu0 0.0
        %1262 = vmatpush1.msra.mxu0 0.0
        %1263 = vmatprep.subr.mxu0 0.0
        %1264 = vmatpush1.msra.mxu0 0.0
        %1265 = vmatprep.subr.mxu0 0.0
        %1266 = vmatpush1.msra.mxu0 0.0
        %1267 = vmatprep.subr.mxu0 0.0
        %1268 = vmatpush1.msra.mxu0 0.0
        %1269 = vmatprep.subr.mxu0 0.0
        %1270 = vmatpush1.msra.mxu0 0.0
        %1271 = vmatprep.subr.mxu0 0.0
        %1272 = vmatpush1.msra.mxu0 0.0
        %1273 = vmatprep.subr.mxu0 0.0
        %1274 = vmatpush1.msra.mxu0 0.0
        %1275 = vmatprep.subr.mxu0 0.0
        %1276 = vmatpush1.msra.mxu0 0.0
        %1277 = vmatprep.subr.mxu0 0.0
        %1278 = vmatpush1.msra.mxu0 0.0
        %1279 = vmatprep.subr.mxu0 0.0
        %1280 = vmatpush1.msra.mxu0 0.0
        %1281 = vmatprep.mubr.f32.mxu0 0.0
        %1282 = vmatmul.mubr.f32.gmra.mrb[0].mxu0 %v198
        %v1283 = vpop.f32.mrb[0].mxu0
        %v1284 = vadd.f32 %v1171, %v1283
        %v1285 = vpop.f32.mrb[0].mxu0
        %v1286 = vadd.f32 %v1173, %v1285
        %1287 = vmatprep.mubr.f32.mxu0 0.0
        %1288 = vmatmul.mubr.f32.gmra.mrb[0].mxu0 %v201
        %v1289 = vpop.f32.mrb[0].mxu0
        %v1290 = vadd.f32 %v1177, %v1289
        %v1291 = vpop.f32.mrb[0].mxu0
        %v1292 = vadd.f32 %v1179, %v1291
        %1293 = vmatprep.mubr.f32.mxu0 0.0
        %1294 = vmatmul.mubr.f32.gmra.mrb[0].mxu0 %v204
        %v1295 = vpop.f32.mrb[0].mxu0
        %v1296 = vadd.f32 %v1183, %v1295
        %v1297 = vpop.f32.mrb[0].mxu0
        %v1298 = vadd.f32 %v1185, %v1297
        %1299 = vmatprep.mubr.f32.mxu0 0.0
        %1300 = vmatmul.mubr.f32.gmra.mrb[0].mxu0 %v207
        %v1301 = vpop.f32.mrb[0].mxu0
        %v1302 = vadd.f32 %v1189, %v1301
        %v1303 = vpop.f32.mrb[0].mxu0
        %v1304 = vadd.f32 %v1191, %v1303
        %1305 = vmatprep.mubr.f32.mxu0 0.0
        %1306 = vmatmul.mubr.f32.gmra.mrb[0].mxu0 %v210
        %v1307 = vpop.f32.mrb[0].mxu0
        %v1308 = vadd.f32 %v1195, %v1307
        %v1309 = vpop.f32.mrb[0].mxu0
        %v1310 = vadd.f32 %v1197, %v1309
        %1311 = vmatprep.mubr.f32.mxu0 0.0
        %1312 = vmatmul.mubr.f32.gmra.mrb[0].mxu0 %v213
        %v1313 = vpop.f32.mrb[0].mxu0
        %v1314 = vadd.f32 %v1201, %v1313
        %v1315 = vpop.f32.mrb[0].mxu0
        %v1316 = vadd.f32 %v1203, %v1315
        %1317 = vmatprep.mubr.f32.mxu0 0.0
        %1318 = vmatmul.mubr.f32.gmra.mrb[0].mxu0 %v216
        %v1319 = vpop.f32.mrb[0].mxu0
        %v1320 = vadd.f32 %v1207, %v1319
        %v1321 = vpop.f32.mrb[0].mxu0
        %v1322 = vadd.f32 %v1209, %v1321
        %1323 = vmatprep.mubr.f32.mxu0 0.0
        %1324 = vmatmul.mubr.f32.gmra.mrb[0].mxu0 %v219
        %v1325 = vpop.f32.mrb[0].mxu0
        %v1326 = vadd.f32 %v1213, %v1325
        %v1327 = vpop.f32.mrb[0].mxu0
        %v1328 = vadd.f32 %v1215, %v1327
        %1329 = vdwg.mxu0
        %1330 = vmatprep.subr.mxu0 %v227
        %1331 = vmatpush1.msra.mxu0 %v226
        %1332 = vmatprep.subr.mxu0 %v236
        %1333 = vmatpush1.msra.mxu0 %v235
        %1334 = vmatprep.subr.mxu0 %v245
        %1335 = vmatpush1.msra.mxu0 %v244
        %1336 = vmatprep.subr.mxu0 %v254
        %1337 = vmatpush1.msra.mxu0 %v253
        %1338 = vmatprep.subr.mxu0 %v263
        %1339 = vmatpush1.msra.mxu0 %v262
        %1340 = vmatprep.subr.mxu0 %v272
        %1341 = vmatpush1.msra.mxu0 %v271
        %1342 = vmatprep.subr.mxu0 %v281
        %1343 = vmatpush1.msra.mxu0 %v280
        %1344 = vmatprep.subr.mxu0 %v290
        %1345 = vmatpush1.msra.mxu0 %v289
        %1346 = vmatprep.subr.mxu0 %v299
        %1347 = vmatpush1.msra.mxu0 %v298
        %1348 = vmatprep.subr.mxu0 %v308
        %1349 = vmatpush1.msra.mxu0 %v307
        %1350 = vmatprep.subr.mxu0 %v317
        %1351 = vmatpush1.msra.mxu0 %v316
        %1352 = vmatprep.subr.mxu0 %v326
        %1353 = vmatpush1.msra.mxu0 %v325
        %1354 = vmatprep.subr.mxu0 %v335
        %1355 = vmatpush1.msra.mxu0 %v334
        %1356 = vmatprep.subr.mxu0 %v344
        %1357 = vmatpush1.msra.mxu0 %v343
        %1358 = vmatprep.subr.mxu0 %v353
        %1359 = vmatpush1.msra.mxu0 %v352
        %1360 = vmatprep.subr.mxu0 %v362
        %1361 = vmatpush1.msra.mxu0 %v361
        %1362 = vmatprep.subr.mxu0 %v371
        %1363 = vmatpush1.msra.mxu0 %v370
        %1364 = vmatprep.subr.mxu0 %v380
        %1365 = vmatpush1.msra.mxu0 %v379
        %1366 = vmatprep.subr.mxu0 %v389
        %1367 = vmatpush1.msra.mxu0 %v388
        %1368 = vmatprep.subr.mxu0 %v398
        %1369 = vmatpush1.msra.mxu0 %v397
        %1370 = vmatprep.subr.mxu0 %v407
        %1371 = vmatpush1.msra.mxu0 %v406
        %1372 = vmatprep.subr.mxu0 %v416
        %1373 = vmatpush1.msra.mxu0 %v415
        %1374 = vmatprep.subr.mxu0 %v425
        %1375 = vmatpush1.msra.mxu0 %v424
        %1376 = vmatprep.subr.mxu0 %v434
        %1377 = vmatpush1.msra.mxu0 %v433
        %1378 = vmatprep.subr.mxu0 %v443
        %1379 = vmatpush1.msra.mxu0 %v442
        %1380 = vmatprep.subr.mxu0 %v452
        %1381 = vmatpush1.msra.mxu0 %v451
        %1382 = vmatprep.subr.mxu0 %v461
        %1383 = vmatpush1.msra.mxu0 %v460
        %1384 = vmatprep.subr.mxu0 %v470
        %1385 = vmatpush1.msra.mxu0 %v469
        %1386 = vmatprep.subr.mxu0 %v479
        %1387 = vmatpush1.msra.mxu0 %v478
        %1388 = vmatprep.subr.mxu0 %v488
        %1389 = vmatpush1.msra.mxu0 %v487
        %1390 = vmatprep.subr.mxu0 %v497
        %1391 = vmatpush1.msra.mxu0 %v496
        %1392 = vmatprep.subr.mxu0 %v506
        %1393 = vmatpush1.msra.mxu0 %v505
        %1394 = vmatprep.mubr.f32.mxu0 %v197
        %1395 = vmatmul.mubr.f32.gmra.mrb[0].mxu0 %v196
        %v1396 = vpop.f32.mrb[0].mxu0
        %v1397 = vadd.f32 0.0, %v1396
        %v1398 = vpop.f32.mrb[0].mxu0
        %v1399 = vadd.f32 0.0, %v1398
        %1400 = vmatprep.mubr.f32.mxu0 %v200
        %1401 = vmatmul.mubr.f32.gmra.mrb[0].mxu0 %v199
        %v1402 = vpop.f32.mrb[0].mxu0
        %v1403 = vadd.f32 0.0, %v1402
        %v1404 = vpop.f32.mrb[0].mxu0
        %v1405 = vadd.f32 0.0, %v1404
        %1406 = vmatprep.mubr.f32.mxu0 %v203
        %1407 = vmatmul.mubr.f32.gmra.mrb[0].mxu0 %v202
        %v1408 = vpop.f32.mrb[0].mxu0
        %v1409 = vadd.f32 0.0, %v1408
        %v1410 = vpop.f32.mrb[0].mxu0
        %v1411 = vadd.f32 0.0, %v1410
        %1412 = vmatprep.mubr.f32.mxu0 %v206
        %1413 = vmatmul.mubr.f32.gmra.mrb[0].mxu0 %v205
        %v1414 = vpop.f32.mrb[0].mxu0
        %v1415 = vadd.f32 0.0, %v1414
        %v1416 = vpop.f32.mrb[0].mxu0
        %v1417 = vadd.f32 0.0, %v1416
        %1418 = vmatprep.mubr.f32.mxu0 %v209
        %1419 = vmatmul.mubr.f32.gmra.mrb[0].mxu0 %v208
        %v1420 = vpop.f32.mrb[0].mxu0
        %v1421 = vadd.f32 0.0, %v1420
        %v1422 = vpop.f32.mrb[0].mxu0
        %v1423 = vadd.f32 0.0, %v1422
        %1424 = vmatprep.mubr.f32.mxu0 %v212
        %1425 = vmatmul.mubr.f32.gmra.mrb[0].mxu0 %v211
        %v1426 = vpop.f32.mrb[0].mxu0
        %v1427 = vadd.f32 0.0, %v1426
        %v1428 = vpop.f32.mrb[0].mxu0
        %v1429 = vadd.f32 0.0, %v1428
        %1430 = vmatprep.mubr.f32.mxu0 %v215
        %1431 = vmatmul.mubr.f32.gmra.mrb[0].mxu0 %v214
        %v1432 = vpop.f32.mrb[0].mxu0
        %v1433 = vadd.f32 0.0, %v1432
        %v1434 = vpop.f32.mrb[0].mxu0
        %v1435 = vadd.f32 0.0, %v1434
        %1436 = vmatprep.mubr.f32.mxu0 %v218
        %1437 = vmatmul.mubr.f32.gmra.mrb[0].mxu0 %v217
        %v1438 = vpop.f32.mrb[0].mxu0
        %v1439 = vadd.f32 0.0, %v1438
        %v1440 = vpop.f32.mrb[0].mxu0
        %v1441 = vadd.f32 0.0, %v1440
        %1442 = vdwg.mxu0
        %1443 = vmatprep.subr.mxu0 %v515
        %1444 = vmatpush1.msra.mxu0 %v514
        %1445 = vmatprep.subr.mxu0 %v524
        %1446 = vmatpush1.msra.mxu0 %v523
        %1447 = vmatprep.subr.mxu0 %v533
        %1448 = vmatpush1.msra.mxu0 %v532
        %1449 = vmatprep.subr.mxu0 %v542
        %1450 = vmatpush1.msra.mxu0 %v541
        %1451 = vmatprep.subr.mxu0 %v551
        %1452 = vmatpush1.msra.mxu0 %v550
        %1453 = vmatprep.subr.mxu0 %v560
        %1454 = vmatpush1.msra.mxu0 %v559
        %1455 = vmatprep.subr.mxu0 %v569
        %1456 = vmatpush1.msra.mxu0 %v568
        %1457 = vmatprep.subr.mxu0 %v578
        %1458 = vmatpush1.msra.mxu0 %v577
        %1459 = vmatprep.subr.mxu0 %v587
        %1460 = vmatpush1.msra.mxu0 %v586
        %1461 = vmatprep.subr.mxu0 %v596
        %1462 = vmatpush1.msra.mxu0 %v595
        %1463 = vmatprep.subr.mxu0 %v605
        %1464 = vmatpush1.msra.mxu0 %v604
        %1465 = vmatprep.subr.mxu0 %v614
        %1466 = vmatpush1.msra.mxu0 %v613
        %1467 = vmatprep.subr.mxu0 %v623
        %1468 = vmatpush1.msra.mxu0 %v622
        %1469 = vmatprep.subr.mxu0 %v632
        %1470 = vmatpush1.msra.mxu0 %v631
        %1471 = vmatprep.subr.mxu0 %v641
        %1472 = vmatpush1.msra.mxu0 %v640
        %1473 = vmatprep.subr.mxu0 %v650
        %1474 = vmatpush1.msra.mxu0 %v649
        %1475 = vmatprep.subr.mxu0 0.0
        %1476 = vmatpush1.msra.mxu0 0.0
        %1477 = vmatprep.subr.mxu0 0.0
        %1478 = vmatpush1.msra.mxu0 0.0
        %1479 = vmatprep.subr.mxu0 0.0
        %1480 = vmatpush1.msra.mxu0 0.0
        %1481 = vmatprep.subr.mxu0 0.0
        %1482 = vmatpush1.msra.mxu0 0.0
        %1483 = vmatprep.subr.mxu0 0.0
        %1484 = vmatpush1.msra.mxu0 0.0
        %1485 = vmatprep.subr.mxu0 0.0
        %1486 = vmatpush1.msra.mxu0 0.0
        %1487 = vmatprep.subr.mxu0 0.0
        %1488 = vmatpush1.msra.mxu0 0.0
        %1489 = vmatprep.subr.mxu0 0.0
        %1490 = vmatpush1.msra.mxu0 0.0
        %1491 = vmatprep.subr.mxu0 0.0
        %1492 = vmatpush1.msra.mxu0 0.0
        %1493 = vmatprep.subr.mxu0 0.0
        %1494 = vmatpush1.msra.mxu0 0.0
        %1495 = vmatprep.subr.mxu0 0.0
        %1496 = vmatpush1.msra.mxu0 0.0
        %1497 = vmatprep.subr.mxu0 0.0
        %1498 = vmatpush1.msra.mxu0 0.0
        %1499 = vmatprep.subr.mxu0 0.0
        %1500 = vmatpush1.msra.mxu0 0.0
        %1501 = vmatprep.subr.mxu0 0.0
        %1502 = vmatpush1.msra.mxu0 0.0
        %1503 = vmatprep.subr.mxu0 0.0
        %1504 = vmatpush1.msra.mxu0 0.0
        %1505 = vmatprep.subr.mxu0 0.0
        %1506 = vmatpush1.msra.mxu0 0.0
        %1507 = vmatprep.mubr.f32.mxu0 0.0
        %1508 = vmatmul.mubr.f32.gmra.mrb[0].mxu0 %v198
        %v1509 = vpop.f32.mrb[0].mxu0
        %v1510 = vadd.f32 %v1397, %v1509
        %v1511 = vpop.f32.mrb[0].mxu0
        %v1512 = vadd.f32 %v1399, %v1511
        %1513 = vmatprep.mubr.f32.mxu0 0.0
        %1514 = vmatmul.mubr.f32.gmra.mrb[0].mxu0 %v201
        %v1515 = vpop.f32.mrb[0].mxu0
        %v1516 = vadd.f32 %v1403, %v1515
        %v1517 = vpop.f32.mrb[0].mxu0
        %v1518 = vadd.f32 %v1405, %v1517
        %1519 = vmatprep.mubr.f32.mxu0 0.0
        %1520 = vmatmul.mubr.f32.gmra.mrb[0].mxu0 %v204
        %v1521 = vpop.f32.mrb[0].mxu0
        %v1522 = vadd.f32 %v1409, %v1521
        %v1523 = vpop.f32.mrb[0].mxu0
        %v1524 = vadd.f32 %v1411, %v1523
        %1525 = vmatprep.mubr.f32.mxu0 0.0
        %1526 = vmatmul.mubr.f32.gmra.mrb[0].mxu0 %v207
        %v1527 = vpop.f32.mrb[0].mxu0
        %v1528 = vadd.f32 %v1415, %v1527
        %v1529 = vpop.f32.mrb[0].mxu0
        %v1530 = vadd.f32 %v1417, %v1529
        %1531 = vmatprep.mubr.f32.mxu0 0.0
        %1532 = vmatmul.mubr.f32.gmra.mrb[0].mxu0 %v210
        %v1533 = vpop.f32.mrb[0].mxu0
        %v1534 = vadd.f32 %v1421, %v1533
        %v1535 = vpop.f32.mrb[0].mxu0
        %v1536 = vadd.f32 %v1423, %v1535
        %1537 = vmatprep.mubr.f32.mxu0 0.0
        %1538 = vmatmul.mubr.f32.gmra.mrb[0].mxu0 %v213
        %v1539 = vpop.f32.mrb[0].mxu0
        %v1540 = vadd.f32 %v1427, %v1539
        %v1541 = vpop.f32.mrb[0].mxu0
        %v1542 = vadd.f32 %v1429, %v1541
        %1543 = vmatprep.mubr.f32.mxu0 0.0
        %1544 = vmatmul.mubr.f32.gmra.mrb[0].mxu0 %v216
        %v1545 = vpop.f32.mrb[0].mxu0
        %v1546 = vadd.f32 %v1433, %v1545
        %v1547 = vpop.f32.mrb[0].mxu0
        %v1548 = vadd.f32 %v1435, %v1547
        %1549 = vmatprep.mubr.f32.mxu0 0.0
        %1550 = vmatmul.mubr.f32.gmra.mrb[0].mxu0 %v219
        %v1551 = vpop.f32.mrb[0].mxu0
        %v1552 = vadd.f32 %v1439, %v1551
        %v1553 = vpop.f32.mrb[0].mxu0
        %v1554 = vadd.f32 %v1441, %v1553
        %1555 = vdwg.mxu0
        %1556 = vmatprep.subr.mxu0 0.0
        %1557 = vmatpush1.msra.mxu0 %v228
        %1558 = vmatprep.subr.mxu0 0.0
        %1559 = vmatpush1.msra.mxu0 %v237
        %1560 = vmatprep.subr.mxu0 0.0
        %1561 = vmatpush1.msra.mxu0 %v246
        %1562 = vmatprep.subr.mxu0 0.0
        %1563 = vmatpush1.msra.mxu0 %v255
        %1564 = vmatprep.subr.mxu0 0.0
        %1565 = vmatpush1.msra.mxu0 %v264
        %1566 = vmatprep.subr.mxu0 0.0
        %1567 = vmatpush1.msra.mxu0 %v273
        %1568 = vmatprep.subr.mxu0 0.0
        %1569 = vmatpush1.msra.mxu0 %v282
        %1570 = vmatprep.subr.mxu0 0.0
        %1571 = vmatpush1.msra.mxu0 %v291
        %1572 = vmatprep.subr.mxu0 0.0
        %1573 = vmatpush1.msra.mxu0 %v300
        %1574 = vmatprep.subr.mxu0 0.0
        %1575 = vmatpush1.msra.mxu0 %v309
        %1576 = vmatprep.subr.mxu0 0.0
        %1577 = vmatpush1.msra.mxu0 %v318
        %1578 = vmatprep.subr.mxu0 0.0
        %1579 = vmatpush1.msra.mxu0 %v327
        %1580 = vmatprep.subr.mxu0 0.0
        %1581 = vmatpush1.msra.mxu0 %v336
        %1582 = vmatprep.subr.mxu0 0.0
        %1583 = vmatpush1.msra.mxu0 %v345
        %1584 = vmatprep.subr.mxu0 0.0
        %1585 = vmatpush1.msra.mxu0 %v354
        %1586 = vmatprep.subr.mxu0 0.0
        %1587 = vmatpush1.msra.mxu0 %v363
        %1588 = vmatprep.subr.mxu0 0.0
        %1589 = vmatpush1.msra.mxu0 %v372
        %1590 = vmatprep.subr.mxu0 0.0
        %1591 = vmatpush1.msra.mxu0 %v381
        %1592 = vmatprep.subr.mxu0 0.0
        %1593 = vmatpush1.msra.mxu0 %v390
        %1594 = vmatprep.subr.mxu0 0.0
        %1595 = vmatpush1.msra.mxu0 %v399
        %1596 = vmatprep.subr.mxu0 0.0
        %1597 = vmatpush1.msra.mxu0 %v408
        %1598 = vmatprep.subr.mxu0 0.0
        %1599 = vmatpush1.msra.mxu0 %v417
        %1600 = vmatprep.subr.mxu0 0.0
        %1601 = vmatpush1.msra.mxu0 %v426
        %1602 = vmatprep.subr.mxu0 0.0
        %1603 = vmatpush1.msra.mxu0 %v435
        %1604 = vmatprep.subr.mxu0 0.0
        %1605 = vmatpush1.msra.mxu0 %v444
        %1606 = vmatprep.subr.mxu0 0.0
        %1607 = vmatpush1.msra.mxu0 %v453
        %1608 = vmatprep.subr.mxu0 0.0
        %1609 = vmatpush1.msra.mxu0 %v462
        %1610 = vmatprep.subr.mxu0 0.0
        %1611 = vmatpush1.msra.mxu0 %v471
        %1612 = vmatprep.subr.mxu0 0.0
        %1613 = vmatpush1.msra.mxu0 %v480
        %1614 = vmatprep.subr.mxu0 0.0
        %1615 = vmatpush1.msra.mxu0 %v489
        %1616 = vmatprep.subr.mxu0 0.0
        %1617 = vmatpush1.msra.mxu0 %v498
        %1618 = vmatprep.subr.mxu0 0.0
        %1619 = vmatpush1.msra.mxu0 %v507
        %1620 = vmatprep.mubr.f32.mxu0 %v197
        %1621 = vmatmul.mubr.f32.gmra.mrb[0].mxu0 %v196
        %v1622 = vpop.f32.mrb[0].mxu0
        %v1623 = vadd.f32 0.0, %v1622
        %v1624 = vpop.f32.mrb[0].mxu0
        %1625 = vmatprep.mubr.f32.mxu0 %v200
        %1626 = vmatmul.mubr.f32.gmra.mrb[0].mxu0 %v199
        %v1627 = vpop.f32.mrb[0].mxu0
        %v1628 = vadd.f32 0.0, %v1627
        %v1629 = vpop.f32.mrb[0].mxu0
        %1630 = vmatprep.mubr.f32.mxu0 %v203
        %1631 = vmatmul.mubr.f32.gmra.mrb[0].mxu0 %v202
        %v1632 = vpop.f32.mrb[0].mxu0
        %v1633 = vadd.f32 0.0, %v1632
        %v1634 = vpop.f32.mrb[0].mxu0
        %1635 = vmatprep.mubr.f32.mxu0 %v206
        %1636 = vmatmul.mubr.f32.gmra.mrb[0].mxu0 %v205
        %v1637 = vpop.f32.mrb[0].mxu0
        %v1638 = vadd.f32 0.0, %v1637
        %v1639 = vpop.f32.mrb[0].mxu0
        %1640 = vmatprep.mubr.f32.mxu0 %v209
        %1641 = vmatmul.mubr.f32.gmra.mrb[0].mxu0 %v208
        %v1642 = vpop.f32.mrb[0].mxu0
        %v1643 = vadd.f32 0.0, %v1642
        %v1644 = vpop.f32.mrb[0].mxu0
        %1645 = vmatprep.mubr.f32.mxu0 %v212
        %1646 = vmatmul.mubr.f32.gmra.mrb[0].mxu0 %v211
        %v1647 = vpop.f32.mrb[0].mxu0
        %v1648 = vadd.f32 0.0, %v1647
        %v1649 = vpop.f32.mrb[0].mxu0
        %1650 = vmatprep.mubr.f32.mxu0 %v215
        %1651 = vmatmul.mubr.f32.gmra.mrb[0].mxu0 %v214
        %v1652 = vpop.f32.mrb[0].mxu0
        %v1653 = vadd.f32 0.0, %v1652
        %v1654 = vpop.f32.mrb[0].mxu0
        %1655 = vmatprep.mubr.f32.mxu0 %v218
        %1656 = vmatmul.mubr.f32.gmra.mrb[0].mxu0 %v217
        %v1657 = vpop.f32.mrb[0].mxu0
        %v1658 = vadd.f32 0.0, %v1657
        %v1659 = vpop.f32.mrb[0].mxu0
        %1660 = vdwg.mxu0
        %1661 = vmatprep.subr.mxu0 0.0
        %1662 = vmatpush1.msra.mxu0 %v516
        %1663 = vmatprep.subr.mxu0 0.0
        %1664 = vmatpush1.msra.mxu0 %v525
        %1665 = vmatprep.subr.mxu0 0.0
        %1666 = vmatpush1.msra.mxu0 %v534
        %1667 = vmatprep.subr.mxu0 0.0
        %1668 = vmatpush1.msra.mxu0 %v543
        %1669 = vmatprep.subr.mxu0 0.0
        %1670 = vmatpush1.msra.mxu0 %v552
        %1671 = vmatprep.subr.mxu0 0.0
        %1672 = vmatpush1.msra.mxu0 %v561
        %1673 = vmatprep.subr.mxu0 0.0
        %1674 = vmatpush1.msra.mxu0 %v570
        %1675 = vmatprep.subr.mxu0 0.0
        %1676 = vmatpush1.msra.mxu0 %v579
        %1677 = vmatprep.subr.mxu0 0.0
        %1678 = vmatpush1.msra.mxu0 %v588
        %1679 = vmatprep.subr.mxu0 0.0
        %1680 = vmatpush1.msra.mxu0 %v597
        %1681 = vmatprep.subr.mxu0 0.0
        %1682 = vmatpush1.msra.mxu0 %v606
        %1683 = vmatprep.subr.mxu0 0.0
        %1684 = vmatpush1.msra.mxu0 %v615
        %1685 = vmatprep.subr.mxu0 0.0
        %1686 = vmatpush1.msra.mxu0 %v624
        %1687 = vmatprep.subr.mxu0 0.0
        %1688 = vmatpush1.msra.mxu0 %v633
        %1689 = vmatprep.subr.mxu0 0.0
        %1690 = vmatpush1.msra.mxu0 %v642
        %1691 = vmatprep.subr.mxu0 0.0
        %1692 = vmatpush1.msra.mxu0 %v651
        %1693 = vmatprep.subr.mxu0 0.0
        %1694 = vmatpush1.msra.mxu0 0.0
        %1695 = vmatprep.subr.mxu0 0.0
        %1696 = vmatpush1.msra.mxu0 0.0
        %1697 = vmatprep.subr.mxu0 0.0
        %1698 = vmatpush1.msra.mxu0 0.0
        %1699 = vmatprep.subr.mxu0 0.0
        %1700 = vmatpush1.msra.mxu0 0.0
        %1701 = vmatprep.subr.mxu0 0.0
        %1702 = vmatpush1.msra.mxu0 0.0
        %1703 = vmatprep.subr.mxu0 0.0
        %1704 = vmatpush1.msra.mxu0 0.0
        %1705 = vmatprep.subr.mxu0 0.0
        %1706 = vmatpush1.msra.mxu0 0.0
        %1707 = vmatprep.subr.mxu0 0.0
        %1708 = vmatpush1.msra.mxu0 0.0
        %1709 = vmatprep.subr.mxu0 0.0
        %1710 = vmatpush1.msra.mxu0 0.0
        %1711 = vmatprep.subr.mxu0 0.0
        %1712 = vmatpush1.msra.mxu0 0.0
        %1713 = vmatprep.subr.mxu0 0.0
        %1714 = vmatpush1.msra.mxu0 0.0
        %1715 = vmatprep.subr.mxu0 0.0
        %1716 = vmatpush1.msra.mxu0 0.0
        %1717 = vmatprep.subr.mxu0 0.0
        %1718 = vmatpush1.msra.mxu0 0.0
        %1719 = vmatprep.subr.mxu0 0.0
        %1720 = vmatpush1.msra.mxu0 0.0
        %1721 = vmatprep.subr.mxu0 0.0
        %1722 = vmatpush1.msra.mxu0 0.0
        %1723 = vmatprep.subr.mxu0 0.0
        %1724 = vmatpush1.msra.mxu0 0.0
        %1725 = vmatprep.mubr.f32.mxu0 0.0
        %1726 = vmatmul.mubr.f32.gmra.mrb[0].mxu0 %v198
        %v1727 = vpop.f32.mrb[0].mxu0
        %v1728 = vadd.f32 %v1623, %v1727
        %v1729 = vpop.f32.mrb[0].mxu0
        %1730 = vmatprep.mubr.f32.mxu0 0.0
        %1731 = vmatmul.mubr.f32.gmra.mrb[0].mxu0 %v201
        %v1732 = vpop.f32.mrb[0].mxu0
        %v1733 = vadd.f32 %v1628, %v1732
        %v1734 = vpop.f32.mrb[0].mxu0
        %1735 = vmatprep.mubr.f32.mxu0 0.0
        %1736 = vmatmul.mubr.f32.gmra.mrb[0].mxu0 %v204
        %v1737 = vpop.f32.mrb[0].mxu0
        %v1738 = vadd.f32 %v1633, %v1737
        %v1739 = vpop.f32.mrb[0].mxu0
        %1740 = vmatprep.mubr.f32.mxu0 0.0
        %1741 = vmatmul.mubr.f32.gmra.mrb[0].mxu0 %v207
        %v1742 = vpop.f32.mrb[0].mxu0
        %v1743 = vadd.f32 %v1638, %v1742
        %v1744 = vpop.f32.mrb[0].mxu0
        %1745 = vmatprep.mubr.f32.mxu0 0.0
        %1746 = vmatmul.mubr.f32.gmra.mrb[0].mxu0 %v210
        %v1747 = vpop.f32.mrb[0].mxu0
        %v1748 = vadd.f32 %v1643, %v1747
        %v1749 = vpop.f32.mrb[0].mxu0
        %1750 = vmatprep.mubr.f32.mxu0 0.0
        %1751 = vmatmul.mubr.f32.gmra.mrb[0].mxu0 %v213
        %v1752 = vpop.f32.mrb[0].mxu0
        %v1753 = vadd.f32 %v1648, %v1752
        %v1754 = vpop.f32.mrb[0].mxu0
        %1755 = vmatprep.mubr.f32.mxu0 0.0
        %1756 = vmatmul.mubr.f32.gmra.mrb[0].mxu0 %v216
        %v1757 = vpop.f32.mrb[0].mxu0
        %v1758 = vadd.f32 %v1653, %v1757
        %v1759 = vpop.f32.mrb[0].mxu0
        %1760 = vmatprep.mubr.f32.mxu0 0.0
        %1761 = vmatmul.mubr.f32.gmra.mrb[0].mxu0 %v219
        %v1762 = vpop.f32.mrb[0].mxu0
        %v1763 = vadd.f32 %v1658, %v1762
        %v1764 = vpop.f32.mrb[0].mxu0
        %1765 = vdwg.mxu0
        %v1766 = vlaneseq
        %v1767 = vshrl.u32 %v1766, 7
        %v1768 = vadd.s32 %v1767, 8
        %v1769 = vadd.s32 %v1767, 16
        %v1770 = vadd.s32 %v1767, 24
        %v1771 = vadd.s32 %v1767, 32
        %v1772 = vadd.s32 %v1767, 40
        %v1773 = vadd.s32 %v1767, 48
        %v1774 = vadd.s32 %v1767, 56
        %v1775 = vlaneseq
        %v1776 = vand.u32 %v1775, 127
        %vm1777 = vcmp.ge.s32.totalorder %v1767, %v1776
        %vm1778 = vcmp.ge.s32.totalorder %v1768, %v1776
        %vm1779 = vcmp.ge.s32.totalorder %v1769, %v1776
        %vm1780 = vcmp.ge.s32.totalorder %v1770, %v1776
        %vm1781 = vcmp.ge.s32.totalorder %v1771, %v1776
        %vm1782 = vcmp.ge.s32.totalorder %v1772, %v1776
        %vm1783 = vcmp.ge.s32.totalorder %v1773, %v1776
        %vm1784 = vcmp.ge.s32.totalorder %v1774, %v1776
        %v1785 = vld [vmem:[%s3] sm:$0x7]
        %v1787 = vlaneseq
        %v1788 = vshrl.u32 %v1787, 7
        %v1789 = vsub.s32 0, %v1788
        %v1790 = vrot.slane %v1785, %v1789
        %v1791 = vlaneseq
        %v1792 = vshrl.u32 %v1791, 7
        %v1793 = vsub.s32 1, %v1792
        %v1794 = vrot.slane %v1785, %v1793
        %v1795 = vlaneseq
        %v1796 = vshrl.u32 %v1795, 7
        %v1797 = vsub.s32 2, %v1796
        %v1798 = vrot.slane %v1785, %v1797
        %vm1802 = vcmask 523264
        %v1804 = vsel %vm1802, %v832, 0
        %v1807 = vsel %vm1802, %v838, 0
        %v1810 = vsel %vm1802, %v844, 0
        %v1813 = vsel %vm1802, %v850, 0
        %v1816 = vsel %vm1802, %v856, 0
        %v1819 = vsel %vm1802, %v862, 0
        %v1822 = vsel %vm1802, %v868, 0
        %v1825 = vsel %vm1802, %v874, 0
        %v1828 = vsel %vm1802, %v1060, 0
        %v1831 = vsel %vm1802, %v1066, 0
        %v1834 = vsel %vm1802, %v1072, 0
        %v1837 = vsel %vm1802, %v1078, 0
        %v1840 = vsel %vm1802, %v1084, 0
        %v1843 = vsel %vm1802, %v1090, 0
        %v1846 = vsel %vm1802, %v1096, 0
        %v1849 = vsel %vm1802, %v1102, 0
        %1851 = vmatprep.subr.mxu0 0.0
        %1852 = vmatpush1.xpose.msra.mxu0 %v1828
        %1853 = vmatprep.subr.mxu0 0.0
        %1854 = vmatpush1.xpose.msra.mxu0 %v1831
        %1855 = vmatprep.subr.mxu0 0.0
        %1856 = vmatpush1.xpose.msra.mxu0 %v1834
        %1857 = vmatprep.subr.mxu0 0.0
        %1858 = vmatpush1.xpose.msra.mxu0 %v1837
        %1859 = vmatprep.subr.mxu0 0.0
        %1860 = vmatpush1.xpose.msra.mxu0 %v1840
        %1861 = vmatprep.subr.mxu0 0.0
        %1862 = vmatpush1.xpose.msra.mxu0 %v1843
        %1863 = vmatprep.subr.mxu0 0.0
        %1864 = vmatpush1.xpose.msra.mxu0 %v1846
        %1865 = vmatprep.subr.mxu0 0.0
        %1866 = vmatpush1.xpose.msra.mxu0 %v1849
        %1867 = vmatprep.subr.mxu0 0.0
        %1868 = vmatpush1.xpose.msra.mxu0 0.0
        %1869 = vmatprep.subr.mxu0 0.0
        %1870 = vmatpush1.xpose.msra.mxu0 0.0
        %1871 = vmatprep.subr.mxu0 0.0
        %1872 = vmatpush1.xpose.msra.mxu0 0.0
        %1873 = vmatprep.subr.mxu0 0.0
        %1874 = vmatpush1.xpose.msra.mxu0 0.0
        %1875 = vmatprep.subr.mxu0 0.0
        %1876 = vmatpush1.xpose.msra.mxu0 0.0
        %1877 = vmatprep.subr.mxu0 0.0
        %1878 = vmatpush1.xpose.msra.mxu0 0.0
        %1879 = vmatprep.subr.mxu0 0.0
        %1880 = vmatpush1.xpose.msra.mxu0 0.0
        %1881 = vmatprep.subr.mxu0 0.0
        %1882 = vmatpush1.xpose.msra.mxu0 0.0
        %1883 = vmatprep.subr.mxu0 0.0
        %1884 = vmatpush1.xpose.msra.mxu0 0.0
        %1885 = vmatprep.subr.mxu0 0.0
        %1886 = vmatpush1.xpose.msra.mxu0 0.0
        %1887 = vmatprep.subr.mxu0 0.0
        %1888 = vmatpush1.xpose.msra.mxu0 0.0
        %1889 = vmatprep.subr.mxu0 0.0
        %1890 = vmatpush1.xpose.msra.mxu0 0.0
        %1891 = vmatprep.subr.mxu0 0.0
        %1892 = vmatpush1.xpose.msra.mxu0 0.0
        %1893 = vmatprep.subr.mxu0 0.0
        %1894 = vmatpush1.xpose.msra.mxu0 0.0
        %1895 = vmatprep.subr.mxu0 0.0
        %1896 = vmatpush1.xpose.msra.mxu0 0.0
        %1897 = vmatprep.subr.mxu0 0.0
        %1898 = vmatpush1.xpose.msra.mxu0 0.0
        %1899 = vmatprep.subr.mxu0 0.0
        %1900 = vmatpush1.xpose.msra.mxu0 0.0
        %1901 = vmatprep.subr.mxu0 0.0
        %1902 = vmatpush1.xpose.msra.mxu0 0.0
        %1903 = vmatprep.subr.mxu0 0.0
        %1904 = vmatpush1.xpose.msra.mxu0 0.0
        %1905 = vmatprep.subr.mxu0 0.0
        %1906 = vmatpush1.xpose.msra.mxu0 0.0
        %1907 = vmatprep.subr.mxu0 0.0
        %1908 = vmatpush1.xpose.msra.mxu0 0.0
        %1909 = vmatprep.subr.mxu0 0.0
        %1910 = vmatpush1.xpose.msra.mxu0 0.0
        %1911 = vmatprep.subr.mxu0 0.0
        %1912 = vmatpush1.xpose.msra.mxu0 0.0
        %1913 = vmatprep.subr.mxu0 0.0
        %1914 = vmatpush1.xpose.msra.mxu0 0.0
        %1915 = vmatprep.mubr.f32.mxu0 0.0
        %1916 = vmatmul.mubr.f32.gmra.mrb[0].mxu0 %v1804
        %v1917 = vpop.f32.mrb[0].mxu0
        %v1918 = vadd.f32 0.0, %v1917
        %v1919 = vpop.f32.mrb[0].mxu0
        %1920 = vmatprep.mubr.f32.mxu0 0.0
        %1921 = vmatmul.mubr.f32.gmra.mrb[0].mxu0 %v1807
        %v1922 = vpop.f32.mrb[0].mxu0
        %v1923 = vadd.f32 0.0, %v1922
        %v1924 = vpop.f32.mrb[0].mxu0
        %1925 = vmatprep.mubr.f32.mxu0 0.0
        %1926 = vmatmul.mubr.f32.gmra.mrb[0].mxu0 %v1810
        %v1927 = vpop.f32.mrb[0].mxu0
        %v1928 = vadd.f32 0.0, %v1927
        %v1929 = vpop.f32.mrb[0].mxu0
        %1930 = vmatprep.mubr.f32.mxu0 0.0
        %1931 = vmatmul.mubr.f32.gmra.mrb[0].mxu0 %v1813
        %v1932 = vpop.f32.mrb[0].mxu0
        %v1933 = vadd.f32 0.0, %v1932
        %v1934 = vpop.f32.mrb[0].mxu0
        %1935 = vmatprep.mubr.f32.mxu0 0.0
        %1936 = vmatmul.mubr.f32.gmra.mrb[0].mxu0 %v1816
        %v1937 = vpop.f32.mrb[0].mxu0
        %v1938 = vadd.f32 0.0, %v1937
        %v1939 = vpop.f32.mrb[0].mxu0
        %1940 = vmatprep.mubr.f32.mxu0 0.0
        %1941 = vmatmul.mubr.f32.gmra.mrb[0].mxu0 %v1819
        %v1942 = vpop.f32.mrb[0].mxu0
        %v1943 = vadd.f32 0.0, %v1942
        %v1944 = vpop.f32.mrb[0].mxu0
        %1945 = vmatprep.mubr.f32.mxu0 0.0
        %1946 = vmatmul.mubr.f32.gmra.mrb[0].mxu0 %v1822
        %v1947 = vpop.f32.mrb[0].mxu0
        %v1948 = vadd.f32 0.0, %v1947
        %v1949 = vpop.f32.mrb[0].mxu0
        %1950 = vmatprep.mubr.f32.mxu0 0.0
        %1951 = vmatmul.mubr.f32.gmra.mrb[0].mxu0 %v1825
        %v1952 = vpop.f32.mrb[0].mxu0
        %v1953 = vadd.f32 0.0, %v1952
        %v1954 = vpop.f32.mrb[0].mxu0
        %1955 = vdwg.mxu0
        %v1956 = vmul.f32 %v1918, 0.05103104
        %v1957 = vmul.f32 %v1923, 0.05103104
        %v1958 = vmul.f32 %v1928, 0.05103104
        %v1959 = vmul.f32 %v1933, 0.05103104
        %v1960 = vmul.f32 %v1938, 0.05103104
        %v1961 = vmul.f32 %v1943, 0.05103104
        %v1962 = vmul.f32 %v1948, 0.05103104
        %v1963 = vmul.f32 %v1953, 0.05103104
        %v1964 = vsel %vm1777, %v1956, -inf
        %v1965 = vsel %vm1778, %v1957, -inf
        %v1966 = vsel %vm1779, %v1958, -inf
        %v1967 = vsel %vm1780, %v1959, -inf
        %v1968 = vsel %vm1781, %v1960, -inf
        %v1969 = vsel %vm1782, %v1961, -inf
        %v1970 = vsel %vm1783, %v1962, -inf
        %v1971 = vsel %vm1784, %v1963, -inf
        %v1972 = vsel %vm1802, %v1964, -inf
        %1973 = vmax.xlane.f32.xlu0 %v1972
        %v1974 = vpop.xlane.xlu0 %1973
        %v1975 = vsel %vm1802, %v1965, -inf
        %1976 = vmax.xlane.f32.xlu0 %v1975
        %v1977 = vpop.xlane.xlu0 %1976
        %v1978 = vsel %vm1802, %v1966, -inf
        %1979 = vmax.xlane.f32.xlu0 %v1978
        %v1980 = vpop.xlane.xlu0 %1979
        %v1981 = vsel %vm1802, %v1967, -inf
        %1982 = vmax.xlane.f32.xlu0 %v1981
        %v1983 = vpop.xlane.xlu0 %1982
        %v1984 = vsel %vm1802, %v1968, -inf
        %1985 = vmax.xlane.f32.xlu0 %v1984
        %v1986 = vpop.xlane.xlu0 %1985
        %v1987 = vsel %vm1802, %v1969, -inf
        %1988 = vmax.xlane.f32.xlu0 %v1987
        %v1989 = vpop.xlane.xlu0 %1988
        %v1990 = vsel %vm1802, %v1970, -inf
        %1991 = vmax.xlane.f32.xlu0 %v1990
        %v1992 = vpop.xlane.xlu0 %1991
        %v1993 = vsel %vm1802, %v1971, -inf
        %1994 = vmax.xlane.f32.xlu0 %v1993
        %v1995 = vpop.xlane.xlu0 %1994
        %v1996 = vsub.f32 %v1964, %v1974
        %v1997 = vsub.f32 %v1965, %v1977
        %v1998 = vsub.f32 %v1966, %v1980
        %v1999 = vsub.f32 %v1967, %v1983
        %v2000 = vsub.f32 %v1968, %v1986
        %v2001 = vsub.f32 %v1969, %v1989
        %v2002 = vsub.f32 %v1970, %v1992
        %v2003 = vsub.f32 %v1971, %v1995
        %v2004 = vmul.f32 %v1996, 1.442695
        %v2005 = vpow.pop %v2004
        %v2006 = vmul.f32 %v1997, 1.442695
        %v2007 = vpow.pop %v2006
        %v2008 = vmul.f32 %v1998, 1.442695
        %v2009 = vpow.pop %v2008
        %v2010 = vmul.f32 %v1999, 1.442695
        %v2011 = vpow.pop %v2010
        %v2012 = vmul.f32 %v2000, 1.442695
        %v2013 = vpow.pop %v2012
        %v2014 = vmul.f32 %v2001, 1.442695
        %v2015 = vpow.pop %v2014
        %v2016 = vmul.f32 %v2002, 1.442695
        %v2017 = vpow.pop %v2016
        %v2018 = vmul.f32 %v2003, 1.442695
        %v2019 = vpow.pop %v2018
        %v2020 = vsel %vm1802, %v2005, 0.0
        %2021 = vadd.xlane.f32.xlu0 %v2020
        %v2022 = vpop.xlane.xlu0 %2021
        %v2023 = vsel %vm1802, %v2007, 0.0
        %2024 = vadd.xlane.f32.xlu0 %v2023
        %v2025 = vpop.xlane.xlu0 %2024
        %v2026 = vsel %vm1802, %v2009, 0.0
        %2027 = vadd.xlane.f32.xlu0 %v2026
        %v2028 = vpop.xlane.xlu0 %2027
        %v2029 = vsel %vm1802, %v2011, 0.0
        %2030 = vadd.xlane.f32.xlu0 %v2029
        %v2031 = vpop.xlane.xlu0 %2030
        %v2032 = vsel %vm1802, %v2013, 0.0
        %2033 = vadd.xlane.f32.xlu0 %v2032
        %v2034 = vpop.xlane.xlu0 %2033
        %v2035 = vsel %vm1802, %v2015, 0.0
        %2036 = vadd.xlane.f32.xlu0 %v2035
        %v2037 = vpop.xlane.xlu0 %2036
        %v2038 = vsel %vm1802, %v2017, 0.0
        %2039 = vadd.xlane.f32.xlu0 %v2038
        %v2040 = vpop.xlane.xlu0 %2039
        %v2041 = vsel %vm1802, %v2019, 0.0
        %2042 = vadd.xlane.f32.xlu0 %v2041
        %v2043 = vpop.xlane.xlu0 %2042
        %v2044 = vrcp.pop %v2022
        %v2045 = vrcp.pop %v2025
        %v2046 = vrcp.pop %v2028
        %v2047 = vrcp.pop %v2031
        %v2048 = vrcp.pop %v2034
        %v2049 = vrcp.pop %v2037
        %v2050 = vrcp.pop %v2040
        %v2051 = vrcp.pop %v2043
        %v2052 = vmul.f32 %v2005, %v2044
        %v2053 = vmul.f32 %v2007, %v2045
        %v2054 = vmul.f32 %v2009, %v2046
        %v2055 = vmul.f32 %v2011, %v2047
        %v2056 = vmul.f32 %v2013, %v2048
        %v2057 = vmul.f32 %v2015, %v2049
        %v2058 = vmul.f32 %v2017, %v2050
        %v2059 = vmul.f32 %v2019, %v2051
        %v2061 = vsel %vm1802, %v2052, 0
        %v2064 = vsel %vm1802, %v2053, 0
        %v2067 = vsel %vm1802, %v2054, 0
        %v2070 = vsel %vm1802, %v2055, 0
        %v2073 = vsel %vm1802, %v2056, 0
        %v2076 = vsel %vm1802, %v2057, 0
        %v2079 = vsel %vm1802, %v2058, 0
        %v2082 = vsel %vm1802, %v2059, 0
        %2084 = vmatprep.subr.mxu0 0.0
        %2085 = vmatpush1.msra.mxu0 %v1510
        %2086 = vmatprep.subr.mxu0 0.0
        %2087 = vmatpush1.msra.mxu0 %v1516
        %2088 = vmatprep.subr.mxu0 0.0
        %2089 = vmatpush1.msra.mxu0 %v1522
        %2090 = vmatprep.subr.mxu0 0.0
        %2091 = vmatpush1.msra.mxu0 %v1528
        %2092 = vmatprep.subr.mxu0 0.0
        %2093 = vmatpush1.msra.mxu0 %v1534
        %2094 = vmatprep.subr.mxu0 0.0
        %2095 = vmatpush1.msra.mxu0 %v1540
        %2096 = vmatprep.subr.mxu0 0.0
        %2097 = vmatpush1.msra.mxu0 %v1546
        %2098 = vmatprep.subr.mxu0 0.0
        %2099 = vmatpush1.msra.mxu0 %v1552
        %2100 = vmatprep.subr.mxu0 0.0
        %2101 = vmatpush1.msra.mxu0 0.0
        %2102 = vmatprep.subr.mxu0 0.0
        %2103 = vmatpush1.msra.mxu0 0.0
        %2104 = vmatprep.subr.mxu0 0.0
        %2105 = vmatpush1.msra.mxu0 0.0
        %2106 = vmatprep.subr.mxu0 0.0
        %2107 = vmatpush1.msra.mxu0 0.0
        %2108 = vmatprep.subr.mxu0 0.0
        %2109 = vmatpush1.msra.mxu0 0.0
        %2110 = vmatprep.subr.mxu0 0.0
        %2111 = vmatpush1.msra.mxu0 0.0
        %2112 = vmatprep.subr.mxu0 0.0
        %2113 = vmatpush1.msra.mxu0 0.0
        %2114 = vmatprep.subr.mxu0 0.0
        %2115 = vmatpush1.msra.mxu0 0.0
        %2116 = vmatprep.subr.mxu0 0.0
        %2117 = vmatpush1.msra.mxu0 0.0
        %2118 = vmatprep.subr.mxu0 0.0
        %2119 = vmatpush1.msra.mxu0 0.0
        %2120 = vmatprep.subr.mxu0 0.0
        %2121 = vmatpush1.msra.mxu0 0.0
        %2122 = vmatprep.subr.mxu0 0.0
        %2123 = vmatpush1.msra.mxu0 0.0
        %2124 = vmatprep.subr.mxu0 0.0
        %2125 = vmatpush1.msra.mxu0 0.0
        %2126 = vmatprep.subr.mxu0 0.0
        %2127 = vmatpush1.msra.mxu0 0.0
        %2128 = vmatprep.subr.mxu0 0.0
        %2129 = vmatpush1.msra.mxu0 0.0
        %2130 = vmatprep.subr.mxu0 0.0
        %2131 = vmatpush1.msra.mxu0 0.0
        %2132 = vmatprep.subr.mxu0 0.0
        %2133 = vmatpush1.msra.mxu0 0.0
        %2134 = vmatprep.subr.mxu0 0.0
        %2135 = vmatpush1.msra.mxu0 0.0
        %2136 = vmatprep.subr.mxu0 0.0
        %2137 = vmatpush1.msra.mxu0 0.0
        %2138 = vmatprep.subr.mxu0 0.0
        %2139 = vmatpush1.msra.mxu0 0.0
        %2140 = vmatprep.subr.mxu0 0.0
        %2141 = vmatpush1.msra.mxu0 0.0
        %2142 = vmatprep.subr.mxu0 0.0
        %2143 = vmatpush1.msra.mxu0 0.0
        %2144 = vmatprep.subr.mxu0 0.0
        %2145 = vmatpush1.msra.mxu0 0.0
        %2146 = vmatprep.subr.mxu0 0.0
        %2147 = vmatpush1.msra.mxu0 0.0
        %2148 = vmatprep.mubr.f32.mxu0 0.0
        %2149 = vmatmul.mubr.f32.gmra.mrb[0].mxu0 %v2061
        %v2150 = vpop.f32.mrb[0].mxu0
        %v2151 = vadd.f32 0.0, %v2150
        %v2152 = vpop.f32.mrb[0].mxu0
        %2153 = vmatprep.mubr.f32.mxu0 0.0
        %2154 = vmatmul.mubr.f32.gmra.mrb[0].mxu0 %v2064
        %v2155 = vpop.f32.mrb[0].mxu0
        %v2156 = vadd.f32 0.0, %v2155
        %v2157 = vpop.f32.mrb[0].mxu0
        %2158 = vmatprep.mubr.f32.mxu0 0.0
        %2159 = vmatmul.mubr.f32.gmra.mrb[0].mxu0 %v2067
        %v2160 = vpop.f32.mrb[0].mxu0
        %v2161 = vadd.f32 0.0, %v2160
        %v2162 = vpop.f32.mrb[0].mxu0
        %2163 = vmatprep.mubr.f32.mxu0 0.0
        %2164 = vmatmul.mubr.f32.gmra.mrb[0].mxu0 %v2070
        %v2165 = vpop.f32.mrb[0].mxu0
        %v2166 = vadd.f32 0.0, %v2165
        %v2167 = vpop.f32.mrb[0].mxu0
        %2168 = vmatprep.mubr.f32.mxu0 0.0
        %2169 = vmatmul.mubr.f32.gmra.mrb[0].mxu0 %v2073
        %v2170 = vpop.f32.mrb[0].mxu0
        %v2171 = vadd.f32 0.0, %v2170
        %v2172 = vpop.f32.mrb[0].mxu0
        %2173 = vmatprep.mubr.f32.mxu0 0.0
        %2174 = vmatmul.mubr.f32.gmra.mrb[0].mxu0 %v2076
        %v2175 = vpop.f32.mrb[0].mxu0
        %v2176 = vadd.f32 0.0, %v2175
        %v2177 = vpop.f32.mrb[0].mxu0
        %2178 = vmatprep.mubr.f32.mxu0 0.0
        %2179 = vmatmul.mubr.f32.gmra.mrb[0].mxu0 %v2079
        %v2180 = vpop.f32.mrb[0].mxu0
        %v2181 = vadd.f32 0.0, %v2180
        %v2182 = vpop.f32.mrb[0].mxu0
        %2183 = vmatprep.mubr.f32.mxu0 0.0
        %2184 = vmatmul.mubr.f32.gmra.mrb[0].mxu0 %v2082
        %v2185 = vpop.f32.mrb[0].mxu0
        %v2186 = vadd.f32 0.0, %v2185
        %v2187 = vpop.f32.mrb[0].mxu0
        %2188 = vdwg.mxu0
        %v2189 = vld [vmem:[%s2] sm:$0xff]
        %v2190 = vld [vmem:[%s2 + $0x8] sm:$0xff]
        %v2191 = vld [vmem:[%s2 + $0x10] sm:$0xff]
        %v2192 = vld [vmem:[%s2 + $0x18] sm:$0xff]
        %v2193 = vld [vmem:[%s2 + $0x20] sm:$0xff]
        %v2194 = vld [vmem:[%s2 + $0x28] sm:$0xff]
        %v2195 = vld [vmem:[%s2 + $0x30] sm:$0xff]
        %v2196 = vld [vmem:[%s2 + $0x38] sm:$0xff]
        %v2197 = vld [vmem:[%s2 + $0x40] sm:$0xff]
        %v2198 = vld [vmem:[%s2 + $0x48] sm:$0xff]
        %v2199 = vld [vmem:[%s2 + $0x50] sm:$0xff]
        %v2200 = vld [vmem:[%s2 + $0x58] sm:$0xff]
        %v2201 = vld [vmem:[%s2 + $0x60] sm:$0xff]
        %v2202 = vld [vmem:[%s2 + $0x68] sm:$0xff]
        %v2203 = vld [vmem:[%s2 + $0x70] sm:$0xff]
        %v2204 = vld [vmem:[%s2 + $0x78] sm:$0xff]
        %v2205 = vld [vmem:[%s2 + $0x80] sm:$0xff]
        %v2206 = vld [vmem:[%s2 + $0x88] sm:$0xff]
        %v2207 = vld [vmem:[%s2 + $0x90] sm:$0xff]
        %v2208 = vld [vmem:[%s2 + $0x98] sm:$0xff]
        %v2209 = vld [vmem:[%s2 + $0xa0] sm:$0xff]
        %v2210 = vld [vmem:[%s2 + $0xa8] sm:$0xff]
        %v2211 = vld [vmem:[%s2 + $0xb0] sm:$0xff]
        %v2212 = vld [vmem:[%s2 + $0xb8] sm:$0xff]
        %v2214 = vsel %vm1802, %v2151, 0
        %v2217 = vsel %vm1802, %v2156, 0
        %v2220 = vsel %vm1802, %v2161, 0
        %v2223 = vsel %vm1802, %v2166, 0
        %v2226 = vsel %vm1802, %v2171, 0
        %v2229 = vsel %vm1802, %v2176, 0
        %v2232 = vsel %vm1802, %v2181, 0
        %v2235 = vsel %vm1802, %v2186, 0
        %2237 = vmatprep.subr.mxu0 %v2190
        %2238 = vmatpush1.msra.mxu0 %v2189
        %2239 = vmatprep.subr.mxu0 %v2193
        %2240 = vmatpush1.msra.mxu0 %v2192
        %2241 = vmatprep.subr.mxu0 %v2196
        %2242 = vmatpush1.msra.mxu0 %v2195
        %2243 = vmatprep.subr.mxu0 %v2199
        %2244 = vmatpush1.msra.mxu0 %v2198
        %2245 = vmatprep.subr.mxu0 %v2202
        %2246 = vmatpush1.msra.mxu0 %v2201
        %2247 = vmatprep.subr.mxu0 %v2205
        %2248 = vmatpush1.msra.mxu0 %v2204
        %2249 = vmatprep.subr.mxu0 %v2208
        %2250 = vmatpush1.msra.mxu0 %v2207
        %2251 = vmatprep.subr.mxu0 %v2211
        %2252 = vmatpush1.msra.mxu0 %v2210
        %2253 = vmatprep.subr.mxu0 0.0
        %2254 = vmatpush1.msra.mxu0 0.0
        %2255 = vmatprep.subr.mxu0 0.0
        %2256 = vmatpush1.msra.mxu0 0.0
        %2257 = vmatprep.subr.mxu0 0.0
        %2258 = vmatpush1.msra.mxu0 0.0
        %2259 = vmatprep.subr.mxu0 0.0
        %2260 = vmatpush1.msra.mxu0 0.0
        %2261 = vmatprep.subr.mxu0 0.0
        %2262 = vmatpush1.msra.mxu0 0.0
        %2263 = vmatprep.subr.mxu0 0.0
        %2264 = vmatpush1.msra.mxu0 0.0
        %2265 = vmatprep.subr.mxu0 0.0
        %2266 = vmatpush1.msra.mxu0 0.0
        %2267 = vmatprep.subr.mxu0 0.0
        %2268 = vmatpush1.msra.mxu0 0.0
        %2269 = vmatprep.subr.mxu0 0.0
        %2270 = vmatpush1.msra.mxu0 0.0
        %2271 = vmatprep.subr.mxu0 0.0
        %2272 = vmatpush1.msra.mxu0 0.0
        %2273 = vmatprep.subr.mxu0 0.0
        %2274 = vmatpush1.msra.mxu0 0.0
        %2275 = vmatprep.subr.mxu0 0.0
        %2276 = vmatpush1.msra.mxu0 0.0
        %2277 = vmatprep.subr.mxu0 0.0
        %2278 = vmatpush1.msra.mxu0 0.0
        %2279 = vmatprep.subr.mxu0 0.0
        %2280 = vmatpush1.msra.mxu0 0.0
        %2281 = vmatprep.subr.mxu0 0.0
        %2282 = vmatpush1.msra.mxu0 0.0
        %2283 = vmatprep.subr.mxu0 0.0
        %2284 = vmatpush1.msra.mxu0 0.0
        %2285 = vmatprep.subr.mxu0 0.0
        %2286 = vmatpush1.msra.mxu0 0.0
        %2287 = vmatprep.subr.mxu0 0.0
        %2288 = vmatpush1.msra.mxu0 0.0
        %2289 = vmatprep.subr.mxu0 0.0
        %2290 = vmatpush1.msra.mxu0 0.0
        %2291 = vmatprep.subr.mxu0 0.0
        %2292 = vmatpush1.msra.mxu0 0.0
        %2293 = vmatprep.subr.mxu0 0.0
        %2294 = vmatpush1.msra.mxu0 0.0
        %2295 = vmatprep.subr.mxu0 0.0
        %2296 = vmatpush1.msra.mxu0 0.0
        %2297 = vmatprep.subr.mxu0 0.0
        %2298 = vmatpush1.msra.mxu0 0.0
        %2299 = vmatprep.subr.mxu0 0.0
        %2300 = vmatpush1.msra.mxu0 0.0
        %2301 = vmatprep.mubr.f32.mxu0 0.0
        %2302 = vmatmul.mubr.f32.gmra.mrb[0].mxu0 %v2214
        %v2303 = vpop.f32.mrb[0].mxu0
        %v2304 = vadd.f32 0.0, %v2303
        %v2305 = vpop.f32.mrb[0].mxu0
        %v2306 = vadd.f32 0.0, %v2305
        %2307 = vmatprep.mubr.f32.mxu0 0.0
        %2308 = vmatmul.mubr.f32.gmra.mrb[0].mxu0 %v2217
        %v2309 = vpop.f32.mrb[0].mxu0
        %v2310 = vadd.f32 0.0, %v2309
        %v2311 = vpop.f32.mrb[0].mxu0
        %v2312 = vadd.f32 0.0, %v2311
        %2313 = vmatprep.mubr.f32.mxu0 0.0
        %2314 = vmatmul.mubr.f32.gmra.mrb[0].mxu0 %v2220
        %v2315 = vpop.f32.mrb[0].mxu0
        %v2316 = vadd.f32 0.0, %v2315
        %v2317 = vpop.f32.mrb[0].mxu0
        %v2318 = vadd.f32 0.0, %v2317
        %2319 = vmatprep.mubr.f32.mxu0 0.0
        %2320 = vmatmul.mubr.f32.gmra.mrb[0].mxu0 %v2223
        %v2321 = vpop.f32.mrb[0].mxu0
        %v2322 = vadd.f32 0.0, %v2321
        %v2323 = vpop.f32.mrb[0].mxu0
        %v2324 = vadd.f32 0.0, %v2323
        %2325 = vmatprep.mubr.f32.mxu0 0.0
        %2326 = vmatmul.mubr.f32.gmra.mrb[0].mxu0 %v2226
        %v2327 = vpop.f32.mrb[0].mxu0
        %v2328 = vadd.f32 0.0, %v2327
        %v2329 = vpop.f32.mrb[0].mxu0
        %v2330 = vadd.f32 0.0, %v2329
        %2331 = vmatprep.mubr.f32.mxu0 0.0
        %2332 = vmatmul.mubr.f32.gmra.mrb[0].mxu0 %v2229
        %v2333 = vpop.f32.mrb[0].mxu0
        %v2334 = vadd.f32 0.0, %v2333
        %v2335 = vpop.f32.mrb[0].mxu0
        %v2336 = vadd.f32 0.0, %v2335
        %2337 = vmatprep.mubr.f32.mxu0 0.0
        %2338 = vmatmul.mubr.f32.gmra.mrb[0].mxu0 %v2232
        %v2339 = vpop.f32.mrb[0].mxu0
        %v2340 = vadd.f32 0.0, %v2339
        %v2341 = vpop.f32.mrb[0].mxu0
        %v2342 = vadd.f32 0.0, %v2341
        %2343 = vmatprep.mubr.f32.mxu0 0.0
        %2344 = vmatmul.mubr.f32.gmra.mrb[0].mxu0 %v2235
        %v2345 = vpop.f32.mrb[0].mxu0
        %v2346 = vadd.f32 0.0, %v2345
        %v2347 = vpop.f32.mrb[0].mxu0
        %v2348 = vadd.f32 0.0, %v2347
        %2349 = vdwg.mxu0
        %2350 = vmatprep.subr.mxu0 0.0
        %2351 = vmatpush1.msra.mxu0 %v2191
        %2352 = vmatprep.subr.mxu0 0.0
        %2353 = vmatpush1.msra.mxu0 %v2194
        %2354 = vmatprep.subr.mxu0 0.0
        %2355 = vmatpush1.msra.mxu0 %v2197
        %2356 = vmatprep.subr.mxu0 0.0
        %2357 = vmatpush1.msra.mxu0 %v2200
        %2358 = vmatprep.subr.mxu0 0.0
        %2359 = vmatpush1.msra.mxu0 %v2203
        %2360 = vmatprep.subr.mxu0 0.0
        %2361 = vmatpush1.msra.mxu0 %v2206
        %2362 = vmatprep.subr.mxu0 0.0
        %2363 = vmatpush1.msra.mxu0 %v2209
        %2364 = vmatprep.subr.mxu0 0.0
        %2365 = vmatpush1.msra.mxu0 %v2212
        %2366 = vmatprep.subr.mxu0 0.0
        %2367 = vmatpush1.msra.mxu0 0.0
        %2368 = vmatprep.subr.mxu0 0.0
        %2369 = vmatpush1.msra.mxu0 0.0
        %2370 = vmatprep.subr.mxu0 0.0
        %2371 = vmatpush1.msra.mxu0 0.0
        %2372 = vmatprep.subr.mxu0 0.0
        %2373 = vmatpush1.msra.mxu0 0.0
        %2374 = vmatprep.subr.mxu0 0.0
        %2375 = vmatpush1.msra.mxu0 0.0
        %2376 = vmatprep.subr.mxu0 0.0
        %2377 = vmatpush1.msra.mxu0 0.0
        %2378 = vmatprep.subr.mxu0 0.0
        %2379 = vmatpush1.msra.mxu0 0.0
        %2380 = vmatprep.subr.mxu0 0.0
        %2381 = vmatpush1.msra.mxu0 0.0
        %2382 = vmatprep.subr.mxu0 0.0
        %2383 = vmatpush1.msra.mxu0 0.0
        %2384 = vmatprep.subr.mxu0 0.0
        %2385 = vmatpush1.msra.mxu0 0.0
        %2386 = vmatprep.subr.mxu0 0.0
        %2387 = vmatpush1.msra.mxu0 0.0
        %2388 = vmatprep.subr.mxu0 0.0
        %2389 = vmatpush1.msra.mxu0 0.0
        %2390 = vmatprep.subr.mxu0 0.0
        %2391 = vmatpush1.msra.mxu0 0.0
        %2392 = vmatprep.subr.mxu0 0.0
        %2393 = vmatpush1.msra.mxu0 0.0
        %2394 = vmatprep.subr.mxu0 0.0
        %2395 = vmatpush1.msra.mxu0 0.0
        %2396 = vmatprep.subr.mxu0 0.0
        %2397 = vmatpush1.msra.mxu0 0.0
        %2398 = vmatprep.subr.mxu0 0.0
        %2399 = vmatpush1.msra.mxu0 0.0
        %2400 = vmatprep.subr.mxu0 0.0
        %2401 = vmatpush1.msra.mxu0 0.0
        %2402 = vmatprep.subr.mxu0 0.0
        %2403 = vmatpush1.msra.mxu0 0.0
        %2404 = vmatprep.subr.mxu0 0.0
        %2405 = vmatpush1.msra.mxu0 0.0
        %2406 = vmatprep.subr.mxu0 0.0
        %2407 = vmatpush1.msra.mxu0 0.0
        %2408 = vmatprep.subr.mxu0 0.0
        %2409 = vmatpush1.msra.mxu0 0.0
        %2410 = vmatprep.subr.mxu0 0.0
        %2411 = vmatpush1.msra.mxu0 0.0
        %2412 = vmatprep.subr.mxu0 0.0
        %2413 = vmatpush1.msra.mxu0 0.0
        %2414 = vmatprep.mubr.f32.mxu0 0.0
        %2415 = vmatmul.mubr.f32.gmra.mrb[0].mxu0 %v2214
        %v2416 = vpop.f32.mrb[0].mxu0
        %v2417 = vadd.f32 0.0, %v2416
        %v2418 = vpop.f32.mrb[0].mxu0
        %2419 = vmatprep.mubr.f32.mxu0 0.0
        %2420 = vmatmul.mubr.f32.gmra.mrb[0].mxu0 %v2217
        %v2421 = vpop.f32.mrb[0].mxu0
        %v2422 = vadd.f32 0.0, %v2421
        %v2423 = vpop.f32.mrb[0].mxu0
        %2424 = vmatprep.mubr.f32.mxu0 0.0
        %2425 = vmatmul.mubr.f32.gmra.mrb[0].mxu0 %v2220
        %v2426 = vpop.f32.mrb[0].mxu0
        %v2427 = vadd.f32 0.0, %v2426
        %v2428 = vpop.f32.mrb[0].mxu0
        %2429 = vmatprep.mubr.f32.mxu0 0.0
        %2430 = vmatmul.mubr.f32.gmra.mrb[0].mxu0 %v2223
        %v2431 = vpop.f32.mrb[0].mxu0
        %v2432 = vadd.f32 0.0, %v2431
        %v2433 = vpop.f32.mrb[0].mxu0
        %2434 = vmatprep.mubr.f32.mxu0 0.0
        %2435 = vmatmul.mubr.f32.gmra.mrb[0].mxu0 %v2226
        %v2436 = vpop.f32.mrb[0].mxu0
        %v2437 = vadd.f32 0.0, %v2436
        %v2438 = vpop.f32.mrb[0].mxu0
        %2439 = vmatprep.mubr.f32.mxu0 0.0
        %2440 = vmatmul.mubr.f32.gmra.mrb[0].mxu0 %v2229
        %v2441 = vpop.f32.mrb[0].mxu0
        %v2442 = vadd.f32 0.0, %v2441
        %v2443 = vpop.f32.mrb[0].mxu0
        %2444 = vmatprep.mubr.f32.mxu0 0.0
        %2445 = vmatmul.mubr.f32.gmra.mrb[0].mxu0 %v2232
        %v2446 = vpop.f32.mrb[0].mxu0
        %v2447 = vadd.f32 0.0, %v2446
        %v2448 = vpop.f32.mrb[0].mxu0
        %2449 = vmatprep.mubr.f32.mxu0 0.0
        %2450 = vmatmul.mubr.f32.gmra.mrb[0].mxu0 %v2235
        %v2451 = vpop.f32.mrb[0].mxu0
        %v2452 = vadd.f32 0.0, %v2451
        %v2453 = vpop.f32.mrb[0].mxu0
        %2454 = vdwg.mxu0
        %v2455 = vadd.f32 %v1790, %v2304
        %v2456 = vadd.f32 %v1794, %v2306
        %v2457 = vadd.f32 %v1798, %v2417
        %v2458 = vadd.f32 %v1790, %v2310
        %v2459 = vadd.f32 %v1794, %v2312
        %v2460 = vadd.f32 %v1798, %v2422
        %v2461 = vadd.f32 %v1790, %v2316
        %v2462 = vadd.f32 %v1794, %v2318
        %v2463 = vadd.f32 %v1798, %v2427
        %v2464 = vadd.f32 %v1790, %v2322
        %v2465 = vadd.f32 %v1794, %v2324
        %v2466 = vadd.f32 %v1798, %v2432
        %v2467 = vadd.f32 %v1790, %v2328
        %v2468 = vadd.f32 %v1794, %v2330
        %v2469 = vadd.f32 %v1798, %v2437
        %v2470 = vadd.f32 %v1790, %v2334
        %v2471 = vadd.f32 %v1794, %v2336
        %v2472 = vadd.f32 %v1798, %v2442
        %v2473 = vadd.f32 %v1790, %v2340
        %v2474 = vadd.f32 %v1794, %v2342
        %v2475 = vadd.f32 %v1798, %v2447
        %v2476 = vadd.f32 %v1790, %v2346
        %v2477 = vadd.f32 %v1794, %v2348
        %v2478 = vadd.f32 %v1798, %v2452
        %2479 = vrot.lane.b32.xlu0 %v832, 64
        %v2480 = vpop.permute.xlu0 %2479
        %2481 = vrot.lane.b32.xlu0 %v838, 64
        %v2482 = vpop.permute.xlu0 %2481
        %2483 = vrot.lane.b32.xlu0 %v844, 64
        %v2484 = vpop.permute.xlu0 %2483
        %2485 = vrot.lane.b32.xlu0 %v850, 64
        %v2486 = vpop.permute.xlu0 %2485
        %2487 = vrot.lane.b32.xlu0 %v856, 64
        %v2488 = vpop.permute.xlu0 %2487
        %2489 = vrot.lane.b32.xlu0 %v862, 64
        %v2490 = vpop.permute.xlu0 %2489
        %2491 = vrot.lane.b32.xlu0 %v868, 64
        %v2492 = vpop.permute.xlu0 %2491
        %2493 = vrot.lane.b32.xlu0 %v874, 64
        %v2494 = vpop.permute.xlu0 %2493
        %2495 = vrot.lane.b32.xlu0 %v1060, 64
        %v2496 = vpop.permute.xlu0 %2495
        %2497 = vrot.lane.b32.xlu0 %v1066, 64
        %v2498 = vpop.permute.xlu0 %2497
        %2499 = vrot.lane.b32.xlu0 %v1072, 64
        %v2500 = vpop.permute.xlu0 %2499
        %2501 = vrot.lane.b32.xlu0 %v1078, 64
        %v2502 = vpop.permute.xlu0 %2501
        %2503 = vrot.lane.b32.xlu0 %v1084, 64
        %v2504 = vpop.permute.xlu0 %2503
        %2505 = vrot.lane.b32.xlu0 %v1090, 64
        %v2506 = vpop.permute.xlu0 %2505
        %2507 = vrot.lane.b32.xlu0 %v1096, 64
        %v2508 = vpop.permute.xlu0 %2507
        %2509 = vrot.lane.b32.xlu0 %v1102, 64
        %v2510 = vpop.permute.xlu0 %2509
        %v2511 = vsel %vm1802, %v2480, 0
        %v2513 = vsel %vm1802, %v2482, 0
        %v2515 = vsel %vm1802, %v2484, 0
        %v2517 = vsel %vm1802, %v2486, 0
        %v2519 = vsel %vm1802, %v2488, 0
        %v2521 = vsel %vm1802, %v2490, 0
        %v2523 = vsel %vm1802, %v2492, 0
        %v2525 = vsel %vm1802, %v2494, 0
        %v2527 = vsel %vm1802, %v2496, 0
        %v2529 = vsel %vm1802, %v2498, 0
        %v2531 = vsel %vm1802, %v2500, 0
        %v2533 = vsel %vm1802, %v2502, 0
        %v2535 = vsel %vm1802, %v2504, 0
        %v2537 = vsel %vm1802, %v2506, 0
        %v2539 = vsel %vm1802, %v2508, 0
        %v2541 = vsel %vm1802, %v2510, 0
        %2543 = vmatprep.subr.mxu0 0.0
        %2544 = vmatpush1.xpose.msra.mxu0 %v2527
        %2545 = vmatprep.subr.mxu0 0.0
        %2546 = vmatpush1.xpose.msra.mxu0 %v2529
        %2547 = vmatprep.subr.mxu0 0.0
        %2548 = vmatpush1.xpose.msra.mxu0 %v2531
        %2549 = vmatprep.subr.mxu0 0.0
        %2550 = vmatpush1.xpose.msra.mxu0 %v2533
        %2551 = vmatprep.subr.mxu0 0.0
        %2552 = vmatpush1.xpose.msra.mxu0 %v2535
        %2553 = vmatprep.subr.mxu0 0.0
        %2554 = vmatpush1.xpose.msra.mxu0 %v2537
        %2555 = vmatprep.subr.mxu0 0.0
        %2556 = vmatpush1.xpose.msra.mxu0 %v2539
        %2557 = vmatprep.subr.mxu0 0.0
        %2558 = vmatpush1.xpose.msra.mxu0 %v2541
        %2559 = vmatprep.subr.mxu0 0.0
        %2560 = vmatpush1.xpose.msra.mxu0 0.0
        %2561 = vmatprep.subr.mxu0 0.0
        %2562 = vmatpush1.xpose.msra.mxu0 0.0
        %2563 = vmatprep.subr.mxu0 0.0
        %2564 = vmatpush1.xpose.msra.mxu0 0.0
        %2565 = vmatprep.subr.mxu0 0.0
        %2566 = vmatpush1.xpose.msra.mxu0 0.0
        %2567 = vmatprep.subr.mxu0 0.0
        %2568 = vmatpush1.xpose.msra.mxu0 0.0
        %2569 = vmatprep.subr.mxu0 0.0
        %2570 = vmatpush1.xpose.msra.mxu0 0.0
        %2571 = vmatprep.subr.mxu0 0.0
        %2572 = vmatpush1.xpose.msra.mxu0 0.0
        %2573 = vmatprep.subr.mxu0 0.0
        %2574 = vmatpush1.xpose.msra.mxu0 0.0
        %2575 = vmatprep.subr.mxu0 0.0
        %2576 = vmatpush1.xpose.msra.mxu0 0.0
        %2577 = vmatprep.subr.mxu0 0.0
        %2578 = vmatpush1.xpose.msra.mxu0 0.0
        %2579 = vmatprep.subr.mxu0 0.0
        %2580 = vmatpush1.xpose.msra.mxu0 0.0
        %2581 = vmatprep.subr.mxu0 0.0
        %2582 = vmatpush1.xpose.msra.mxu0 0.0
        %2583 = vmatprep.subr.mxu0 0.0
        %2584 = vmatpush1.xpose.msra.mxu0 0.0
        %2585 = vmatprep.subr.mxu0 0.0
        %2586 = vmatpush1.xpose.msra.mxu0 0.0
        %2587 = vmatprep.subr.mxu0 0.0
        %2588 = vmatpush1.xpose.msra.mxu0 0.0
        %2589 = vmatprep.subr.mxu0 0.0
        %2590 = vmatpush1.xpose.msra.mxu0 0.0
        %2591 = vmatprep.subr.mxu0 0.0
        %2592 = vmatpush1.xpose.msra.mxu0 0.0
        %2593 = vmatprep.subr.mxu0 0.0
        %2594 = vmatpush1.xpose.msra.mxu0 0.0
        %2595 = vmatprep.subr.mxu0 0.0
        %2596 = vmatpush1.xpose.msra.mxu0 0.0
        %2597 = vmatprep.subr.mxu0 0.0
        %2598 = vmatpush1.xpose.msra.mxu0 0.0
        %2599 = vmatprep.subr.mxu0 0.0
        %2600 = vmatpush1.xpose.msra.mxu0 0.0
        %2601 = vmatprep.subr.mxu0 0.0
        %2602 = vmatpush1.xpose.msra.mxu0 0.0
        %2603 = vmatprep.subr.mxu0 0.0
        %2604 = vmatpush1.xpose.msra.mxu0 0.0
        %2605 = vmatprep.subr.mxu0 0.0
        %2606 = vmatpush1.xpose.msra.mxu0 0.0
        %2607 = vmatprep.mubr.f32.mxu0 0.0
        %2608 = vmatmul.mubr.f32.gmra.mrb[0].mxu0 %v2511
        %v2609 = vpop.f32.mrb[0].mxu0
        %v2610 = vadd.f32 0.0, %v2609
        %v2611 = vpop.f32.mrb[0].mxu0
        %2612 = vmatprep.mubr.f32.mxu0 0.0
        %2613 = vmatmul.mubr.f32.gmra.mrb[0].mxu0 %v2513
        %v2614 = vpop.f32.mrb[0].mxu0
        %v2615 = vadd.f32 0.0, %v2614
        %v2616 = vpop.f32.mrb[0].mxu0
        %2617 = vmatprep.mubr.f32.mxu0 0.0
        %2618 = vmatmul.mubr.f32.gmra.mrb[0].mxu0 %v2515
        %v2619 = vpop.f32.mrb[0].mxu0
        %v2620 = vadd.f32 0.0, %v2619
        %v2621 = vpop.f32.mrb[0].mxu0
        %2622 = vmatprep.mubr.f32.mxu0 0.0
        %2623 = vmatmul.mubr.f32.gmra.mrb[0].mxu0 %v2517
        %v2624 = vpop.f32.mrb[0].mxu0
        %v2625 = vadd.f32 0.0, %v2624
        %v2626 = vpop.f32.mrb[0].mxu0
        %2627 = vmatprep.mubr.f32.mxu0 0.0
        %2628 = vmatmul.mubr.f32.gmra.mrb[0].mxu0 %v2519
        %v2629 = vpop.f32.mrb[0].mxu0
        %v2630 = vadd.f32 0.0, %v2629
        %v2631 = vpop.f32.mrb[0].mxu0
        %2632 = vmatprep.mubr.f32.mxu0 0.0
        %2633 = vmatmul.mubr.f32.gmra.mrb[0].mxu0 %v2521
        %v2634 = vpop.f32.mrb[0].mxu0
        %v2635 = vadd.f32 0.0, %v2634
        %v2636 = vpop.f32.mrb[0].mxu0
        %2637 = vmatprep.mubr.f32.mxu0 0.0
        %2638 = vmatmul.mubr.f32.gmra.mrb[0].mxu0 %v2523
        %v2639 = vpop.f32.mrb[0].mxu0
        %v2640 = vadd.f32 0.0, %v2639
        %v2641 = vpop.f32.mrb[0].mxu0
        %2642 = vmatprep.mubr.f32.mxu0 0.0
        %2643 = vmatmul.mubr.f32.gmra.mrb[0].mxu0 %v2525
        %v2644 = vpop.f32.mrb[0].mxu0
        %v2645 = vadd.f32 0.0, %v2644
        %v2646 = vpop.f32.mrb[0].mxu0
        %2647 = vdwg.mxu0
        %v2648 = vmul.f32 %v2610, 0.05103104
        %v2649 = vmul.f32 %v2615, 0.05103104
        %v2650 = vmul.f32 %v2620, 0.05103104
        %v2651 = vmul.f32 %v2625, 0.05103104
        %v2652 = vmul.f32 %v2630, 0.05103104
        %v2653 = vmul.f32 %v2635, 0.05103104
        %v2654 = vmul.f32 %v2640, 0.05103104
        %v2655 = vmul.f32 %v2645, 0.05103104
        %v2656 = vsel %vm1777, %v2648, -inf
        %v2657 = vsel %vm1778, %v2649, -inf
        %v2658 = vsel %vm1779, %v2650, -inf
        %v2659 = vsel %vm1780, %v2651, -inf
        %v2660 = vsel %vm1781, %v2652, -inf
        %v2661 = vsel %vm1782, %v2653, -inf
        %v2662 = vsel %vm1783, %v2654, -inf
        %v2663 = vsel %vm1784, %v2655, -inf
        %v2664 = vsel %vm1802, %v2656, -inf
        %2665 = vmax.xlane.f32.xlu0 %v2664
        %v2666 = vpop.xlane.xlu0 %2665
        %v2667 = vsel %vm1802, %v2657, -inf
        %2668 = vmax.xlane.f32.xlu0 %v2667
        %v2669 = vpop.xlane.xlu0 %2668
        %v2670 = vsel %vm1802, %v2658, -inf
        %2671 = vmax.xlane.f32.xlu0 %v2670
        %v2672 = vpop.xlane.xlu0 %2671
        %v2673 = vsel %vm1802, %v2659, -inf
        %2674 = vmax.xlane.f32.xlu0 %v2673
        %v2675 = vpop.xlane.xlu0 %2674
        %v2676 = vsel %vm1802, %v2660, -inf
        %2677 = vmax.xlane.f32.xlu0 %v2676
        %v2678 = vpop.xlane.xlu0 %2677
        %v2679 = vsel %vm1802, %v2661, -inf
        %2680 = vmax.xlane.f32.xlu0 %v2679
        %v2681 = vpop.xlane.xlu0 %2680
        %v2682 = vsel %vm1802, %v2662, -inf
        %2683 = vmax.xlane.f32.xlu0 %v2682
        %v2684 = vpop.xlane.xlu0 %2683
        %v2685 = vsel %vm1802, %v2663, -inf
        %2686 = vmax.xlane.f32.xlu0 %v2685
        %v2687 = vpop.xlane.xlu0 %2686
        %v2688 = vsub.f32 %v2656, %v2666
        %v2689 = vsub.f32 %v2657, %v2669
        %v2690 = vsub.f32 %v2658, %v2672
        %v2691 = vsub.f32 %v2659, %v2675
        %v2692 = vsub.f32 %v2660, %v2678
        %v2693 = vsub.f32 %v2661, %v2681
        %v2694 = vsub.f32 %v2662, %v2684
        %v2695 = vsub.f32 %v2663, %v2687
        %v2696 = vmul.f32 %v2688, 1.442695
        %v2697 = vpow.pop %v2696
        %v2698 = vmul.f32 %v2689, 1.442695
        %v2699 = vpow.pop %v2698
        %v2700 = vmul.f32 %v2690, 1.442695
        %v2701 = vpow.pop %v2700
        %v2702 = vmul.f32 %v2691, 1.442695
        %v2703 = vpow.pop %v2702
        %v2704 = vmul.f32 %v2692, 1.442695
        %v2705 = vpow.pop %v2704
        %v2706 = vmul.f32 %v2693, 1.442695
        %v2707 = vpow.pop %v2706
        %v2708 = vmul.f32 %v2694, 1.442695
        %v2709 = vpow.pop %v2708
        %v2710 = vmul.f32 %v2695, 1.442695
        %v2711 = vpow.pop %v2710
        %v2712 = vsel %vm1802, %v2697, 0.0
        %2713 = vadd.xlane.f32.xlu0 %v2712
        %v2714 = vpop.xlane.xlu0 %2713
        %v2715 = vsel %vm1802, %v2699, 0.0
        %2716 = vadd.xlane.f32.xlu0 %v2715
        %v2717 = vpop.xlane.xlu0 %2716
        %v2718 = vsel %vm1802, %v2701, 0.0
        %2719 = vadd.xlane.f32.xlu0 %v2718
        %v2720 = vpop.xlane.xlu0 %2719
        %v2721 = vsel %vm1802, %v2703, 0.0
        %2722 = vadd.xlane.f32.xlu0 %v2721
        %v2723 = vpop.xlane.xlu0 %2722
        %v2724 = vsel %vm1802, %v2705, 0.0
        %2725 = vadd.xlane.f32.xlu0 %v2724
        %v2726 = vpop.xlane.xlu0 %2725
        %v2727 = vsel %vm1802, %v2707, 0.0
        %2728 = vadd.xlane.f32.xlu0 %v2727
        %v2729 = vpop.xlane.xlu0 %2728
        %v2730 = vsel %vm1802, %v2709, 0.0
        %2731 = vadd.xlane.f32.xlu0 %v2730
        %v2732 = vpop.xlane.xlu0 %2731
        %v2733 = vsel %vm1802, %v2711, 0.0
        %2734 = vadd.xlane.f32.xlu0 %v2733
        %v2735 = vpop.xlane.xlu0 %2734
        %v2736 = vrcp.pop %v2714
        %v2737 = vrcp.pop %v2717
        %v2738 = vrcp.pop %v2720
        %v2739 = vrcp.pop %v2723
        %v2740 = vrcp.pop %v2726
        %v2741 = vrcp.pop %v2729
        %v2742 = vrcp.pop %v2732
        %v2743 = vrcp.pop %v2735
        %v2744 = vmul.f32 %v2697, %v2736
        %v2745 = vmul.f32 %v2699, %v2737
        %v2746 = vmul.f32 %v2701, %v2738
        %v2747 = vmul.f32 %v2703, %v2739
        %v2748 = vmul.f32 %v2705, %v2740
        %v2749 = vmul.f32 %v2707, %v2741
        %v2750 = vmul.f32 %v2709, %v2742
        %v2751 = vmul.f32 %v2711, %v2743
        %2760 = vrot.lane.b32.xlu0 %v1510, 64
        %v2761 = vpop.permute.xlu0 %2760
        %2762 = vrot.lane.b32.xlu0 %v1516, 64
        %v2763 = vpop.permute.xlu0 %2762
        %2764 = vrot.lane.b32.xlu0 %v1522, 64
        %v2765 = vpop.permute.xlu0 %2764
        %2766 = vrot.lane.b32.xlu0 %v1528, 64
        %v2767 = vpop.permute.xlu0 %2766
        %2768 = vrot.lane.b32.xlu0 %v1534, 64
        %v2769 = vpop.permute.xlu0 %2768
        %2770 = vrot.lane.b32.xlu0 %v1540, 64
        %v2771 = vpop.permute.xlu0 %2770
        %2772 = vrot.lane.b32.xlu0 %v1546, 64
        %v2773 = vpop.permute.xlu0 %2772
        %2774 = vrot.lane.b32.xlu0 %v1552, 64
        %v2775 = vpop.permute.xlu0 %2774
        %v2785 = vsel %vm1802, %v2744, 0
        %v2788 = vsel %vm1802, %v2745, 0
        %v2791 = vsel %vm1802, %v2746, 0
        %v2794 = vsel %vm1802, %v2747, 0
        %v2797 = vsel %vm1802, %v2748, 0
        %v2800 = vsel %vm1802, %v2749, 0
        %v2803 = vsel %vm1802, %v2750, 0
        %v2806 = vsel %vm1802, %v2751, 0
        %2808 = vmatprep.subr.mxu0 0.0
        %2809 = vmatpush1.msra.mxu0 %v2761
        %2810 = vmatprep.subr.mxu0 0.0
        %2811 = vmatpush1.msra.mxu0 %v2763
        %2812 = vmatprep.subr.mxu0 0.0
        %2813 = vmatpush1.msra.mxu0 %v2765
        %2814 = vmatprep.subr.mxu0 0.0
        %2815 = vmatpush1.msra.mxu0 %v2767
        %2816 = vmatprep.subr.mxu0 0.0
        %2817 = vmatpush1.msra.mxu0 %v2769
        %2818 = vmatprep.subr.mxu0 0.0
        %2819 = vmatpush1.msra.mxu0 %v2771
        %2820 = vmatprep.subr.mxu0 0.0
        %2821 = vmatpush1.msra.mxu0 %v2773
        %2822 = vmatprep.subr.mxu0 0.0
        %2823 = vmatpush1.msra.mxu0 %v2775
        %2824 = vmatprep.subr.mxu0 0.0
        %2825 = vmatpush1.msra.mxu0 0.0
        %2826 = vmatprep.subr.mxu0 0.0
        %2827 = vmatpush1.msra.mxu0 0.0
        %2828 = vmatprep.subr.mxu0 0.0
        %2829 = vmatpush1.msra.mxu0 0.0
        %2830 = vmatprep.subr.mxu0 0.0
        %2831 = vmatpush1.msra.mxu0 0.0
        %2832 = vmatprep.subr.mxu0 0.0
        %2833 = vmatpush1.msra.mxu0 0.0
        %2834 = vmatprep.subr.mxu0 0.0
        %2835 = vmatpush1.msra.mxu0 0.0
        %2836 = vmatprep.subr.mxu0 0.0
        %2837 = vmatpush1.msra.mxu0 0.0
        %2838 = vmatprep.subr.mxu0 0.0
        %2839 = vmatpush1.msra.mxu0 0.0
        %2840 = vmatprep.subr.mxu0 0.0
        %2841 = vmatpush1.msra.mxu0 0.0
        %2842 = vmatprep.subr.mxu0 0.0
        %2843 = vmatpush1.msra.mxu0 0.0
        %2844 = vmatprep.subr.mxu0 0.0
        %2845 = vmatpush1.msra.mxu0 0.0
        %2846 = vmatprep.subr.mxu0 0.0
        %2847 = vmatpush1.msra.mxu0 0.0
        %2848 = vmatprep.subr.mxu0 0.0
        %2849 = vmatpush1.msra.mxu0 0.0
        %2850 = vmatprep.subr.mxu0 0.0
        %2851 = vmatpush1.msra.mxu0 0.0
        %2852 = vmatprep.subr.mxu0 0.0
        %2853 = vmatpush1.msra.mxu0 0.0
        %2854 = vmatprep.subr.mxu0 0.0
        %2855 = vmatpush1.msra.mxu0 0.0
        %2856 = vmatprep.subr.mxu0 0.0
        %2857 = vmatpush1.msra.mxu0 0.0
        %2858 = vmatprep.subr.mxu0 0.0
        %2859 = vmatpush1.msra.mxu0 0.0
        %2860 = vmatprep.subr.mxu0 0.0
        %2861 = vmatpush1.msra.mxu0 0.0
        %2862 = vmatprep.subr.mxu0 0.0
        %2863 = vmatpush1.msra.mxu0 0.0
        %2864 = vmatprep.subr.mxu0 0.0
        %2865 = vmatpush1.msra.mxu0 0.0
        %2866 = vmatprep.subr.mxu0 0.0
        %2867 = vmatpush1.msra.mxu0 0.0
        %2868 = vmatprep.subr.mxu0 0.0
        %2869 = vmatpush1.msra.mxu0 0.0
        %2870 = vmatprep.subr.mxu0 0.0
        %2871 = vmatpush1.msra.mxu0 0.0
        %2872 = vmatprep.mubr.f32.mxu0 0.0
        %2873 = vmatmul.mubr.f32.gmra.mrb[0].mxu0 %v2785
        %v2874 = vpop.f32.mrb[0].mxu0
        %v2875 = vadd.f32 0.0, %v2874
        %v2876 = vpop.f32.mrb[0].mxu0
        %2877 = vmatprep.mubr.f32.mxu0 0.0
        %2878 = vmatmul.mubr.f32.gmra.mrb[0].mxu0 %v2788
        %v2879 = vpop.f32.mrb[0].mxu0
        %v2880 = vadd.f32 0.0, %v2879
        %v2881 = vpop.f32.mrb[0].mxu0
        %2882 = vmatprep.mubr.f32.mxu0 0.0
        %2883 = vmatmul.mubr.f32.gmra.mrb[0].mxu0 %v2791
        %v2884 = vpop.f32.mrb[0].mxu0
        %v2885 = vadd.f32 0.0, %v2884
        %v2886 = vpop.f32.mrb[0].mxu0
        %2887 = vmatprep.mubr.f32.mxu0 0.0
        %2888 = vmatmul.mubr.f32.gmra.mrb[0].mxu0 %v2794
        %v2889 = vpop.f32.mrb[0].mxu0
        %v2890 = vadd.f32 0.0, %v2889
        %v2891 = vpop.f32.mrb[0].mxu0
        %2892 = vmatprep.mubr.f32.mxu0 0.0
        %2893 = vmatmul.mubr.f32.gmra.mrb[0].mxu0 %v2797
        %v2894 = vpop.f32.mrb[0].mxu0
        %v2895 = vadd.f32 0.0, %v2894
        %v2896 = vpop.f32.mrb[0].mxu0
        %2897 = vmatprep.mubr.f32.mxu0 0.0
        %2898 = vmatmul.mubr.f32.gmra.mrb[0].mxu0 %v2800
        %v2899 = vpop.f32.mrb[0].mxu0
        %v2900 = vadd.f32 0.0, %v2899
        %v2901 = vpop.f32.mrb[0].mxu0
        %2902 = vmatprep.mubr.f32.mxu0 0.0
        %2903 = vmatmul.mubr.f32.gmra.mrb[0].mxu0 %v2803
        %v2904 = vpop.f32.mrb[0].mxu0
        %v2905 = vadd.f32 0.0, %v2904
        %v2906 = vpop.f32.mrb[0].mxu0
        %2907 = vmatprep.mubr.f32.mxu0 0.0
        %2908 = vmatmul.mubr.f32.gmra.mrb[0].mxu0 %v2806
        %v2909 = vpop.f32.mrb[0].mxu0
        %v2910 = vadd.f32 0.0, %v2909
        %v2911 = vpop.f32.mrb[0].mxu0
        %2912 = vdwg.mxu0
        %v2913 = vld [vmem:[%s2 + $0xc0] sm:$0xff]
        %v2914 = vld [vmem:[%s2 + $0xc8] sm:$0xff]
        %v2915 = vld [vmem:[%s2 + $0xd0] sm:$0xff]
        %v2916 = vld [vmem:[%s2 + $0xd8] sm:$0xff]
        %v2917 = vld [vmem:[%s2 + $0xe0] sm:$0xff]
        %v2918 = vld [vmem:[%s2 + $0xe8] sm:$0xff]
        %v2919 = vld [vmem:[%s2 + $0xf0] sm:$0xff]
        %v2920 = vld [vmem:[%s2 + $0xf8] sm:$0xff]
        %v2921 = vld [vmem:[%s2 + $0x100] sm:$0xff]
        %v2922 = vld [vmem:[%s2 + $0x108] sm:$0xff]
        %v2923 = vld [vmem:[%s2 + $0x110] sm:$0xff]
        %v2924 = vld [vmem:[%s2 + $0x118] sm:$0xff]
        %v2925 = vld [vmem:[%s2 + $0x120] sm:$0xff]
        %v2926 = vld [vmem:[%s2 + $0x128] sm:$0xff]
        %v2927 = vld [vmem:[%s2 + $0x130] sm:$0xff]
        %v2928 = vld [vmem:[%s2 + $0x138] sm:$0xff]
        %v2929 = vld [vmem:[%s2 + $0x140] sm:$0xff]
        %v2930 = vld [vmem:[%s2 + $0x148] sm:$0xff]
        %v2931 = vld [vmem:[%s2 + $0x150] sm:$0xff]
        %v2932 = vld [vmem:[%s2 + $0x158] sm:$0xff]
        %v2933 = vld [vmem:[%s2 + $0x160] sm:$0xff]
        %v2934 = vld [vmem:[%s2 + $0x168] sm:$0xff]
        %v2935 = vld [vmem:[%s2 + $0x170] sm:$0xff]
        %v2936 = vld [vmem:[%s2 + $0x178] sm:$0xff]
        %v2938 = vsel %vm1802, %v2875, 0
        %v2941 = vsel %vm1802, %v2880, 0
        %v2944 = vsel %vm1802, %v2885, 0
        %v2947 = vsel %vm1802, %v2890, 0
        %v2950 = vsel %vm1802, %v2895, 0
        %v2953 = vsel %vm1802, %v2900, 0
        %v2956 = vsel %vm1802, %v2905, 0
        %v2959 = vsel %vm1802, %v2910, 0
        %2961 = vmatprep.subr.mxu0 %v2914
        %2962 = vmatpush1.msra.mxu0 %v2913
        %2963 = vmatprep.subr.mxu0 %v2917
        %2964 = vmatpush1.msra.mxu0 %v2916
        %2965 = vmatprep.subr.mxu0 %v2920
        %2966 = vmatpush1.msra.mxu0 %v2919
        %2967 = vmatprep.subr.mxu0 %v2923
        %2968 = vmatpush1.msra.mxu0 %v2922
        %2969 = vmatprep.subr.mxu0 %v2926
        %2970 = vmatpush1.msra.mxu0 %v2925
        %2971 = vmatprep.subr.mxu0 %v2929
        %2972 = vmatpush1.msra.mxu0 %v2928
        %2973 = vmatprep.subr.mxu0 %v2932
        %2974 = vmatpush1.msra.mxu0 %v2931
        %2975 = vmatprep.subr.mxu0 %v2935
        %2976 = vmatpush1.msra.mxu0 %v2934
        %2977 = vmatprep.subr.mxu0 0.0
        %2978 = vmatpush1.msra.mxu0 0.0
        %2979 = vmatprep.subr.mxu0 0.0
        %2980 = vmatpush1.msra.mxu0 0.0
        %2981 = vmatprep.subr.mxu0 0.0
        %2982 = vmatpush1.msra.mxu0 0.0
        %2983 = vmatprep.subr.mxu0 0.0
        %2984 = vmatpush1.msra.mxu0 0.0
        %2985 = vmatprep.subr.mxu0 0.0
        %2986 = vmatpush1.msra.mxu0 0.0
        %2987 = vmatprep.subr.mxu0 0.0
        %2988 = vmatpush1.msra.mxu0 0.0
        %2989 = vmatprep.subr.mxu0 0.0
        %2990 = vmatpush1.msra.mxu0 0.0
        %2991 = vmatprep.subr.mxu0 0.0
        %2992 = vmatpush1.msra.mxu0 0.0
        %2993 = vmatprep.subr.mxu0 0.0
        %2994 = vmatpush1.msra.mxu0 0.0
        %2995 = vmatprep.subr.mxu0 0.0
        %2996 = vmatpush1.msra.mxu0 0.0
        %2997 = vmatprep.subr.mxu0 0.0
        %2998 = vmatpush1.msra.mxu0 0.0
        %2999 = vmatprep.subr.mxu0 0.0
        %3000 = vmatpush1.msra.mxu0 0.0
        %3001 = vmatprep.subr.mxu0 0.0
        %3002 = vmatpush1.msra.mxu0 0.0
        %3003 = vmatprep.subr.mxu0 0.0
        %3004 = vmatpush1.msra.mxu0 0.0
        %3005 = vmatprep.subr.mxu0 0.0
        %3006 = vmatpush1.msra.mxu0 0.0
        %3007 = vmatprep.subr.mxu0 0.0
        %3008 = vmatpush1.msra.mxu0 0.0
        %3009 = vmatprep.subr.mxu0 0.0
        %3010 = vmatpush1.msra.mxu0 0.0
        %3011 = vmatprep.subr.mxu0 0.0
        %3012 = vmatpush1.msra.mxu0 0.0
        %3013 = vmatprep.subr.mxu0 0.0
        %3014 = vmatpush1.msra.mxu0 0.0
        %3015 = vmatprep.subr.mxu0 0.0
        %3016 = vmatpush1.msra.mxu0 0.0
        %3017 = vmatprep.subr.mxu0 0.0
        %3018 = vmatpush1.msra.mxu0 0.0
        %3019 = vmatprep.subr.mxu0 0.0
        %3020 = vmatpush1.msra.mxu0 0.0
        %3021 = vmatprep.subr.mxu0 0.0
        %3022 = vmatpush1.msra.mxu0 0.0
        %3023 = vmatprep.subr.mxu0 0.0
        %3024 = vmatpush1.msra.mxu0 0.0
        %3025 = vmatprep.mubr.f32.mxu0 0.0
        %3026 = vmatmul.mubr.f32.gmra.mrb[0].mxu0 %v2938
        %v3027 = vpop.f32.mrb[0].mxu0
        %v3028 = vadd.f32 0.0, %v3027
        %v3029 = vpop.f32.mrb[0].mxu0
        %v3030 = vadd.f32 0.0, %v3029
        %3031 = vmatprep.mubr.f32.mxu0 0.0
        %3032 = vmatmul.mubr.f32.gmra.mrb[0].mxu0 %v2941
        %v3033 = vpop.f32.mrb[0].mxu0
        %v3034 = vadd.f32 0.0, %v3033
        %v3035 = vpop.f32.mrb[0].mxu0
        %v3036 = vadd.f32 0.0, %v3035
        %3037 = vmatprep.mubr.f32.mxu0 0.0
        %3038 = vmatmul.mubr.f32.gmra.mrb[0].mxu0 %v2944
        %v3039 = vpop.f32.mrb[0].mxu0
        %v3040 = vadd.f32 0.0, %v3039
        %v3041 = vpop.f32.mrb[0].mxu0
        %v3042 = vadd.f32 0.0, %v3041
        %3043 = vmatprep.mubr.f32.mxu0 0.0
        %3044 = vmatmul.mubr.f32.gmra.mrb[0].mxu0 %v2947
        %v3045 = vpop.f32.mrb[0].mxu0
        %v3046 = vadd.f32 0.0, %v3045
        %v3047 = vpop.f32.mrb[0].mxu0
        %v3048 = vadd.f32 0.0, %v3047
        %3049 = vmatprep.mubr.f32.mxu0 0.0
        %3050 = vmatmul.mubr.f32.gmra.mrb[0].mxu0 %v2950
        %v3051 = vpop.f32.mrb[0].mxu0
        %v3052 = vadd.f32 0.0, %v3051
        %v3053 = vpop.f32.mrb[0].mxu0
        %v3054 = vadd.f32 0.0, %v3053
        %3055 = vmatprep.mubr.f32.mxu0 0.0
        %3056 = vmatmul.mubr.f32.gmra.mrb[0].mxu0 %v2953
        %v3057 = vpop.f32.mrb[0].mxu0
        %v3058 = vadd.f32 0.0, %v3057
        %v3059 = vpop.f32.mrb[0].mxu0
        %v3060 = vadd.f32 0.0, %v3059
        %3061 = vmatprep.mubr.f32.mxu0 0.0
        %3062 = vmatmul.mubr.f32.gmra.mrb[0].mxu0 %v2956
        %v3063 = vpop.f32.mrb[0].mxu0
        %v3064 = vadd.f32 0.0, %v3063
        %v3065 = vpop.f32.mrb[0].mxu0
        %v3066 = vadd.f32 0.0, %v3065
        %3067 = vmatprep.mubr.f32.mxu0 0.0
        %3068 = vmatmul.mubr.f32.gmra.mrb[0].mxu0 %v2959
        %v3069 = vpop.f32.mrb[0].mxu0
        %v3070 = vadd.f32 0.0, %v3069
        %v3071 = vpop.f32.mrb[0].mxu0
        %v3072 = vadd.f32 0.0, %v3071
        %3073 = vdwg.mxu0
        %3074 = vmatprep.subr.mxu0 0.0
        %3075 = vmatpush1.msra.mxu0 %v2915
        %3076 = vmatprep.subr.mxu0 0.0
        %3077 = vmatpush1.msra.mxu0 %v2918
        %3078 = vmatprep.subr.mxu0 0.0
        %3079 = vmatpush1.msra.mxu0 %v2921
        %3080 = vmatprep.subr.mxu0 0.0
        %3081 = vmatpush1.msra.mxu0 %v2924
        %3082 = vmatprep.subr.mxu0 0.0
        %3083 = vmatpush1.msra.mxu0 %v2927
        %3084 = vmatprep.subr.mxu0 0.0
        %3085 = vmatpush1.msra.mxu0 %v2930
        %3086 = vmatprep.subr.mxu0 0.0
        %3087 = vmatpush1.msra.mxu0 %v2933
        %3088 = vmatprep.subr.mxu0 0.0
        %3089 = vmatpush1.msra.mxu0 %v2936
        %3090 = vmatprep.subr.mxu0 0.0
        %3091 = vmatpush1.msra.mxu0 0.0
        %3092 = vmatprep.subr.mxu0 0.0
        %3093 = vmatpush1.msra.mxu0 0.0
        %3094 = vmatprep.subr.mxu0 0.0
        %3095 = vmatpush1.msra.mxu0 0.0
        %3096 = vmatprep.subr.mxu0 0.0
        %3097 = vmatpush1.msra.mxu0 0.0
        %3098 = vmatprep.subr.mxu0 0.0
        %3099 = vmatpush1.msra.mxu0 0.0
        %3100 = vmatprep.subr.mxu0 0.0
        %3101 = vmatpush1.msra.mxu0 0.0
        %3102 = vmatprep.subr.mxu0 0.0
        %3103 = vmatpush1.msra.mxu0 0.0
        %3104 = vmatprep.subr.mxu0 0.0
        %3105 = vmatpush1.msra.mxu0 0.0
        %3106 = vmatprep.subr.mxu0 0.0
        %3107 = vmatpush1.msra.mxu0 0.0
        %3108 = vmatprep.subr.mxu0 0.0
        %3109 = vmatpush1.msra.mxu0 0.0
        %3110 = vmatprep.subr.mxu0 0.0
        %3111 = vmatpush1.msra.mxu0 0.0
        %3112 = vmatprep.subr.mxu0 0.0
        %3113 = vmatpush1.msra.mxu0 0.0
        %3114 = vmatprep.subr.mxu0 0.0
        %3115 = vmatpush1.msra.mxu0 0.0
        %3116 = vmatprep.subr.mxu0 0.0
        %3117 = vmatpush1.msra.mxu0 0.0
        %3118 = vmatprep.subr.mxu0 0.0
        %3119 = vmatpush1.msra.mxu0 0.0
        %3120 = vmatprep.subr.mxu0 0.0
        %3121 = vmatpush1.msra.mxu0 0.0
        %3122 = vmatprep.subr.mxu0 0.0
        %3123 = vmatpush1.msra.mxu0 0.0
        %3124 = vmatprep.subr.mxu0 0.0
        %3125 = vmatpush1.msra.mxu0 0.0
        %3126 = vmatprep.subr.mxu0 0.0
        %3127 = vmatpush1.msra.mxu0 0.0
        %3128 = vmatprep.subr.mxu0 0.0
        %3129 = vmatpush1.msra.mxu0 0.0
        %3130 = vmatprep.subr.mxu0 0.0
        %3131 = vmatpush1.msra.mxu0 0.0
        %3132 = vmatprep.subr.mxu0 0.0
        %3133 = vmatpush1.msra.mxu0 0.0
        %3134 = vmatprep.subr.mxu0 0.0
        %3135 = vmatpush1.msra.mxu0 0.0
        %3136 = vmatprep.subr.mxu0 0.0
        %3137 = vmatpush1.msra.mxu0 0.0
        %3138 = vmatprep.mubr.f32.mxu0 0.0
        %3139 = vmatmul.mubr.f32.gmra.mrb[0].mxu0 %v2938
        %v3140 = vpop.f32.mrb[0].mxu0
        %v3141 = vadd.f32 0.0, %v3140
        %v3142 = vpop.f32.mrb[0].mxu0
        %3143 = vmatprep.mubr.f32.mxu0 0.0
        %3144 = vmatmul.mubr.f32.gmra.mrb[0].mxu0 %v2941
        %v3145 = vpop.f32.mrb[0].mxu0
        %v3146 = vadd.f32 0.0, %v3145
        %v3147 = vpop.f32.mrb[0].mxu0
        %3148 = vmatprep.mubr.f32.mxu0 0.0
        %3149 = vmatmul.mubr.f32.gmra.mrb[0].mxu0 %v2944
        %v3150 = vpop.f32.mrb[0].mxu0
        %v3151 = vadd.f32 0.0, %v3150
        %v3152 = vpop.f32.mrb[0].mxu0
        %3153 = vmatprep.mubr.f32.mxu0 0.0
        %3154 = vmatmul.mubr.f32.gmra.mrb[0].mxu0 %v2947
        %v3155 = vpop.f32.mrb[0].mxu0
        %v3156 = vadd.f32 0.0, %v3155
        %v3157 = vpop.f32.mrb[0].mxu0
        %3158 = vmatprep.mubr.f32.mxu0 0.0
        %3159 = vmatmul.mubr.f32.gmra.mrb[0].mxu0 %v2950
        %v3160 = vpop.f32.mrb[0].mxu0
        %v3161 = vadd.f32 0.0, %v3160
        %v3162 = vpop.f32.mrb[0].mxu0
        %3163 = vmatprep.mubr.f32.mxu0 0.0
        %3164 = vmatmul.mubr.f32.gmra.mrb[0].mxu0 %v2953
        %v3165 = vpop.f32.mrb[0].mxu0
        %v3166 = vadd.f32 0.0, %v3165
        %v3167 = vpop.f32.mrb[0].mxu0
        %3168 = vmatprep.mubr.f32.mxu0 0.0
        %3169 = vmatmul.mubr.f32.gmra.mrb[0].mxu0 %v2956
        %v3170 = vpop.f32.mrb[0].mxu0
        %v3171 = vadd.f32 0.0, %v3170
        %v3172 = vpop.f32.mrb[0].mxu0
        %3173 = vmatprep.mubr.f32.mxu0 0.0
        %3174 = vmatmul.mubr.f32.gmra.mrb[0].mxu0 %v2959
        %v3175 = vpop.f32.mrb[0].mxu0
        %v3176 = vadd.f32 0.0, %v3175
        %v3177 = vpop.f32.mrb[0].mxu0
        %3178 = vdwg.mxu0
        %v3179 = vadd.f32 %v2455, %v3028
        %v3180 = vadd.f32 %v2456, %v3030
        %v3181 = vadd.f32 %v2457, %v3141
        %v3182 = vadd.f32 %v2458, %v3034
        %v3183 = vadd.f32 %v2459, %v3036
        %v3184 = vadd.f32 %v2460, %v3146
        %v3185 = vadd.f32 %v2461, %v3040
        %v3186 = vadd.f32 %v2462, %v3042
        %v3187 = vadd.f32 %v2463, %v3151
        %v3188 = vadd.f32 %v2464, %v3046
        %v3189 = vadd.f32 %v2465, %v3048
        %v3190 = vadd.f32 %v2466, %v3156
        %v3191 = vadd.f32 %v2467, %v3052
        %v3192 = vadd.f32 %v2468, %v3054
        %v3193 = vadd.f32 %v2469, %v3161
        %v3194 = vadd.f32 %v2470, %v3058
        %v3195 = vadd.f32 %v2471, %v3060
        %v3196 = vadd.f32 %v2472, %v3166
        %v3197 = vadd.f32 %v2473, %v3064
        %v3198 = vadd.f32 %v2474, %v3066
        %v3199 = vadd.f32 %v2475, %v3171
        %v3200 = vadd.f32 %v2476, %v3070
        %v3201 = vadd.f32 %v2477, %v3072
        %v3202 = vadd.f32 %v2478, %v3176
        %v3204 = vsel %vm1802, %v834, 0
        %v3207 = vsel %vm1802, %v840, 0
        %v3210 = vsel %vm1802, %v846, 0
        %v3213 = vsel %vm1802, %v852, 0
        %v3216 = vsel %vm1802, %v858, 0
        %v3219 = vsel %vm1802, %v864, 0
        %v3222 = vsel %vm1802, %v870, 0
        %v3225 = vsel %vm1802, %v876, 0
        %v3228 = vsel %vm1802, %v1284, 0
        %v3231 = vsel %vm1802, %v1290, 0
        %v3234 = vsel %vm1802, %v1296, 0
        %v3237 = vsel %vm1802, %v1302, 0
        %v3240 = vsel %vm1802, %v1308, 0
        %v3243 = vsel %vm1802, %v1314, 0
        %v3246 = vsel %vm1802, %v1320, 0
        %v3249 = vsel %vm1802, %v1326, 0
        %3251 = vmatprep.subr.mxu0 0.0
        %3252 = vmatpush1.xpose.msra.mxu0 %v3228
        %3253 = vmatprep.subr.mxu0 0.0
        %3254 = vmatpush1.xpose.msra.mxu0 %v3231
        %3255 = vmatprep.subr.mxu0 0.0
        %3256 = vmatpush1.xpose.msra.mxu0 %v3234
        %3257 = vmatprep.subr.mxu0 0.0
        %3258 = vmatpush1.xpose.msra.mxu0 %v3237
        %3259 = vmatprep.subr.mxu0 0.0
        %3260 = vmatpush1.xpose.msra.mxu0 %v3240
        %3261 = vmatprep.subr.mxu0 0.0
        %3262 = vmatpush1.xpose.msra.mxu0 %v3243
        %3263 = vmatprep.subr.mxu0 0.0
        %3264 = vmatpush1.xpose.msra.mxu0 %v3246
        %3265 = vmatprep.subr.mxu0 0.0
        %3266 = vmatpush1.xpose.msra.mxu0 %v3249
        %3267 = vmatprep.subr.mxu0 0.0
        %3268 = vmatpush1.xpose.msra.mxu0 0.0
        %3269 = vmatprep.subr.mxu0 0.0
        %3270 = vmatpush1.xpose.msra.mxu0 0.0
        %3271 = vmatprep.subr.mxu0 0.0
        %3272 = vmatpush1.xpose.msra.mxu0 0.0
        %3273 = vmatprep.subr.mxu0 0.0
        %3274 = vmatpush1.xpose.msra.mxu0 0.0
        %3275 = vmatprep.subr.mxu0 0.0
        %3276 = vmatpush1.xpose.msra.mxu0 0.0
        %3277 = vmatprep.subr.mxu0 0.0
        %3278 = vmatpush1.xpose.msra.mxu0 0.0
        %3279 = vmatprep.subr.mxu0 0.0
        %3280 = vmatpush1.xpose.msra.mxu0 0.0
        %3281 = vmatprep.subr.mxu0 0.0
        %3282 = vmatpush1.xpose.msra.mxu0 0.0
        %3283 = vmatprep.subr.mxu0 0.0
        %3284 = vmatpush1.xpose.msra.mxu0 0.0
        %3285 = vmatprep.subr.mxu0 0.0
        %3286 = vmatpush1.xpose.msra.mxu0 0.0
        %3287 = vmatprep.subr.mxu0 0.0
        %3288 = vmatpush1.xpose.msra.mxu0 0.0
        %3289 = vmatprep.subr.mxu0 0.0
        %3290 = vmatpush1.xpose.msra.mxu0 0.0
        %3291 = vmatprep.subr.mxu0 0.0
        %3292 = vmatpush1.xpose.msra.mxu0 0.0
        %3293 = vmatprep.subr.mxu0 0.0
        %3294 = vmatpush1.xpose.msra.mxu0 0.0
        %3295 = vmatprep.subr.mxu0 0.0
        %3296 = vmatpush1.xpose.msra.mxu0 0.0
        %3297 = vmatprep.subr.mxu0 0.0
        %3298 = vmatpush1.xpose.msra.mxu0 0.0
        %3299 = vmatprep.subr.mxu0 0.0
        %3300 = vmatpush1.xpose.msra.mxu0 0.0
        %3301 = vmatprep.subr.mxu0 0.0
        %3302 = vmatpush1.xpose.msra.mxu0 0.0
        %3303 = vmatprep.subr.mxu0 0.0
        %3304 = vmatpush1.xpose.msra.mxu0 0.0
        %3305 = vmatprep.subr.mxu0 0.0
        %3306 = vmatpush1.xpose.msra.mxu0 0.0
        %3307 = vmatprep.subr.mxu0 0.0
        %3308 = vmatpush1.xpose.msra.mxu0 0.0
        %3309 = vmatprep.subr.mxu0 0.0
        %3310 = vmatpush1.xpose.msra.mxu0 0.0
        %3311 = vmatprep.subr.mxu0 0.0
        %3312 = vmatpush1.xpose.msra.mxu0 0.0
        %3313 = vmatprep.subr.mxu0 0.0
        %3314 = vmatpush1.xpose.msra.mxu0 0.0
        %3315 = vmatprep.mubr.f32.mxu0 0.0
        %3316 = vmatmul.mubr.f32.gmra.mrb[0].mxu0 %v3204
        %v3317 = vpop.f32.mrb[0].mxu0
        %v3318 = vadd.f32 0.0, %v3317
        %v3319 = vpop.f32.mrb[0].mxu0
        %3320 = vmatprep.mubr.f32.mxu0 0.0
        %3321 = vmatmul.mubr.f32.gmra.mrb[0].mxu0 %v3207
        %v3322 = vpop.f32.mrb[0].mxu0
        %v3323 = vadd.f32 0.0, %v3322
        %v3324 = vpop.f32.mrb[0].mxu0
        %3325 = vmatprep.mubr.f32.mxu0 0.0
        %3326 = vmatmul.mubr.f32.gmra.mrb[0].mxu0 %v3210
        %v3327 = vpop.f32.mrb[0].mxu0
        %v3328 = vadd.f32 0.0, %v3327
        %v3329 = vpop.f32.mrb[0].mxu0
        %3330 = vmatprep.mubr.f32.mxu0 0.0
        %3331 = vmatmul.mubr.f32.gmra.mrb[0].mxu0 %v3213
        %v3332 = vpop.f32.mrb[0].mxu0
        %v3333 = vadd.f32 0.0, %v3332
        %v3334 = vpop.f32.mrb[0].mxu0
        %3335 = vmatprep.mubr.f32.mxu0 0.0
        %3336 = vmatmul.mubr.f32.gmra.mrb[0].mxu0 %v3216
        %v3337 = vpop.f32.mrb[0].mxu0
        %v3338 = vadd.f32 0.0, %v3337
        %v3339 = vpop.f32.mrb[0].mxu0
        %3340 = vmatprep.mubr.f32.mxu0 0.0
        %3341 = vmatmul.mubr.f32.gmra.mrb[0].mxu0 %v3219
        %v3342 = vpop.f32.mrb[0].mxu0
        %v3343 = vadd.f32 0.0, %v3342
        %v3344 = vpop.f32.mrb[0].mxu0
        %3345 = vmatprep.mubr.f32.mxu0 0.0
        %3346 = vmatmul.mubr.f32.gmra.mrb[0].mxu0 %v3222
        %v3347 = vpop.f32.mrb[0].mxu0
        %v3348 = vadd.f32 0.0, %v3347
        %v3349 = vpop.f32.mrb[0].mxu0
        %3350 = vmatprep.mubr.f32.mxu0 0.0
        %3351 = vmatmul.mubr.f32.gmra.mrb[0].mxu0 %v3225
        %v3352 = vpop.f32.mrb[0].mxu0
        %v3353 = vadd.f32 0.0, %v3352
        %v3354 = vpop.f32.mrb[0].mxu0
        %3355 = vdwg.mxu0
        %v3356 = vmul.f32 %v3318, 0.05103104
        %v3357 = vmul.f32 %v3323, 0.05103104
        %v3358 = vmul.f32 %v3328, 0.05103104
        %v3359 = vmul.f32 %v3333, 0.05103104
        %v3360 = vmul.f32 %v3338, 0.05103104
        %v3361 = vmul.f32 %v3343, 0.05103104
        %v3362 = vmul.f32 %v3348, 0.05103104
        %v3363 = vmul.f32 %v3353, 0.05103104
        %v3364 = vsel %vm1777, %v3356, -inf
        %v3365 = vsel %vm1778, %v3357, -inf
        %v3366 = vsel %vm1779, %v3358, -inf
        %v3367 = vsel %vm1780, %v3359, -inf
        %v3368 = vsel %vm1781, %v3360, -inf
        %v3369 = vsel %vm1782, %v3361, -inf
        %v3370 = vsel %vm1783, %v3362, -inf
        %v3371 = vsel %vm1784, %v3363, -inf
        %v3372 = vsel %vm1802, %v3364, -inf
        %3373 = vmax.xlane.f32.xlu0 %v3372
        %v3374 = vpop.xlane.xlu0 %3373
        %v3375 = vsel %vm1802, %v3365, -inf
        %3376 = vmax.xlane.f32.xlu0 %v3375
        %v3377 = vpop.xlane.xlu0 %3376
        %v3378 = vsel %vm1802, %v3366, -inf
        %3379 = vmax.xlane.f32.xlu0 %v3378
        %v3380 = vpop.xlane.xlu0 %3379
        %v3381 = vsel %vm1802, %v3367, -inf
        %3382 = vmax.xlane.f32.xlu0 %v3381
        %v3383 = vpop.xlane.xlu0 %3382
        %v3384 = vsel %vm1802, %v3368, -inf
        %3385 = vmax.xlane.f32.xlu0 %v3384
        %v3386 = vpop.xlane.xlu0 %3385
        %v3387 = vsel %vm1802, %v3369, -inf
        %3388 = vmax.xlane.f32.xlu0 %v3387
        %v3389 = vpop.xlane.xlu0 %3388
        %v3390 = vsel %vm1802, %v3370, -inf
        %3391 = vmax.xlane.f32.xlu0 %v3390
        %v3392 = vpop.xlane.xlu0 %3391
        %v3393 = vsel %vm1802, %v3371, -inf
        %3394 = vmax.xlane.f32.xlu0 %v3393
        %v3395 = vpop.xlane.xlu0 %3394
        %v3396 = vsub.f32 %v3364, %v3374
        %v3397 = vsub.f32 %v3365, %v3377
        %v3398 = vsub.f32 %v3366, %v3380
        %v3399 = vsub.f32 %v3367, %v3383
        %v3400 = vsub.f32 %v3368, %v3386
        %v3401 = vsub.f32 %v3369, %v3389
        %v3402 = vsub.f32 %v3370, %v3392
        %v3403 = vsub.f32 %v3371, %v3395
        %v3404 = vmul.f32 %v3396, 1.442695
        %v3405 = vpow.pop %v3404
        %v3406 = vmul.f32 %v3397, 1.442695
        %v3407 = vpow.pop %v3406
        %v3408 = vmul.f32 %v3398, 1.442695
        %v3409 = vpow.pop %v3408
        %v3410 = vmul.f32 %v3399, 1.442695
        %v3411 = vpow.pop %v3410
        %v3412 = vmul.f32 %v3400, 1.442695
        %v3413 = vpow.pop %v3412
        %v3414 = vmul.f32 %v3401, 1.442695
        %v3415 = vpow.pop %v3414
        %v3416 = vmul.f32 %v3402, 1.442695
        %v3417 = vpow.pop %v3416
        %v3418 = vmul.f32 %v3403, 1.442695
        %v3419 = vpow.pop %v3418
        %v3420 = vsel %vm1802, %v3405, 0.0
        %3421 = vadd.xlane.f32.xlu0 %v3420
        %v3422 = vpop.xlane.xlu0 %3421
        %v3423 = vsel %vm1802, %v3407, 0.0
        %3424 = vadd.xlane.f32.xlu0 %v3423
        %v3425 = vpop.xlane.xlu0 %3424
        %v3426 = vsel %vm1802, %v3409, 0.0
        %3427 = vadd.xlane.f32.xlu0 %v3426
        %v3428 = vpop.xlane.xlu0 %3427
        %v3429 = vsel %vm1802, %v3411, 0.0
        %3430 = vadd.xlane.f32.xlu0 %v3429
        %v3431 = vpop.xlane.xlu0 %3430
        %v3432 = vsel %vm1802, %v3413, 0.0
        %3433 = vadd.xlane.f32.xlu0 %v3432
        %v3434 = vpop.xlane.xlu0 %3433
        %v3435 = vsel %vm1802, %v3415, 0.0
        %3436 = vadd.xlane.f32.xlu0 %v3435
        %v3437 = vpop.xlane.xlu0 %3436
        %v3438 = vsel %vm1802, %v3417, 0.0
        %3439 = vadd.xlane.f32.xlu0 %v3438
        %v3440 = vpop.xlane.xlu0 %3439
        %v3441 = vsel %vm1802, %v3419, 0.0
        %3442 = vadd.xlane.f32.xlu0 %v3441
        %v3443 = vpop.xlane.xlu0 %3442
        %v3444 = vrcp.pop %v3422
        %v3445 = vrcp.pop %v3425
        %v3446 = vrcp.pop %v3428
        %v3447 = vrcp.pop %v3431
        %v3448 = vrcp.pop %v3434
        %v3449 = vrcp.pop %v3437
        %v3450 = vrcp.pop %v3440
        %v3451 = vrcp.pop %v3443
        %v3452 = vmul.f32 %v3405, %v3444
        %v3453 = vmul.f32 %v3407, %v3445
        %v3454 = vmul.f32 %v3409, %v3446
        %v3455 = vmul.f32 %v3411, %v3447
        %v3456 = vmul.f32 %v3413, %v3448
        %v3457 = vmul.f32 %v3415, %v3449
        %v3458 = vmul.f32 %v3417, %v3450
        %v3459 = vmul.f32 %v3419, %v3451
        %v3461 = vsel %vm1802, %v3452, 0
        %v3464 = vsel %vm1802, %v3453, 0
        %v3467 = vsel %vm1802, %v3454, 0
        %v3470 = vsel %vm1802, %v3455, 0
        %v3473 = vsel %vm1802, %v3456, 0
        %v3476 = vsel %vm1802, %v3457, 0
        %v3479 = vsel %vm1802, %v3458, 0
        %v3482 = vsel %vm1802, %v3459, 0
        %3484 = vmatprep.subr.mxu0 0.0
        %3485 = vmatpush1.msra.mxu0 %v1512
        %3486 = vmatprep.subr.mxu0 0.0
        %3487 = vmatpush1.msra.mxu0 %v1518
        %3488 = vmatprep.subr.mxu0 0.0
        %3489 = vmatpush1.msra.mxu0 %v1524
        %3490 = vmatprep.subr.mxu0 0.0
        %3491 = vmatpush1.msra.mxu0 %v1530
        %3492 = vmatprep.subr.mxu0 0.0
        %3493 = vmatpush1.msra.mxu0 %v1536
        %3494 = vmatprep.subr.mxu0 0.0
        %3495 = vmatpush1.msra.mxu0 %v1542
        %3496 = vmatprep.subr.mxu0 0.0
        %3497 = vmatpush1.msra.mxu0 %v1548
        %3498 = vmatprep.subr.mxu0 0.0
        %3499 = vmatpush1.msra.mxu0 %v1554
        %3500 = vmatprep.subr.mxu0 0.0
        %3501 = vmatpush1.msra.mxu0 0.0
        %3502 = vmatprep.subr.mxu0 0.0
        %3503 = vmatpush1.msra.mxu0 0.0
        %3504 = vmatprep.subr.mxu0 0.0
        %3505 = vmatpush1.msra.mxu0 0.0
        %3506 = vmatprep.subr.mxu0 0.0
        %3507 = vmatpush1.msra.mxu0 0.0
        %3508 = vmatprep.subr.mxu0 0.0
        %3509 = vmatpush1.msra.mxu0 0.0
        %3510 = vmatprep.subr.mxu0 0.0
        %3511 = vmatpush1.msra.mxu0 0.0
        %3512 = vmatprep.subr.mxu0 0.0
        %3513 = vmatpush1.msra.mxu0 0.0
        %3514 = vmatprep.subr.mxu0 0.0
        %3515 = vmatpush1.msra.mxu0 0.0
        %3516 = vmatprep.subr.mxu0 0.0
        %3517 = vmatpush1.msra.mxu0 0.0
        %3518 = vmatprep.subr.mxu0 0.0
        %3519 = vmatpush1.msra.mxu0 0.0
        %3520 = vmatprep.subr.mxu0 0.0
        %3521 = vmatpush1.msra.mxu0 0.0
        %3522 = vmatprep.subr.mxu0 0.0
        %3523 = vmatpush1.msra.mxu0 0.0
        %3524 = vmatprep.subr.mxu0 0.0
        %3525 = vmatpush1.msra.mxu0 0.0
        %3526 = vmatprep.subr.mxu0 0.0
        %3527 = vmatpush1.msra.mxu0 0.0
        %3528 = vmatprep.subr.mxu0 0.0
        %3529 = vmatpush1.msra.mxu0 0.0
        %3530 = vmatprep.subr.mxu0 0.0
        %3531 = vmatpush1.msra.mxu0 0.0
        %3532 = vmatprep.subr.mxu0 0.0
        %3533 = vmatpush1.msra.mxu0 0.0
        %3534 = vmatprep.subr.mxu0 0.0
        %3535 = vmatpush1.msra.mxu0 0.0
        %3536 = vmatprep.subr.mxu0 0.0
        %3537 = vmatpush1.msra.mxu0 0.0
        %3538 = vmatprep.subr.mxu0 0.0
        %3539 = vmatpush1.msra.mxu0 0.0
        %3540 = vmatprep.subr.mxu0 0.0
        %3541 = vmatpush1.msra.mxu0 0.0
        %3542 = vmatprep.subr.mxu0 0.0
        %3543 = vmatpush1.msra.mxu0 0.0
        %3544 = vmatprep.subr.mxu0 0.0
        %3545 = vmatpush1.msra.mxu0 0.0
        %3546 = vmatprep.subr.mxu0 0.0
        %3547 = vmatpush1.msra.mxu0 0.0
        %3548 = vmatprep.mubr.f32.mxu0 0.0
        %3549 = vmatmul.mubr.f32.gmra.mrb[0].mxu0 %v3461
        %v3550 = vpop.f32.mrb[0].mxu0
        %v3551 = vadd.f32 0.0, %v3550
        %v3552 = vpop.f32.mrb[0].mxu0
        %3553 = vmatprep.mubr.f32.mxu0 0.0
        %3554 = vmatmul.mubr.f32.gmra.mrb[0].mxu0 %v3464
        %v3555 = vpop.f32.mrb[0].mxu0
        %v3556 = vadd.f32 0.0, %v3555
        %v3557 = vpop.f32.mrb[0].mxu0
        %3558 = vmatprep.mubr.f32.mxu0 0.0
        %3559 = vmatmul.mubr.f32.gmra.mrb[0].mxu0 %v3467
        %v3560 = vpop.f32.mrb[0].mxu0
        %v3561 = vadd.f32 0.0, %v3560
        %v3562 = vpop.f32.mrb[0].mxu0
        %3563 = vmatprep.mubr.f32.mxu0 0.0
        %3564 = vmatmul.mubr.f32.gmra.mrb[0].mxu0 %v3470
        %v3565 = vpop.f32.mrb[0].mxu0
        %v3566 = vadd.f32 0.0, %v3565
        %v3567 = vpop.f32.mrb[0].mxu0
        %3568 = vmatprep.mubr.f32.mxu0 0.0
        %3569 = vmatmul.mubr.f32.gmra.mrb[0].mxu0 %v3473
        %v3570 = vpop.f32.mrb[0].mxu0
        %v3571 = vadd.f32 0.0, %v3570
        %v3572 = vpop.f32.mrb[0].mxu0
        %3573 = vmatprep.mubr.f32.mxu0 0.0
        %3574 = vmatmul.mubr.f32.gmra.mrb[0].mxu0 %v3476
        %v3575 = vpop.f32.mrb[0].mxu0
        %v3576 = vadd.f32 0.0, %v3575
        %v3577 = vpop.f32.mrb[0].mxu0
        %3578 = vmatprep.mubr.f32.mxu0 0.0
        %3579 = vmatmul.mubr.f32.gmra.mrb[0].mxu0 %v3479
        %v3580 = vpop.f32.mrb[0].mxu0
        %v3581 = vadd.f32 0.0, %v3580
        %v3582 = vpop.f32.mrb[0].mxu0
        %3583 = vmatprep.mubr.f32.mxu0 0.0
        %3584 = vmatmul.mubr.f32.gmra.mrb[0].mxu0 %v3482
        %v3585 = vpop.f32.mrb[0].mxu0
        %v3586 = vadd.f32 0.0, %v3585
        %v3587 = vpop.f32.mrb[0].mxu0
        %3588 = vdwg.mxu0
        %v3589 = vld [vmem:[%s2 + $0x180] sm:$0xff]
        %v3590 = vld [vmem:[%s2 + $0x188] sm:$0xff]
        %v3591 = vld [vmem:[%s2 + $0x190] sm:$0xff]
        %v3592 = vld [vmem:[%s2 + $0x198] sm:$0xff]
        %v3593 = vld [vmem:[%s2 + $0x1a0] sm:$0xff]
        %v3594 = vld [vmem:[%s2 + $0x1a8] sm:$0xff]
        %v3595 = vld [vmem:[%s2 + $0x1b0] sm:$0xff]
        %v3596 = vld [vmem:[%s2 + $0x1b8] sm:$0xff]
        %v3597 = vld [vmem:[%s2 + $0x1c0] sm:$0xff]
        %v3598 = vld [vmem:[%s2 + $0x1c8] sm:$0xff]
        %v3599 = vld [vmem:[%s2 + $0x1d0] sm:$0xff]
        %v3600 = vld [vmem:[%s2 + $0x1d8] sm:$0xff]
        %v3601 = vld [vmem:[%s2 + $0x1e0] sm:$0xff]
        %v3602 = vld [vmem:[%s2 + $0x1e8] sm:$0xff]
        %v3603 = vld [vmem:[%s2 + $0x1f0] sm:$0xff]
        %v3604 = vld [vmem:[%s2 + $0x1f8] sm:$0xff]
        %v3605 = vld [vmem:[%s2 + $0x200] sm:$0xff]
        %v3606 = vld [vmem:[%s2 + $0x208] sm:$0xff]
        %v3607 = vld [vmem:[%s2 + $0x210] sm:$0xff]
        %v3608 = vld [vmem:[%s2 + $0x218] sm:$0xff]
        %v3609 = vld [vmem:[%s2 + $0x220] sm:$0xff]
        %v3610 = vld [vmem:[%s2 + $0x228] sm:$0xff]
        %v3611 = vld [vmem:[%s2 + $0x230] sm:$0xff]
        %v3612 = vld [vmem:[%s2 + $0x238] sm:$0xff]
        %v3614 = vsel %vm1802, %v3551, 0
        %v3617 = vsel %vm1802, %v3556, 0
        %v3620 = vsel %vm1802, %v3561, 0
        %v3623 = vsel %vm1802, %v3566, 0
        %v3626 = vsel %vm1802, %v3571, 0
        %v3629 = vsel %vm1802, %v3576, 0
        %v3632 = vsel %vm1802, %v3581, 0
        %v3635 = vsel %vm1802, %v3586, 0
        %3637 = vmatprep.subr.mxu0 %v3590
        %3638 = vmatpush1.msra.mxu0 %v3589
        %3639 = vmatprep.subr.mxu0 %v3593
        %3640 = vmatpush1.msra.mxu0 %v3592
        %3641 = vmatprep.subr.mxu0 %v3596
        %3642 = vmatpush1.msra.mxu0 %v3595
        %3643 = vmatprep.subr.mxu0 %v3599
        %3644 = vmatpush1.msra.mxu0 %v3598
        %3645 = vmatprep.subr.mxu0 %v3602
        %3646 = vmatpush1.msra.mxu0 %v3601
        %3647 = vmatprep.subr.mxu0 %v3605
        %3648 = vmatpush1.msra.mxu0 %v3604
        %3649 = vmatprep.subr.mxu0 %v3608
        %3650 = vmatpush1.msra.mxu0 %v3607
        %3651 = vmatprep.subr.mxu0 %v3611
        %3652 = vmatpush1.msra.mxu0 %v3610
        %3653 = vmatprep.subr.mxu0 0.0
        %3654 = vmatpush1.msra.mxu0 0.0
        %3655 = vmatprep.subr.mxu0 0.0
        %3656 = vmatpush1.msra.mxu0 0.0
        %3657 = vmatprep.subr.mxu0 0.0
        %3658 = vmatpush1.msra.mxu0 0.0
        %3659 = vmatprep.subr.mxu0 0.0
        %3660 = vmatpush1.msra.mxu0 0.0
        %3661 = vmatprep.subr.mxu0 0.0
        %3662 = vmatpush1.msra.mxu0 0.0
        %3663 = vmatprep.subr.mxu0 0.0
        %3664 = vmatpush1.msra.mxu0 0.0
        %3665 = vmatprep.subr.mxu0 0.0
        %3666 = vmatpush1.msra.mxu0 0.0
        %3667 = vmatprep.subr.mxu0 0.0
        %3668 = vmatpush1.msra.mxu0 0.0
        %3669 = vmatprep.subr.mxu0 0.0
        %3670 = vmatpush1.msra.mxu0 0.0
        %3671 = vmatprep.subr.mxu0 0.0
        %3672 = vmatpush1.msra.mxu0 0.0
        %3673 = vmatprep.subr.mxu0 0.0
        %3674 = vmatpush1.msra.mxu0 0.0
        %3675 = vmatprep.subr.mxu0 0.0
        %3676 = vmatpush1.msra.mxu0 0.0
        %3677 = vmatprep.subr.mxu0 0.0
        %3678 = vmatpush1.msra.mxu0 0.0
        %3679 = vmatprep.subr.mxu0 0.0
        %3680 = vmatpush1.msra.mxu0 0.0
        %3681 = vmatprep.subr.mxu0 0.0
        %3682 = vmatpush1.msra.mxu0 0.0
        %3683 = vmatprep.subr.mxu0 0.0
        %3684 = vmatpush1.msra.mxu0 0.0
        %3685 = vmatprep.subr.mxu0 0.0
        %3686 = vmatpush1.msra.mxu0 0.0
        %3687 = vmatprep.subr.mxu0 0.0
        %3688 = vmatpush1.msra.mxu0 0.0
        %3689 = vmatprep.subr.mxu0 0.0
        %3690 = vmatpush1.msra.mxu0 0.0
        %3691 = vmatprep.subr.mxu0 0.0
        %3692 = vmatpush1.msra.mxu0 0.0
        %3693 = vmatprep.subr.mxu0 0.0
        %3694 = vmatpush1.msra.mxu0 0.0
        %3695 = vmatprep.subr.mxu0 0.0
        %3696 = vmatpush1.msra.mxu0 0.0
        %3697 = vmatprep.subr.mxu0 0.0
        %3698 = vmatpush1.msra.mxu0 0.0
        %3699 = vmatprep.subr.mxu0 0.0
        %3700 = vmatpush1.msra.mxu0 0.0
        %3701 = vmatprep.mubr.f32.mxu0 0.0
        %3702 = vmatmul.mubr.f32.gmra.mrb[0].mxu0 %v3614
        %v3703 = vpop.f32.mrb[0].mxu0
        %v3704 = vadd.f32 0.0, %v3703
        %v3705 = vpop.f32.mrb[0].mxu0
        %v3706 = vadd.f32 0.0, %v3705
        %3707 = vmatprep.mubr.f32.mxu0 0.0
        %3708 = vmatmul.mubr.f32.gmra.mrb[0].mxu0 %v3617
        %v3709 = vpop.f32.mrb[0].mxu0
        %v3710 = vadd.f32 0.0, %v3709
        %v3711 = vpop.f32.mrb[0].mxu0
        %v3712 = vadd.f32 0.0, %v3711
        %3713 = vmatprep.mubr.f32.mxu0 0.0
        %3714 = vmatmul.mubr.f32.gmra.mrb[0].mxu0 %v3620
        %v3715 = vpop.f32.mrb[0].mxu0
        %v3716 = vadd.f32 0.0, %v3715
        %v3717 = vpop.f32.mrb[0].mxu0
        %v3718 = vadd.f32 0.0, %v3717
        %3719 = vmatprep.mubr.f32.mxu0 0.0
        %3720 = vmatmul.mubr.f32.gmra.mrb[0].mxu0 %v3623
        %v3721 = vpop.f32.mrb[0].mxu0
        %v3722 = vadd.f32 0.0, %v3721
        %v3723 = vpop.f32.mrb[0].mxu0
        %v3724 = vadd.f32 0.0, %v3723
        %3725 = vmatprep.mubr.f32.mxu0 0.0
        %3726 = vmatmul.mubr.f32.gmra.mrb[0].mxu0 %v3626
        %v3727 = vpop.f32.mrb[0].mxu0
        %v3728 = vadd.f32 0.0, %v3727
        %v3729 = vpop.f32.mrb[0].mxu0
        %v3730 = vadd.f32 0.0, %v3729
        %3731 = vmatprep.mubr.f32.mxu0 0.0
        %3732 = vmatmul.mubr.f32.gmra.mrb[0].mxu0 %v3629
        %v3733 = vpop.f32.mrb[0].mxu0
        %v3734 = vadd.f32 0.0, %v3733
        %v3735 = vpop.f32.mrb[0].mxu0
        %v3736 = vadd.f32 0.0, %v3735
        %3737 = vmatprep.mubr.f32.mxu0 0.0
        %3738 = vmatmul.mubr.f32.gmra.mrb[0].mxu0 %v3632
        %v3739 = vpop.f32.mrb[0].mxu0
        %v3740 = vadd.f32 0.0, %v3739
        %v3741 = vpop.f32.mrb[0].mxu0
        %v3742 = vadd.f32 0.0, %v3741
        %3743 = vmatprep.mubr.f32.mxu0 0.0
        %3744 = vmatmul.mubr.f32.gmra.mrb[0].mxu0 %v3635
        %v3745 = vpop.f32.mrb[0].mxu0
        %v3746 = vadd.f32 0.0, %v3745
        %v3747 = vpop.f32.mrb[0].mxu0
        %v3748 = vadd.f32 0.0, %v3747
        %3749 = vdwg.mxu0
        %3750 = vmatprep.subr.mxu0 0.0
        %3751 = vmatpush1.msra.mxu0 %v3591
        %3752 = vmatprep.subr.mxu0 0.0
        %3753 = vmatpush1.msra.mxu0 %v3594
        %3754 = vmatprep.subr.mxu0 0.0
        %3755 = vmatpush1.msra.mxu0 %v3597
        %3756 = vmatprep.subr.mxu0 0.0
        %3757 = vmatpush1.msra.mxu0 %v3600
        %3758 = vmatprep.subr.mxu0 0.0
        %3759 = vmatpush1.msra.mxu0 %v3603
        %3760 = vmatprep.subr.mxu0 0.0
        %3761 = vmatpush1.msra.mxu0 %v3606
        %3762 = vmatprep.subr.mxu0 0.0
        %3763 = vmatpush1.msra.mxu0 %v3609
        %3764 = vmatprep.subr.mxu0 0.0
        %3765 = vmatpush1.msra.mxu0 %v3612
        %3766 = vmatprep.subr.mxu0 0.0
        %3767 = vmatpush1.msra.mxu0 0.0
        %3768 = vmatprep.subr.mxu0 0.0
        %3769 = vmatpush1.msra.mxu0 0.0
        %3770 = vmatprep.subr.mxu0 0.0
        %3771 = vmatpush1.msra.mxu0 0.0
        %3772 = vmatprep.subr.mxu0 0.0
        %3773 = vmatpush1.msra.mxu0 0.0
        %3774 = vmatprep.subr.mxu0 0.0
        %3775 = vmatpush1.msra.mxu0 0.0
        %3776 = vmatprep.subr.mxu0 0.0
        %3777 = vmatpush1.msra.mxu0 0.0
        %3778 = vmatprep.subr.mxu0 0.0
        %3779 = vmatpush1.msra.mxu0 0.0
        %3780 = vmatprep.subr.mxu0 0.0
        %3781 = vmatpush1.msra.mxu0 0.0
        %3782 = vmatprep.subr.mxu0 0.0
        %3783 = vmatpush1.msra.mxu0 0.0
        %3784 = vmatprep.subr.mxu0 0.0
        %3785 = vmatpush1.msra.mxu0 0.0
        %3786 = vmatprep.subr.mxu0 0.0
        %3787 = vmatpush1.msra.mxu0 0.0
        %3788 = vmatprep.subr.mxu0 0.0
        %3789 = vmatpush1.msra.mxu0 0.0
        %3790 = vmatprep.subr.mxu0 0.0
        %3791 = vmatpush1.msra.mxu0 0.0
        %3792 = vmatprep.subr.mxu0 0.0
        %3793 = vmatpush1.msra.mxu0 0.0
        %3794 = vmatprep.subr.mxu0 0.0
        %3795 = vmatpush1.msra.mxu0 0.0
        %3796 = vmatprep.subr.mxu0 0.0
        %3797 = vmatpush1.msra.mxu0 0.0
        %3798 = vmatprep.subr.mxu0 0.0
        %3799 = vmatpush1.msra.mxu0 0.0
        %3800 = vmatprep.subr.mxu0 0.0
        %3801 = vmatpush1.msra.mxu0 0.0
        %3802 = vmatprep.subr.mxu0 0.0
        %3803 = vmatpush1.msra.mxu0 0.0
        %3804 = vmatprep.subr.mxu0 0.0
        %3805 = vmatpush1.msra.mxu0 0.0
        %3806 = vmatprep.subr.mxu0 0.0
        %3807 = vmatpush1.msra.mxu0 0.0
        %3808 = vmatprep.subr.mxu0 0.0
        %3809 = vmatpush1.msra.mxu0 0.0
        %3810 = vmatprep.subr.mxu0 0.0
        %3811 = vmatpush1.msra.mxu0 0.0
        %3812 = vmatprep.subr.mxu0 0.0
        %3813 = vmatpush1.msra.mxu0 0.0
        %3814 = vmatprep.mubr.f32.mxu0 0.0
        %3815 = vmatmul.mubr.f32.gmra.mrb[0].mxu0 %v3614
        %v3816 = vpop.f32.mrb[0].mxu0
        %v3817 = vadd.f32 0.0, %v3816
        %v3818 = vpop.f32.mrb[0].mxu0
        %3819 = vmatprep.mubr.f32.mxu0 0.0
        %3820 = vmatmul.mubr.f32.gmra.mrb[0].mxu0 %v3617
        %v3821 = vpop.f32.mrb[0].mxu0
        %v3822 = vadd.f32 0.0, %v3821
        %v3823 = vpop.f32.mrb[0].mxu0
        %3824 = vmatprep.mubr.f32.mxu0 0.0
        %3825 = vmatmul.mubr.f32.gmra.mrb[0].mxu0 %v3620
        %v3826 = vpop.f32.mrb[0].mxu0
        %v3827 = vadd.f32 0.0, %v3826
        %v3828 = vpop.f32.mrb[0].mxu0
        %3829 = vmatprep.mubr.f32.mxu0 0.0
        %3830 = vmatmul.mubr.f32.gmra.mrb[0].mxu0 %v3623
        %v3831 = vpop.f32.mrb[0].mxu0
        %v3832 = vadd.f32 0.0, %v3831
        %v3833 = vpop.f32.mrb[0].mxu0
        %3834 = vmatprep.mubr.f32.mxu0 0.0
        %3835 = vmatmul.mubr.f32.gmra.mrb[0].mxu0 %v3626
        %v3836 = vpop.f32.mrb[0].mxu0
        %v3837 = vadd.f32 0.0, %v3836
        %v3838 = vpop.f32.mrb[0].mxu0
        %3839 = vmatprep.mubr.f32.mxu0 0.0
        %3840 = vmatmul.mubr.f32.gmra.mrb[0].mxu0 %v3629
        %v3841 = vpop.f32.mrb[0].mxu0
        %v3842 = vadd.f32 0.0, %v3841
        %v3843 = vpop.f32.mrb[0].mxu0
        %3844 = vmatprep.mubr.f32.mxu0 0.0
        %3845 = vmatmul.mubr.f32.gmra.mrb[0].mxu0 %v3632
        %v3846 = vpop.f32.mrb[0].mxu0
        %v3847 = vadd.f32 0.0, %v3846
        %v3848 = vpop.f32.mrb[0].mxu0
        %3849 = vmatprep.mubr.f32.mxu0 0.0
        %3850 = vmatmul.mubr.f32.gmra.mrb[0].mxu0 %v3635
        %v3851 = vpop.f32.mrb[0].mxu0
        %v3852 = vadd.f32 0.0, %v3851
        %v3853 = vpop.f32.mrb[0].mxu0
        %3854 = vdwg.mxu0
        %v3855 = vadd.f32 %v3179, %v3704
        %v3856 = vadd.f32 %v3180, %v3706
        %v3857 = vadd.f32 %v3181, %v3817
        %v3858 = vadd.f32 %v3182, %v3710
        %v3859 = vadd.f32 %v3183, %v3712
        %v3860 = vadd.f32 %v3184, %v3822
        %v3861 = vadd.f32 %v3185, %v3716
        %v3862 = vadd.f32 %v3186, %v3718
        %v3863 = vadd.f32 %v3187, %v3827
        %v3864 = vadd.f32 %v3188, %v3722
        %v3865 = vadd.f32 %v3189, %v3724
        %v3866 = vadd.f32 %v3190, %v3832
        %v3867 = vadd.f32 %v3191, %v3728
        %v3868 = vadd.f32 %v3192, %v3730
        %v3869 = vadd.f32 %v3193, %v3837
        %v3870 = vadd.f32 %v3194, %v3734
        %v3871 = vadd.f32 %v3195, %v3736
        %v3872 = vadd.f32 %v3196, %v3842
        %v3873 = vadd.f32 %v3197, %v3740
        %v3874 = vadd.f32 %v3198, %v3742
        %v3875 = vadd.f32 %v3199, %v3847
        %v3876 = vadd.f32 %v3200, %v3746
        %v3877 = vadd.f32 %v3201, %v3748
        %v3878 = vadd.f32 %v3202, %v3852
        %3879 = vrot.lane.b32.xlu0 %v834, 64
        %v3880 = vpop.permute.xlu0 %3879
        %3881 = vrot.lane.b32.xlu0 %v840, 64
        %v3882 = vpop.permute.xlu0 %3881
        %3883 = vrot.lane.b32.xlu0 %v846, 64
        %v3884 = vpop.permute.xlu0 %3883
        %3885 = vrot.lane.b32.xlu0 %v852, 64
        %v3886 = vpop.permute.xlu0 %3885
        %3887 = vrot.lane.b32.xlu0 %v858, 64
        %v3888 = vpop.permute.xlu0 %3887
        %3889 = vrot.lane.b32.xlu0 %v864, 64
        %v3890 = vpop.permute.xlu0 %3889
        %3891 = vrot.lane.b32.xlu0 %v870, 64
        %v3892 = vpop.permute.xlu0 %3891
        %3893 = vrot.lane.b32.xlu0 %v876, 64
        %v3894 = vpop.permute.xlu0 %3893
        %3895 = vrot.lane.b32.xlu0 %v1284, 64
        %v3896 = vpop.permute.xlu0 %3895
        %3897 = vrot.lane.b32.xlu0 %v1290, 64
        %v3898 = vpop.permute.xlu0 %3897
        %3899 = vrot.lane.b32.xlu0 %v1296, 64
        %v3900 = vpop.permute.xlu0 %3899
        %3901 = vrot.lane.b32.xlu0 %v1302, 64
        %v3902 = vpop.permute.xlu0 %3901
        %3903 = vrot.lane.b32.xlu0 %v1308, 64
        %v3904 = vpop.permute.xlu0 %3903
        %3905 = vrot.lane.b32.xlu0 %v1314, 64
        %v3906 = vpop.permute.xlu0 %3905
        %3907 = vrot.lane.b32.xlu0 %v1320, 64
        %v3908 = vpop.permute.xlu0 %3907
        %3909 = vrot.lane.b32.xlu0 %v1326, 64
        %v3910 = vpop.permute.xlu0 %3909
        %v3911 = vsel %vm1802, %v3880, 0
        %v3913 = vsel %vm1802, %v3882, 0
        %v3915 = vsel %vm1802, %v3884, 0
        %v3917 = vsel %vm1802, %v3886, 0
        %v3919 = vsel %vm1802, %v3888, 0
        %v3921 = vsel %vm1802, %v3890, 0
        %v3923 = vsel %vm1802, %v3892, 0
        %v3925 = vsel %vm1802, %v3894, 0
        %v3927 = vsel %vm1802, %v3896, 0
        %v3929 = vsel %vm1802, %v3898, 0
        %v3931 = vsel %vm1802, %v3900, 0
        %v3933 = vsel %vm1802, %v3902, 0
        %v3935 = vsel %vm1802, %v3904, 0
        %v3937 = vsel %vm1802, %v3906, 0
        %v3939 = vsel %vm1802, %v3908, 0
        %v3941 = vsel %vm1802, %v3910, 0
        %3943 = vmatprep.subr.mxu0 0.0
        %3944 = vmatpush1.xpose.msra.mxu0 %v3927
        %3945 = vmatprep.subr.mxu0 0.0
        %3946 = vmatpush1.xpose.msra.mxu0 %v3929
        %3947 = vmatprep.subr.mxu0 0.0
        %3948 = vmatpush1.xpose.msra.mxu0 %v3931
        %3949 = vmatprep.subr.mxu0 0.0
        %3950 = vmatpush1.xpose.msra.mxu0 %v3933
        %3951 = vmatprep.subr.mxu0 0.0
        %3952 = vmatpush1.xpose.msra.mxu0 %v3935
        %3953 = vmatprep.subr.mxu0 0.0
        %3954 = vmatpush1.xpose.msra.mxu0 %v3937
        %3955 = vmatprep.subr.mxu0 0.0
        %3956 = vmatpush1.xpose.msra.mxu0 %v3939
        %3957 = vmatprep.subr.mxu0 0.0
        %3958 = vmatpush1.xpose.msra.mxu0 %v3941
        %3959 = vmatprep.subr.mxu0 0.0
        %3960 = vmatpush1.xpose.msra.mxu0 0.0
        %3961 = vmatprep.subr.mxu0 0.0
        %3962 = vmatpush1.xpose.msra.mxu0 0.0
        %3963 = vmatprep.subr.mxu0 0.0
        %3964 = vmatpush1.xpose.msra.mxu0 0.0
        %3965 = vmatprep.subr.mxu0 0.0
        %3966 = vmatpush1.xpose.msra.mxu0 0.0
        %3967 = vmatprep.subr.mxu0 0.0
        %3968 = vmatpush1.xpose.msra.mxu0 0.0
        %3969 = vmatprep.subr.mxu0 0.0
        %3970 = vmatpush1.xpose.msra.mxu0 0.0
        %3971 = vmatprep.subr.mxu0 0.0
        %3972 = vmatpush1.xpose.msra.mxu0 0.0
        %3973 = vmatprep.subr.mxu0 0.0
        %3974 = vmatpush1.xpose.msra.mxu0 0.0
        %3975 = vmatprep.subr.mxu0 0.0
        %3976 = vmatpush1.xpose.msra.mxu0 0.0
        %3977 = vmatprep.subr.mxu0 0.0
        %3978 = vmatpush1.xpose.msra.mxu0 0.0
        %3979 = vmatprep.subr.mxu0 0.0
        %3980 = vmatpush1.xpose.msra.mxu0 0.0
        %3981 = vmatprep.subr.mxu0 0.0
        %3982 = vmatpush1.xpose.msra.mxu0 0.0
        %3983 = vmatprep.subr.mxu0 0.0
        %3984 = vmatpush1.xpose.msra.mxu0 0.0
        %3985 = vmatprep.subr.mxu0 0.0
        %3986 = vmatpush1.xpose.msra.mxu0 0.0
        %3987 = vmatprep.subr.mxu0 0.0
        %3988 = vmatpush1.xpose.msra.mxu0 0.0
        %3989 = vmatprep.subr.mxu0 0.0
        %3990 = vmatpush1.xpose.msra.mxu0 0.0
        %3991 = vmatprep.subr.mxu0 0.0
        %3992 = vmatpush1.xpose.msra.mxu0 0.0
        %3993 = vmatprep.subr.mxu0 0.0
        %3994 = vmatpush1.xpose.msra.mxu0 0.0
        %3995 = vmatprep.subr.mxu0 0.0
        %3996 = vmatpush1.xpose.msra.mxu0 0.0
        %3997 = vmatprep.subr.mxu0 0.0
        %3998 = vmatpush1.xpose.msra.mxu0 0.0
        %3999 = vmatprep.subr.mxu0 0.0
        %4000 = vmatpush1.xpose.msra.mxu0 0.0
        %4001 = vmatprep.subr.mxu0 0.0
        %4002 = vmatpush1.xpose.msra.mxu0 0.0
        %4003 = vmatprep.subr.mxu0 0.0
        %4004 = vmatpush1.xpose.msra.mxu0 0.0
        %4005 = vmatprep.subr.mxu0 0.0
        %4006 = vmatpush1.xpose.msra.mxu0 0.0
        %4007 = vmatprep.mubr.f32.mxu0 0.0
        %4008 = vmatmul.mubr.f32.gmra.mrb[0].mxu0 %v3911
        %v4009 = vpop.f32.mrb[0].mxu0
        %v4010 = vadd.f32 0.0, %v4009
        %v4011 = vpop.f32.mrb[0].mxu0
        %4012 = vmatprep.mubr.f32.mxu0 0.0
        %4013 = vmatmul.mubr.f32.gmra.mrb[0].mxu0 %v3913
        %v4014 = vpop.f32.mrb[0].mxu0
        %v4015 = vadd.f32 0.0, %v4014
        %v4016 = vpop.f32.mrb[0].mxu0
        %4017 = vmatprep.mubr.f32.mxu0 0.0
        %4018 = vmatmul.mubr.f32.gmra.mrb[0].mxu0 %v3915
        %v4019 = vpop.f32.mrb[0].mxu0
        %v4020 = vadd.f32 0.0, %v4019
        %v4021 = vpop.f32.mrb[0].mxu0
        %4022 = vmatprep.mubr.f32.mxu0 0.0
        %4023 = vmatmul.mubr.f32.gmra.mrb[0].mxu0 %v3917
        %v4024 = vpop.f32.mrb[0].mxu0
        %v4025 = vadd.f32 0.0, %v4024
        %v4026 = vpop.f32.mrb[0].mxu0
        %4027 = vmatprep.mubr.f32.mxu0 0.0
        %4028 = vmatmul.mubr.f32.gmra.mrb[0].mxu0 %v3919
        %v4029 = vpop.f32.mrb[0].mxu0
        %v4030 = vadd.f32 0.0, %v4029
        %v4031 = vpop.f32.mrb[0].mxu0
        %4032 = vmatprep.mubr.f32.mxu0 0.0
        %4033 = vmatmul.mubr.f32.gmra.mrb[0].mxu0 %v3921
        %v4034 = vpop.f32.mrb[0].mxu0
        %v4035 = vadd.f32 0.0, %v4034
        %v4036 = vpop.f32.mrb[0].mxu0
        %4037 = vmatprep.mubr.f32.mxu0 0.0
        %4038 = vmatmul.mubr.f32.gmra.mrb[0].mxu0 %v3923
        %v4039 = vpop.f32.mrb[0].mxu0
        %v4040 = vadd.f32 0.0, %v4039
        %v4041 = vpop.f32.mrb[0].mxu0
        %4042 = vmatprep.mubr.f32.mxu0 0.0
        %4043 = vmatmul.mubr.f32.gmra.mrb[0].mxu0 %v3925
        %v4044 = vpop.f32.mrb[0].mxu0
        %v4045 = vadd.f32 0.0, %v4044
        %v4046 = vpop.f32.mrb[0].mxu0
        %4047 = vdwg.mxu0
        %v4048 = vmul.f32 %v4010, 0.05103104
        %v4049 = vmul.f32 %v4015, 0.05103104
        %v4050 = vmul.f32 %v4020, 0.05103104
        %v4051 = vmul.f32 %v4025, 0.05103104
        %v4052 = vmul.f32 %v4030, 0.05103104
        %v4053 = vmul.f32 %v4035, 0.05103104
        %v4054 = vmul.f32 %v4040, 0.05103104
        %v4055 = vmul.f32 %v4045, 0.05103104
        %v4056 = vsel %vm1777, %v4048, -inf
        %v4057 = vsel %vm1778, %v4049, -inf
        %v4058 = vsel %vm1779, %v4050, -inf
        %v4059 = vsel %vm1780, %v4051, -inf
        %v4060 = vsel %vm1781, %v4052, -inf
        %v4061 = vsel %vm1782, %v4053, -inf
        %v4062 = vsel %vm1783, %v4054, -inf
        %v4063 = vsel %vm1784, %v4055, -inf
        %v4064 = vsel %vm1802, %v4056, -inf
        %4065 = vmax.xlane.f32.xlu0 %v4064
        %v4066 = vpop.xlane.xlu0 %4065
        %v4067 = vsel %vm1802, %v4057, -inf
        %4068 = vmax.xlane.f32.xlu0 %v4067
        %v4069 = vpop.xlane.xlu0 %4068
        %v4070 = vsel %vm1802, %v4058, -inf
        %4071 = vmax.xlane.f32.xlu0 %v4070
        %v4072 = vpop.xlane.xlu0 %4071
        %v4073 = vsel %vm1802, %v4059, -inf
        %4074 = vmax.xlane.f32.xlu0 %v4073
        %v4075 = vpop.xlane.xlu0 %4074
        %v4076 = vsel %vm1802, %v4060, -inf
        %4077 = vmax.xlane.f32.xlu0 %v4076
        %v4078 = vpop.xlane.xlu0 %4077
        %v4079 = vsel %vm1802, %v4061, -inf
        %4080 = vmax.xlane.f32.xlu0 %v4079
        %v4081 = vpop.xlane.xlu0 %4080
        %v4082 = vsel %vm1802, %v4062, -inf
        %4083 = vmax.xlane.f32.xlu0 %v4082
        %v4084 = vpop.xlane.xlu0 %4083
        %v4085 = vsel %vm1802, %v4063, -inf
        %4086 = vmax.xlane.f32.xlu0 %v4085
        %v4087 = vpop.xlane.xlu0 %4086
        %v4088 = vsub.f32 %v4056, %v4066
        %v4089 = vsub.f32 %v4057, %v4069
        %v4090 = vsub.f32 %v4058, %v4072
        %v4091 = vsub.f32 %v4059, %v4075
        %v4092 = vsub.f32 %v4060, %v4078
        %v4093 = vsub.f32 %v4061, %v4081
        %v4094 = vsub.f32 %v4062, %v4084
        %v4095 = vsub.f32 %v4063, %v4087
        %v4096 = vmul.f32 %v4088, 1.442695
        %v4097 = vpow.pop %v4096
        %v4098 = vmul.f32 %v4089, 1.442695
        %v4099 = vpow.pop %v4098
        %v4100 = vmul.f32 %v4090, 1.442695
        %v4101 = vpow.pop %v4100
        %v4102 = vmul.f32 %v4091, 1.442695
        %v4103 = vpow.pop %v4102
        %v4104 = vmul.f32 %v4092, 1.442695
        %v4105 = vpow.pop %v4104
        %v4106 = vmul.f32 %v4093, 1.442695
        %v4107 = vpow.pop %v4106
        %v4108 = vmul.f32 %v4094, 1.442695
        %v4109 = vpow.pop %v4108
        %v4110 = vmul.f32 %v4095, 1.442695
        %v4111 = vpow.pop %v4110
        %v4112 = vsel %vm1802, %v4097, 0.0
        %4113 = vadd.xlane.f32.xlu0 %v4112
        %v4114 = vpop.xlane.xlu0 %4113
        %v4115 = vsel %vm1802, %v4099, 0.0
        %4116 = vadd.xlane.f32.xlu0 %v4115
        %v4117 = vpop.xlane.xlu0 %4116
        %v4118 = vsel %vm1802, %v4101, 0.0
        %4119 = vadd.xlane.f32.xlu0 %v4118
        %v4120 = vpop.xlane.xlu0 %4119
        %v4121 = vsel %vm1802, %v4103, 0.0
        %4122 = vadd.xlane.f32.xlu0 %v4121
        %v4123 = vpop.xlane.xlu0 %4122
        %v4124 = vsel %vm1802, %v4105, 0.0
        %4125 = vadd.xlane.f32.xlu0 %v4124
        %v4126 = vpop.xlane.xlu0 %4125
        %v4127 = vsel %vm1802, %v4107, 0.0
        %4128 = vadd.xlane.f32.xlu0 %v4127
        %v4129 = vpop.xlane.xlu0 %4128
        %v4130 = vsel %vm1802, %v4109, 0.0
        %4131 = vadd.xlane.f32.xlu0 %v4130
        %v4132 = vpop.xlane.xlu0 %4131
        %v4133 = vsel %vm1802, %v4111, 0.0
        %4134 = vadd.xlane.f32.xlu0 %v4133
        %v4135 = vpop.xlane.xlu0 %4134
        %v4136 = vrcp.pop %v4114
        %v4137 = vrcp.pop %v4117
        %v4138 = vrcp.pop %v4120
        %v4139 = vrcp.pop %v4123
        %v4140 = vrcp.pop %v4126
        %v4141 = vrcp.pop %v4129
        %v4142 = vrcp.pop %v4132
        %v4143 = vrcp.pop %v4135
        %v4144 = vmul.f32 %v4097, %v4136
        %v4145 = vmul.f32 %v4099, %v4137
        %v4146 = vmul.f32 %v4101, %v4138
        %v4147 = vmul.f32 %v4103, %v4139
        %v4148 = vmul.f32 %v4105, %v4140
        %v4149 = vmul.f32 %v4107, %v4141
        %v4150 = vmul.f32 %v4109, %v4142
        %v4151 = vmul.f32 %v4111, %v4143
        %4160 = vrot.lane.b32.xlu0 %v1512, 64
        %v4161 = vpop.permute.xlu0 %4160
        %4162 = vrot.lane.b32.xlu0 %v1518, 64
        %v4163 = vpop.permute.xlu0 %4162
        %4164 = vrot.lane.b32.xlu0 %v1524, 64
        %v4165 = vpop.permute.xlu0 %4164
        %4166 = vrot.lane.b32.xlu0 %v1530, 64
        %v4167 = vpop.permute.xlu0 %4166
        %4168 = vrot.lane.b32.xlu0 %v1536, 64
        %v4169 = vpop.permute.xlu0 %4168
        %4170 = vrot.lane.b32.xlu0 %v1542, 64
        %v4171 = vpop.permute.xlu0 %4170
        %4172 = vrot.lane.b32.xlu0 %v1548, 64
        %v4173 = vpop.permute.xlu0 %4172
        %4174 = vrot.lane.b32.xlu0 %v1554, 64
        %v4175 = vpop.permute.xlu0 %4174
        %v4185 = vsel %vm1802, %v4144, 0
        %v4188 = vsel %vm1802, %v4145, 0
        %v4191 = vsel %vm1802, %v4146, 0
        %v4194 = vsel %vm1802, %v4147, 0
        %v4197 = vsel %vm1802, %v4148, 0
        %v4200 = vsel %vm1802, %v4149, 0
        %v4203 = vsel %vm1802, %v4150, 0
        %v4206 = vsel %vm1802, %v4151, 0
        %4208 = vmatprep.subr.mxu0 0.0
        %4209 = vmatpush1.msra.mxu0 %v4161
        %4210 = vmatprep.subr.mxu0 0.0
        %4211 = vmatpush1.msra.mxu0 %v4163
        %4212 = vmatprep.subr.mxu0 0.0
        %4213 = vmatpush1.msra.mxu0 %v4165
        %4214 = vmatprep.subr.mxu0 0.0
        %4215 = vmatpush1.msra.mxu0 %v4167
        %4216 = vmatprep.subr.mxu0 0.0
        %4217 = vmatpush1.msra.mxu0 %v4169
        %4218 = vmatprep.subr.mxu0 0.0
        %4219 = vmatpush1.msra.mxu0 %v4171
        %4220 = vmatprep.subr.mxu0 0.0
        %4221 = vmatpush1.msra.mxu0 %v4173
        %4222 = vmatprep.subr.mxu0 0.0
        %4223 = vmatpush1.msra.mxu0 %v4175
        %4224 = vmatprep.subr.mxu0 0.0
        %4225 = vmatpush1.msra.mxu0 0.0
        %4226 = vmatprep.subr.mxu0 0.0
        %4227 = vmatpush1.msra.mxu0 0.0
        %4228 = vmatprep.subr.mxu0 0.0
        %4229 = vmatpush1.msra.mxu0 0.0
        %4230 = vmatprep.subr.mxu0 0.0
        %4231 = vmatpush1.msra.mxu0 0.0
        %4232 = vmatprep.subr.mxu0 0.0
        %4233 = vmatpush1.msra.mxu0 0.0
        %4234 = vmatprep.subr.mxu0 0.0
        %4235 = vmatpush1.msra.mxu0 0.0
        %4236 = vmatprep.subr.mxu0 0.0
        %4237 = vmatpush1.msra.mxu0 0.0
        %4238 = vmatprep.subr.mxu0 0.0
        %4239 = vmatpush1.msra.mxu0 0.0
        %4240 = vmatprep.subr.mxu0 0.0
        %4241 = vmatpush1.msra.mxu0 0.0
        %4242 = vmatprep.subr.mxu0 0.0
        %4243 = vmatpush1.msra.mxu0 0.0
        %4244 = vmatprep.subr.mxu0 0.0
        %4245 = vmatpush1.msra.mxu0 0.0
        %4246 = vmatprep.subr.mxu0 0.0
        %4247 = vmatpush1.msra.mxu0 0.0
        %4248 = vmatprep.subr.mxu0 0.0
        %4249 = vmatpush1.msra.mxu0 0.0
        %4250 = vmatprep.subr.mxu0 0.0
        %4251 = vmatpush1.msra.mxu0 0.0
        %4252 = vmatprep.subr.mxu0 0.0
        %4253 = vmatpush1.msra.mxu0 0.0
        %4254 = vmatprep.subr.mxu0 0.0
        %4255 = vmatpush1.msra.mxu0 0.0
        %4256 = vmatprep.subr.mxu0 0.0
        %4257 = vmatpush1.msra.mxu0 0.0
        %4258 = vmatprep.subr.mxu0 0.0
        %4259 = vmatpush1.msra.mxu0 0.0
        %4260 = vmatprep.subr.mxu0 0.0
        %4261 = vmatpush1.msra.mxu0 0.0
        %4262 = vmatprep.subr.mxu0 0.0
        %4263 = vmatpush1.msra.mxu0 0.0
        %4264 = vmatprep.subr.mxu0 0.0
        %4265 = vmatpush1.msra.mxu0 0.0
        %4266 = vmatprep.subr.mxu0 0.0
        %4267 = vmatpush1.msra.mxu0 0.0
        %4268 = vmatprep.subr.mxu0 0.0
        %4269 = vmatpush1.msra.mxu0 0.0
        %4270 = vmatprep.subr.mxu0 0.0
        %4271 = vmatpush1.msra.mxu0 0.0
        %4272 = vmatprep.mubr.f32.mxu0 0.0
        %4273 = vmatmul.mubr.f32.gmra.mrb[0].mxu0 %v4185
        %v4274 = vpop.f32.mrb[0].mxu0
        %v4275 = vadd.f32 0.0, %v4274
        %v4276 = vpop.f32.mrb[0].mxu0
        %4277 = vmatprep.mubr.f32.mxu0 0.0
        %4278 = vmatmul.mubr.f32.gmra.mrb[0].mxu0 %v4188
        %v4279 = vpop.f32.mrb[0].mxu0
        %v4280 = vadd.f32 0.0, %v4279
        %v4281 = vpop.f32.mrb[0].mxu0
        %4282 = vmatprep.mubr.f32.mxu0 0.0
        %4283 = vmatmul.mubr.f32.gmra.mrb[0].mxu0 %v4191
        %v4284 = vpop.f32.mrb[0].mxu0
        %v4285 = vadd.f32 0.0, %v4284
        %v4286 = vpop.f32.mrb[0].mxu0
        %4287 = vmatprep.mubr.f32.mxu0 0.0
        %4288 = vmatmul.mubr.f32.gmra.mrb[0].mxu0 %v4194
        %v4289 = vpop.f32.mrb[0].mxu0
        %v4290 = vadd.f32 0.0, %v4289
        %v4291 = vpop.f32.mrb[0].mxu0
        %4292 = vmatprep.mubr.f32.mxu0 0.0
        %4293 = vmatmul.mubr.f32.gmra.mrb[0].mxu0 %v4197
        %v4294 = vpop.f32.mrb[0].mxu0
        %v4295 = vadd.f32 0.0, %v4294
        %v4296 = vpop.f32.mrb[0].mxu0
        %4297 = vmatprep.mubr.f32.mxu0 0.0
        %4298 = vmatmul.mubr.f32.gmra.mrb[0].mxu0 %v4200
        %v4299 = vpop.f32.mrb[0].mxu0
        %v4300 = vadd.f32 0.0, %v4299
        %v4301 = vpop.f32.mrb[0].mxu0
        %4302 = vmatprep.mubr.f32.mxu0 0.0
        %4303 = vmatmul.mubr.f32.gmra.mrb[0].mxu0 %v4203
        %v4304 = vpop.f32.mrb[0].mxu0
        %v4305 = vadd.f32 0.0, %v4304
        %v4306 = vpop.f32.mrb[0].mxu0
        %4307 = vmatprep.mubr.f32.mxu0 0.0
        %4308 = vmatmul.mubr.f32.gmra.mrb[0].mxu0 %v4206
        %v4309 = vpop.f32.mrb[0].mxu0
        %v4310 = vadd.f32 0.0, %v4309
        %v4311 = vpop.f32.mrb[0].mxu0
        %4312 = vdwg.mxu0
        %v4313 = vld [vmem:[%s2 + $0x240] sm:$0xff]
        %v4314 = vld [vmem:[%s2 + $0x248] sm:$0xff]
        %v4315 = vld [vmem:[%s2 + $0x250] sm:$0xff]
        %v4316 = vld [vmem:[%s2 + $0x258] sm:$0xff]
        %v4317 = vld [vmem:[%s2 + $0x260] sm:$0xff]
        %v4318 = vld [vmem:[%s2 + $0x268] sm:$0xff]
        %v4319 = vld [vmem:[%s2 + $0x270] sm:$0xff]
        %v4320 = vld [vmem:[%s2 + $0x278] sm:$0xff]
        %v4321 = vld [vmem:[%s2 + $0x280] sm:$0xff]
        %v4322 = vld [vmem:[%s2 + $0x288] sm:$0xff]
        %v4323 = vld [vmem:[%s2 + $0x290] sm:$0xff]
        %v4324 = vld [vmem:[%s2 + $0x298] sm:$0xff]
        %v4325 = vld [vmem:[%s2 + $0x2a0] sm:$0xff]
        %v4326 = vld [vmem:[%s2 + $0x2a8] sm:$0xff]
        %v4327 = vld [vmem:[%s2 + $0x2b0] sm:$0xff]
        %v4328 = vld [vmem:[%s2 + $0x2b8] sm:$0xff]
        %v4329 = vld [vmem:[%s2 + $0x2c0] sm:$0xff]
        %v4330 = vld [vmem:[%s2 + $0x2c8] sm:$0xff]
        %v4331 = vld [vmem:[%s2 + $0x2d0] sm:$0xff]
        %v4332 = vld [vmem:[%s2 + $0x2d8] sm:$0xff]
        %v4333 = vld [vmem:[%s2 + $0x2e0] sm:$0xff]
        %v4334 = vld [vmem:[%s2 + $0x2e8] sm:$0xff]
        %v4335 = vld [vmem:[%s2 + $0x2f0] sm:$0xff]
        %v4336 = vld [vmem:[%s2 + $0x2f8] sm:$0xff]
        %v4338 = vsel %vm1802, %v4275, 0
        %v4341 = vsel %vm1802, %v4280, 0
        %v4344 = vsel %vm1802, %v4285, 0
        %v4347 = vsel %vm1802, %v4290, 0
        %v4350 = vsel %vm1802, %v4295, 0
        %v4353 = vsel %vm1802, %v4300, 0
        %v4356 = vsel %vm1802, %v4305, 0
        %v4359 = vsel %vm1802, %v4310, 0
        %4361 = vmatprep.subr.mxu0 %v4314
        %4362 = vmatpush1.msra.mxu0 %v4313
        %4363 = vmatprep.subr.mxu0 %v4317
        %4364 = vmatpush1.msra.mxu0 %v4316
        %4365 = vmatprep.subr.mxu0 %v4320
        %4366 = vmatpush1.msra.mxu0 %v4319
        %4367 = vmatprep.subr.mxu0 %v4323
        %4368 = vmatpush1.msra.mxu0 %v4322
        %4369 = vmatprep.subr.mxu0 %v4326
        %4370 = vmatpush1.msra.mxu0 %v4325
        %4371 = vmatprep.subr.mxu0 %v4329
        %4372 = vmatpush1.msra.mxu0 %v4328
        %4373 = vmatprep.subr.mxu0 %v4332
        %4374 = vmatpush1.msra.mxu0 %v4331
        %4375 = vmatprep.subr.mxu0 %v4335
        %4376 = vmatpush1.msra.mxu0 %v4334
        %4377 = vmatprep.subr.mxu0 0.0
        %4378 = vmatpush1.msra.mxu0 0.0
        %4379 = vmatprep.subr.mxu0 0.0
        %4380 = vmatpush1.msra.mxu0 0.0
        %4381 = vmatprep.subr.mxu0 0.0
        %4382 = vmatpush1.msra.mxu0 0.0
        %4383 = vmatprep.subr.mxu0 0.0
        %4384 = vmatpush1.msra.mxu0 0.0
        %4385 = vmatprep.subr.mxu0 0.0
        %4386 = vmatpush1.msra.mxu0 0.0
        %4387 = vmatprep.subr.mxu0 0.0
        %4388 = vmatpush1.msra.mxu0 0.0
        %4389 = vmatprep.subr.mxu0 0.0
        %4390 = vmatpush1.msra.mxu0 0.0
        %4391 = vmatprep.subr.mxu0 0.0
        %4392 = vmatpush1.msra.mxu0 0.0
        %4393 = vmatprep.subr.mxu0 0.0
        %4394 = vmatpush1.msra.mxu0 0.0
        %4395 = vmatprep.subr.mxu0 0.0
        %4396 = vmatpush1.msra.mxu0 0.0
        %4397 = vmatprep.subr.mxu0 0.0
        %4398 = vmatpush1.msra.mxu0 0.0
        %4399 = vmatprep.subr.mxu0 0.0
        %4400 = vmatpush1.msra.mxu0 0.0
        %4401 = vmatprep.subr.mxu0 0.0
        %4402 = vmatpush1.msra.mxu0 0.0
        %4403 = vmatprep.subr.mxu0 0.0
        %4404 = vmatpush1.msra.mxu0 0.0
        %4405 = vmatprep.subr.mxu0 0.0
        %4406 = vmatpush1.msra.mxu0 0.0
        %4407 = vmatprep.subr.mxu0 0.0
        %4408 = vmatpush1.msra.mxu0 0.0
        %4409 = vmatprep.subr.mxu0 0.0
        %4410 = vmatpush1.msra.mxu0 0.0
        %4411 = vmatprep.subr.mxu0 0.0
        %4412 = vmatpush1.msra.mxu0 0.0
        %4413 = vmatprep.subr.mxu0 0.0
        %4414 = vmatpush1.msra.mxu0 0.0
        %4415 = vmatprep.subr.mxu0 0.0
        %4416 = vmatpush1.msra.mxu0 0.0
        %4417 = vmatprep.subr.mxu0 0.0
        %4418 = vmatpush1.msra.mxu0 0.0
        %4419 = vmatprep.subr.mxu0 0.0
        %4420 = vmatpush1.msra.mxu0 0.0
        %4421 = vmatprep.subr.mxu0 0.0
        %4422 = vmatpush1.msra.mxu0 0.0
        %4423 = vmatprep.subr.mxu0 0.0
        %4424 = vmatpush1.msra.mxu0 0.0
        %4425 = vmatprep.mubr.f32.mxu0 0.0
        %4426 = vmatmul.mubr.f32.gmra.mrb[0].mxu0 %v4338
        %v4427 = vpop.f32.mrb[0].mxu0
        %v4428 = vadd.f32 0.0, %v4427
        %v4429 = vpop.f32.mrb[0].mxu0
        %v4430 = vadd.f32 0.0, %v4429
        %4431 = vmatprep.mubr.f32.mxu0 0.0
        %4432 = vmatmul.mubr.f32.gmra.mrb[0].mxu0 %v4341
        %v4433 = vpop.f32.mrb[0].mxu0
        %v4434 = vadd.f32 0.0, %v4433
        %v4435 = vpop.f32.mrb[0].mxu0
        %v4436 = vadd.f32 0.0, %v4435
        %4437 = vmatprep.mubr.f32.mxu0 0.0
        %4438 = vmatmul.mubr.f32.gmra.mrb[0].mxu0 %v4344
        %v4439 = vpop.f32.mrb[0].mxu0
        %v4440 = vadd.f32 0.0, %v4439
        %v4441 = vpop.f32.mrb[0].mxu0
        %v4442 = vadd.f32 0.0, %v4441
        %4443 = vmatprep.mubr.f32.mxu0 0.0
        %4444 = vmatmul.mubr.f32.gmra.mrb[0].mxu0 %v4347
        %v4445 = vpop.f32.mrb[0].mxu0
        %v4446 = vadd.f32 0.0, %v4445
        %v4447 = vpop.f32.mrb[0].mxu0
        %v4448 = vadd.f32 0.0, %v4447
        %4449 = vmatprep.mubr.f32.mxu0 0.0
        %4450 = vmatmul.mubr.f32.gmra.mrb[0].mxu0 %v4350
        %v4451 = vpop.f32.mrb[0].mxu0
        %v4452 = vadd.f32 0.0, %v4451
        %v4453 = vpop.f32.mrb[0].mxu0
        %v4454 = vadd.f32 0.0, %v4453
        %4455 = vmatprep.mubr.f32.mxu0 0.0
        %4456 = vmatmul.mubr.f32.gmra.mrb[0].mxu0 %v4353
        %v4457 = vpop.f32.mrb[0].mxu0
        %v4458 = vadd.f32 0.0, %v4457
        %v4459 = vpop.f32.mrb[0].mxu0
        %v4460 = vadd.f32 0.0, %v4459
        %4461 = vmatprep.mubr.f32.mxu0 0.0
        %4462 = vmatmul.mubr.f32.gmra.mrb[0].mxu0 %v4356
        %v4463 = vpop.f32.mrb[0].mxu0
        %v4464 = vadd.f32 0.0, %v4463
        %v4465 = vpop.f32.mrb[0].mxu0
        %v4466 = vadd.f32 0.0, %v4465
        %4467 = vmatprep.mubr.f32.mxu0 0.0
        %4468 = vmatmul.mubr.f32.gmra.mrb[0].mxu0 %v4359
        %v4469 = vpop.f32.mrb[0].mxu0
        %v4470 = vadd.f32 0.0, %v4469
        %v4471 = vpop.f32.mrb[0].mxu0
        %v4472 = vadd.f32 0.0, %v4471
        %4473 = vdwg.mxu0
        %4474 = vmatprep.subr.mxu0 0.0
        %4475 = vmatpush1.msra.mxu0 %v4315
        %4476 = vmatprep.subr.mxu0 0.0
        %4477 = vmatpush1.msra.mxu0 %v4318
        %4478 = vmatprep.subr.mxu0 0.0
        %4479 = vmatpush1.msra.mxu0 %v4321
        %4480 = vmatprep.subr.mxu0 0.0
        %4481 = vmatpush1.msra.mxu0 %v4324
        %4482 = vmatprep.subr.mxu0 0.0
        %4483 = vmatpush1.msra.mxu0 %v4327
        %4484 = vmatprep.subr.mxu0 0.0
        %4485 = vmatpush1.msra.mxu0 %v4330
        %4486 = vmatprep.subr.mxu0 0.0
        %4487 = vmatpush1.msra.mxu0 %v4333
        %4488 = vmatprep.subr.mxu0 0.0
        %4489 = vmatpush1.msra.mxu0 %v4336
        %4490 = vmatprep.subr.mxu0 0.0
        %4491 = vmatpush1.msra.mxu0 0.0
        %4492 = vmatprep.subr.mxu0 0.0
        %4493 = vmatpush1.msra.mxu0 0.0
        %4494 = vmatprep.subr.mxu0 0.0
        %4495 = vmatpush1.msra.mxu0 0.0
        %4496 = vmatprep.subr.mxu0 0.0
        %4497 = vmatpush1.msra.mxu0 0.0
        %4498 = vmatprep.subr.mxu0 0.0
        %4499 = vmatpush1.msra.mxu0 0.0
        %4500 = vmatprep.subr.mxu0 0.0
        %4501 = vmatpush1.msra.mxu0 0.0
        %4502 = vmatprep.subr.mxu0 0.0
        %4503 = vmatpush1.msra.mxu0 0.0
        %4504 = vmatprep.subr.mxu0 0.0
        %4505 = vmatpush1.msra.mxu0 0.0
        %4506 = vmatprep.subr.mxu0 0.0
        %4507 = vmatpush1.msra.mxu0 0.0
        %4508 = vmatprep.subr.mxu0 0.0
        %4509 = vmatpush1.msra.mxu0 0.0
        %4510 = vmatprep.subr.mxu0 0.0
        %4511 = vmatpush1.msra.mxu0 0.0
        %4512 = vmatprep.subr.mxu0 0.0
        %4513 = vmatpush1.msra.mxu0 0.0
        %4514 = vmatprep.subr.mxu0 0.0
        %4515 = vmatpush1.msra.mxu0 0.0
        %4516 = vmatprep.subr.mxu0 0.0
        %4517 = vmatpush1.msra.mxu0 0.0
        %4518 = vmatprep.subr.mxu0 0.0
        %4519 = vmatpush1.msra.mxu0 0.0
        %4520 = vmatprep.subr.mxu0 0.0
        %4521 = vmatpush1.msra.mxu0 0.0
        %4522 = vmatprep.subr.mxu0 0.0
        %4523 = vmatpush1.msra.mxu0 0.0
        %4524 = vmatprep.subr.mxu0 0.0
        %4525 = vmatpush1.msra.mxu0 0.0
        %4526 = vmatprep.subr.mxu0 0.0
        %4527 = vmatpush1.msra.mxu0 0.0
        %4528 = vmatprep.subr.mxu0 0.0
        %4529 = vmatpush1.msra.mxu0 0.0
        %4530 = vmatprep.subr.mxu0 0.0
        %4531 = vmatpush1.msra.mxu0 0.0
        %4532 = vmatprep.subr.mxu0 0.0
        %4533 = vmatpush1.msra.mxu0 0.0
        %4534 = vmatprep.subr.mxu0 0.0
        %4535 = vmatpush1.msra.mxu0 0.0
        %4536 = vmatprep.subr.mxu0 0.0
        %4537 = vmatpush1.msra.mxu0 0.0
        %4538 = vmatprep.mubr.f32.mxu0 0.0
        %4539 = vmatmul.mubr.f32.gmra.mrb[0].mxu0 %v4338
        %v4540 = vpop.f32.mrb[0].mxu0
        %v4541 = vadd.f32 0.0, %v4540
        %v4542 = vpop.f32.mrb[0].mxu0
        %4543 = vmatprep.mubr.f32.mxu0 0.0
        %4544 = vmatmul.mubr.f32.gmra.mrb[0].mxu0 %v4341
        %v4545 = vpop.f32.mrb[0].mxu0
        %v4546 = vadd.f32 0.0, %v4545
        %v4547 = vpop.f32.mrb[0].mxu0
        %4548 = vmatprep.mubr.f32.mxu0 0.0
        %4549 = vmatmul.mubr.f32.gmra.mrb[0].mxu0 %v4344
        %v4550 = vpop.f32.mrb[0].mxu0
        %v4551 = vadd.f32 0.0, %v4550
        %v4552 = vpop.f32.mrb[0].mxu0
        %4553 = vmatprep.mubr.f32.mxu0 0.0
        %4554 = vmatmul.mubr.f32.gmra.mrb[0].mxu0 %v4347
        %v4555 = vpop.f32.mrb[0].mxu0
        %v4556 = vadd.f32 0.0, %v4555
        %v4557 = vpop.f32.mrb[0].mxu0
        %4558 = vmatprep.mubr.f32.mxu0 0.0
        %4559 = vmatmul.mubr.f32.gmra.mrb[0].mxu0 %v4350
        %v4560 = vpop.f32.mrb[0].mxu0
        %v4561 = vadd.f32 0.0, %v4560
        %v4562 = vpop.f32.mrb[0].mxu0
        %4563 = vmatprep.mubr.f32.mxu0 0.0
        %4564 = vmatmul.mubr.f32.gmra.mrb[0].mxu0 %v4353
        %v4565 = vpop.f32.mrb[0].mxu0
        %v4566 = vadd.f32 0.0, %v4565
        %v4567 = vpop.f32.mrb[0].mxu0
        %4568 = vmatprep.mubr.f32.mxu0 0.0
        %4569 = vmatmul.mubr.f32.gmra.mrb[0].mxu0 %v4356
        %v4570 = vpop.f32.mrb[0].mxu0
        %v4571 = vadd.f32 0.0, %v4570
        %v4572 = vpop.f32.mrb[0].mxu0
        %4573 = vmatprep.mubr.f32.mxu0 0.0
        %4574 = vmatmul.mubr.f32.gmra.mrb[0].mxu0 %v4359
        %v4575 = vpop.f32.mrb[0].mxu0
        %v4576 = vadd.f32 0.0, %v4575
        %v4577 = vpop.f32.mrb[0].mxu0
        %4578 = vdwg.mxu0
        %v4579 = vadd.f32 %v3855, %v4428
        %v4580 = vadd.f32 %v3856, %v4430
        %v4581 = vadd.f32 %v3857, %v4541
        %v4582 = vadd.f32 %v3858, %v4434
        %v4583 = vadd.f32 %v3859, %v4436
        %v4584 = vadd.f32 %v3860, %v4546
        %v4585 = vadd.f32 %v3861, %v4440
        %v4586 = vadd.f32 %v3862, %v4442
        %v4587 = vadd.f32 %v3863, %v4551
        %v4588 = vadd.f32 %v3864, %v4446
        %v4589 = vadd.f32 %v3865, %v4448
        %v4590 = vadd.f32 %v3866, %v4556
        %v4591 = vadd.f32 %v3867, %v4452
        %v4592 = vadd.f32 %v3868, %v4454
        %v4593 = vadd.f32 %v3869, %v4561
        %v4594 = vadd.f32 %v3870, %v4458
        %v4595 = vadd.f32 %v3871, %v4460
        %v4596 = vadd.f32 %v3872, %v4566
        %v4597 = vadd.f32 %v3873, %v4464
        %v4598 = vadd.f32 %v3874, %v4466
        %v4599 = vadd.f32 %v3875, %v4571
        %v4600 = vadd.f32 %v3876, %v4470
        %v4601 = vadd.f32 %v3877, %v4472
        %v4602 = vadd.f32 %v3878, %v4576
        %v4604 = vsel %vm1802, %v1058, 0
        %v4607 = vsel %vm1802, %v1064, 0
        %v4610 = vsel %vm1802, %v1070, 0
        %v4613 = vsel %vm1802, %v1076, 0
        %v4616 = vsel %vm1802, %v1082, 0
        %v4619 = vsel %vm1802, %v1088, 0
        %v4622 = vsel %vm1802, %v1094, 0
        %v4625 = vsel %vm1802, %v1100, 0
        %v4628 = vsel %vm1802, %v1286, 0
        %v4631 = vsel %vm1802, %v1292, 0
        %v4634 = vsel %vm1802, %v1298, 0
        %v4637 = vsel %vm1802, %v1304, 0
        %v4640 = vsel %vm1802, %v1310, 0
        %v4643 = vsel %vm1802, %v1316, 0
        %v4646 = vsel %vm1802, %v1322, 0
        %v4649 = vsel %vm1802, %v1328, 0
        %4651 = vmatprep.subr.mxu0 0.0
        %4652 = vmatpush1.xpose.msra.mxu0 %v4628
        %4653 = vmatprep.subr.mxu0 0.0
        %4654 = vmatpush1.xpose.msra.mxu0 %v4631
        %4655 = vmatprep.subr.mxu0 0.0
        %4656 = vmatpush1.xpose.msra.mxu0 %v4634
        %4657 = vmatprep.subr.mxu0 0.0
        %4658 = vmatpush1.xpose.msra.mxu0 %v4637
        %4659 = vmatprep.subr.mxu0 0.0
        %4660 = vmatpush1.xpose.msra.mxu0 %v4640
        %4661 = vmatprep.subr.mxu0 0.0
        %4662 = vmatpush1.xpose.msra.mxu0 %v4643
        %4663 = vmatprep.subr.mxu0 0.0
        %4664 = vmatpush1.xpose.msra.mxu0 %v4646
        %4665 = vmatprep.subr.mxu0 0.0
        %4666 = vmatpush1.xpose.msra.mxu0 %v4649
        %4667 = vmatprep.subr.mxu0 0.0
        %4668 = vmatpush1.xpose.msra.mxu0 0.0
        %4669 = vmatprep.subr.mxu0 0.0
        %4670 = vmatpush1.xpose.msra.mxu0 0.0
        %4671 = vmatprep.subr.mxu0 0.0
        %4672 = vmatpush1.xpose.msra.mxu0 0.0
        %4673 = vmatprep.subr.mxu0 0.0
        %4674 = vmatpush1.xpose.msra.mxu0 0.0
        %4675 = vmatprep.subr.mxu0 0.0
        %4676 = vmatpush1.xpose.msra.mxu0 0.0
        %4677 = vmatprep.subr.mxu0 0.0
        %4678 = vmatpush1.xpose.msra.mxu0 0.0
        %4679 = vmatprep.subr.mxu0 0.0
        %4680 = vmatpush1.xpose.msra.mxu0 0.0
        %4681 = vmatprep.subr.mxu0 0.0
        %4682 = vmatpush1.xpose.msra.mxu0 0.0
        %4683 = vmatprep.subr.mxu0 0.0
        %4684 = vmatpush1.xpose.msra.mxu0 0.0
        %4685 = vmatprep.subr.mxu0 0.0
        %4686 = vmatpush1.xpose.msra.mxu0 0.0
        %4687 = vmatprep.subr.mxu0 0.0
        %4688 = vmatpush1.xpose.msra.mxu0 0.0
        %4689 = vmatprep.subr.mxu0 0.0
        %4690 = vmatpush1.xpose.msra.mxu0 0.0
        %4691 = vmatprep.subr.mxu0 0.0
        %4692 = vmatpush1.xpose.msra.mxu0 0.0
        %4693 = vmatprep.subr.mxu0 0.0
        %4694 = vmatpush1.xpose.msra.mxu0 0.0
        %4695 = vmatprep.subr.mxu0 0.0
        %4696 = vmatpush1.xpose.msra.mxu0 0.0
        %4697 = vmatprep.subr.mxu0 0.0
        %4698 = vmatpush1.xpose.msra.mxu0 0.0
        %4699 = vmatprep.subr.mxu0 0.0
        %4700 = vmatpush1.xpose.msra.mxu0 0.0
        %4701 = vmatprep.subr.mxu0 0.0
        %4702 = vmatpush1.xpose.msra.mxu0 0.0
        %4703 = vmatprep.subr.mxu0 0.0
        %4704 = vmatpush1.xpose.msra.mxu0 0.0
        %4705 = vmatprep.subr.mxu0 0.0
        %4706 = vmatpush1.xpose.msra.mxu0 0.0
        %4707 = vmatprep.subr.mxu0 0.0
        %4708 = vmatpush1.xpose.msra.mxu0 0.0
        %4709 = vmatprep.subr.mxu0 0.0
        %4710 = vmatpush1.xpose.msra.mxu0 0.0
        %4711 = vmatprep.subr.mxu0 0.0
        %4712 = vmatpush1.xpose.msra.mxu0 0.0
        %4713 = vmatprep.subr.mxu0 0.0
        %4714 = vmatpush1.xpose.msra.mxu0 0.0
        %4715 = vmatprep.mubr.f32.mxu0 0.0
        %4716 = vmatmul.mubr.f32.gmra.mrb[0].mxu0 %v4604
        %v4717 = vpop.f32.mrb[0].mxu0
        %v4718 = vadd.f32 0.0, %v4717
        %v4719 = vpop.f32.mrb[0].mxu0
        %4720 = vmatprep.mubr.f32.mxu0 0.0
        %4721 = vmatmul.mubr.f32.gmra.mrb[0].mxu0 %v4607
        %v4722 = vpop.f32.mrb[0].mxu0
        %v4723 = vadd.f32 0.0, %v4722
        %v4724 = vpop.f32.mrb[0].mxu0
        %4725 = vmatprep.mubr.f32.mxu0 0.0
        %4726 = vmatmul.mubr.f32.gmra.mrb[0].mxu0 %v4610
        %v4727 = vpop.f32.mrb[0].mxu0
        %v4728 = vadd.f32 0.0, %v4727
        %v4729 = vpop.f32.mrb[0].mxu0
        %4730 = vmatprep.mubr.f32.mxu0 0.0
        %4731 = vmatmul.mubr.f32.gmra.mrb[0].mxu0 %v4613
        %v4732 = vpop.f32.mrb[0].mxu0
        %v4733 = vadd.f32 0.0, %v4732
        %v4734 = vpop.f32.mrb[0].mxu0
        %4735 = vmatprep.mubr.f32.mxu0 0.0
        %4736 = vmatmul.mubr.f32.gmra.mrb[0].mxu0 %v4616
        %v4737 = vpop.f32.mrb[0].mxu0
        %v4738 = vadd.f32 0.0, %v4737
        %v4739 = vpop.f32.mrb[0].mxu0
        %4740 = vmatprep.mubr.f32.mxu0 0.0
        %4741 = vmatmul.mubr.f32.gmra.mrb[0].mxu0 %v4619
        %v4742 = vpop.f32.mrb[0].mxu0
        %v4743 = vadd.f32 0.0, %v4742
        %v4744 = vpop.f32.mrb[0].mxu0
        %4745 = vmatprep.mubr.f32.mxu0 0.0
        %4746 = vmatmul.mubr.f32.gmra.mrb[0].mxu0 %v4622
        %v4747 = vpop.f32.mrb[0].mxu0
        %v4748 = vadd.f32 0.0, %v4747
        %v4749 = vpop.f32.mrb[0].mxu0
        %4750 = vmatprep.mubr.f32.mxu0 0.0
        %4751 = vmatmul.mubr.f32.gmra.mrb[0].mxu0 %v4625
        %v4752 = vpop.f32.mrb[0].mxu0
        %v4753 = vadd.f32 0.0, %v4752
        %v4754 = vpop.f32.mrb[0].mxu0
        %4755 = vdwg.mxu0
        %v4756 = vmul.f32 %v4718, 0.05103104
        %v4757 = vmul.f32 %v4723, 0.05103104
        %v4758 = vmul.f32 %v4728, 0.05103104
        %v4759 = vmul.f32 %v4733, 0.05103104
        %v4760 = vmul.f32 %v4738, 0.05103104
        %v4761 = vmul.f32 %v4743, 0.05103104
        %v4762 = vmul.f32 %v4748, 0.05103104
        %v4763 = vmul.f32 %v4753, 0.05103104
        %v4764 = vsel %vm1777, %v4756, -inf
        %v4765 = vsel %vm1778, %v4757, -inf
        %v4766 = vsel %vm1779, %v4758, -inf
        %v4767 = vsel %vm1780, %v4759, -inf
        %v4768 = vsel %vm1781, %v4760, -inf
        %v4769 = vsel %vm1782, %v4761, -inf
        %v4770 = vsel %vm1783, %v4762, -inf
        %v4771 = vsel %vm1784, %v4763, -inf
        %v4772 = vsel %vm1802, %v4764, -inf
        %4773 = vmax.xlane.f32.xlu0 %v4772
        %v4774 = vpop.xlane.xlu0 %4773
        %v4775 = vsel %vm1802, %v4765, -inf
        %4776 = vmax.xlane.f32.xlu0 %v4775
        %v4777 = vpop.xlane.xlu0 %4776
        %v4778 = vsel %vm1802, %v4766, -inf
        %4779 = vmax.xlane.f32.xlu0 %v4778
        %v4780 = vpop.xlane.xlu0 %4779
        %v4781 = vsel %vm1802, %v4767, -inf
        %4782 = vmax.xlane.f32.xlu0 %v4781
        %v4783 = vpop.xlane.xlu0 %4782
        %v4784 = vsel %vm1802, %v4768, -inf
        %4785 = vmax.xlane.f32.xlu0 %v4784
        %v4786 = vpop.xlane.xlu0 %4785
        %v4787 = vsel %vm1802, %v4769, -inf
        %4788 = vmax.xlane.f32.xlu0 %v4787
        %v4789 = vpop.xlane.xlu0 %4788
        %v4790 = vsel %vm1802, %v4770, -inf
        %4791 = vmax.xlane.f32.xlu0 %v4790
        %v4792 = vpop.xlane.xlu0 %4791
        %v4793 = vsel %vm1802, %v4771, -inf
        %4794 = vmax.xlane.f32.xlu0 %v4793
        %v4795 = vpop.xlane.xlu0 %4794
        %v4796 = vsub.f32 %v4764, %v4774
        %v4797 = vsub.f32 %v4765, %v4777
        %v4798 = vsub.f32 %v4766, %v4780
        %v4799 = vsub.f32 %v4767, %v4783
        %v4800 = vsub.f32 %v4768, %v4786
        %v4801 = vsub.f32 %v4769, %v4789
        %v4802 = vsub.f32 %v4770, %v4792
        %v4803 = vsub.f32 %v4771, %v4795
        %v4804 = vmul.f32 %v4796, 1.442695
        %v4805 = vpow.pop %v4804
        %v4806 = vmul.f32 %v4797, 1.442695
        %v4807 = vpow.pop %v4806
        %v4808 = vmul.f32 %v4798, 1.442695
        %v4809 = vpow.pop %v4808
        %v4810 = vmul.f32 %v4799, 1.442695
        %v4811 = vpow.pop %v4810
        %v4812 = vmul.f32 %v4800, 1.442695
        %v4813 = vpow.pop %v4812
        %v4814 = vmul.f32 %v4801, 1.442695
        %v4815 = vpow.pop %v4814
        %v4816 = vmul.f32 %v4802, 1.442695
        %v4817 = vpow.pop %v4816
        %v4818 = vmul.f32 %v4803, 1.442695
        %v4819 = vpow.pop %v4818
        %v4820 = vsel %vm1802, %v4805, 0.0
        %4821 = vadd.xlane.f32.xlu0 %v4820
        %v4822 = vpop.xlane.xlu0 %4821
        %v4823 = vsel %vm1802, %v4807, 0.0
        %4824 = vadd.xlane.f32.xlu0 %v4823
        %v4825 = vpop.xlane.xlu0 %4824
        %v4826 = vsel %vm1802, %v4809, 0.0
        %4827 = vadd.xlane.f32.xlu0 %v4826
        %v4828 = vpop.xlane.xlu0 %4827
        %v4829 = vsel %vm1802, %v4811, 0.0
        %4830 = vadd.xlane.f32.xlu0 %v4829
        %v4831 = vpop.xlane.xlu0 %4830
        %v4832 = vsel %vm1802, %v4813, 0.0
        %4833 = vadd.xlane.f32.xlu0 %v4832
        %v4834 = vpop.xlane.xlu0 %4833
        %v4835 = vsel %vm1802, %v4815, 0.0
        %4836 = vadd.xlane.f32.xlu0 %v4835
        %v4837 = vpop.xlane.xlu0 %4836
        %v4838 = vsel %vm1802, %v4817, 0.0
        %4839 = vadd.xlane.f32.xlu0 %v4838
        %v4840 = vpop.xlane.xlu0 %4839
        %v4841 = vsel %vm1802, %v4819, 0.0
        %4842 = vadd.xlane.f32.xlu0 %v4841
        %v4843 = vpop.xlane.xlu0 %4842
        %v4844 = vrcp.pop %v4822
        %v4845 = vrcp.pop %v4825
        %v4846 = vrcp.pop %v4828
        %v4847 = vrcp.pop %v4831
        %v4848 = vrcp.pop %v4834
        %v4849 = vrcp.pop %v4837
        %v4850 = vrcp.pop %v4840
        %v4851 = vrcp.pop %v4843
        %v4852 = vmul.f32 %v4805, %v4844
        %v4853 = vmul.f32 %v4807, %v4845
        %v4854 = vmul.f32 %v4809, %v4846
        %v4855 = vmul.f32 %v4811, %v4847
        %v4856 = vmul.f32 %v4813, %v4848
        %v4857 = vmul.f32 %v4815, %v4849
        %v4858 = vmul.f32 %v4817, %v4850
        %v4859 = vmul.f32 %v4819, %v4851
        %v4861 = vsel %vm1802, %v4852, 0
        %v4864 = vsel %vm1802, %v4853, 0
        %v4867 = vsel %vm1802, %v4854, 0
        %v4870 = vsel %vm1802, %v4855, 0
        %v4873 = vsel %vm1802, %v4856, 0
        %v4876 = vsel %vm1802, %v4857, 0
        %v4879 = vsel %vm1802, %v4858, 0
        %v4882 = vsel %vm1802, %v4859, 0
        %4884 = vmatprep.subr.mxu0 0.0
        %4885 = vmatpush1.msra.mxu0 %v1728
        %4886 = vmatprep.subr.mxu0 0.0
        %4887 = vmatpush1.msra.mxu0 %v1733
        %4888 = vmatprep.subr.mxu0 0.0
        %4889 = vmatpush1.msra.mxu0 %v1738
        %4890 = vmatprep.subr.mxu0 0.0
        %4891 = vmatpush1.msra.mxu0 %v1743
        %4892 = vmatprep.subr.mxu0 0.0
        %4893 = vmatpush1.msra.mxu0 %v1748
        %4894 = vmatprep.subr.mxu0 0.0
        %4895 = vmatpush1.msra.mxu0 %v1753
        %4896 = vmatprep.subr.mxu0 0.0
        %4897 = vmatpush1.msra.mxu0 %v1758
        %4898 = vmatprep.subr.mxu0 0.0
        %4899 = vmatpush1.msra.mxu0 %v1763
        %4900 = vmatprep.subr.mxu0 0.0
        %4901 = vmatpush1.msra.mxu0 0.0
        %4902 = vmatprep.subr.mxu0 0.0
        %4903 = vmatpush1.msra.mxu0 0.0
        %4904 = vmatprep.subr.mxu0 0.0
        %4905 = vmatpush1.msra.mxu0 0.0
        %4906 = vmatprep.subr.mxu0 0.0
        %4907 = vmatpush1.msra.mxu0 0.0
        %4908 = vmatprep.subr.mxu0 0.0
        %4909 = vmatpush1.msra.mxu0 0.0
        %4910 = vmatprep.subr.mxu0 0.0
        %4911 = vmatpush1.msra.mxu0 0.0
        %4912 = vmatprep.subr.mxu0 0.0
        %4913 = vmatpush1.msra.mxu0 0.0
        %4914 = vmatprep.subr.mxu0 0.0
        %4915 = vmatpush1.msra.mxu0 0.0
        %4916 = vmatprep.subr.mxu0 0.0
        %4917 = vmatpush1.msra.mxu0 0.0
        %4918 = vmatprep.subr.mxu0 0.0
        %4919 = vmatpush1.msra.mxu0 0.0
        %4920 = vmatprep.subr.mxu0 0.0
        %4921 = vmatpush1.msra.mxu0 0.0
        %4922 = vmatprep.subr.mxu0 0.0
        %4923 = vmatpush1.msra.mxu0 0.0
        %4924 = vmatprep.subr.mxu0 0.0
        %4925 = vmatpush1.msra.mxu0 0.0
        %4926 = vmatprep.subr.mxu0 0.0
        %4927 = vmatpush1.msra.mxu0 0.0
        %4928 = vmatprep.subr.mxu0 0.0
        %4929 = vmatpush1.msra.mxu0 0.0
        %4930 = vmatprep.subr.mxu0 0.0
        %4931 = vmatpush1.msra.mxu0 0.0
        %4932 = vmatprep.subr.mxu0 0.0
        %4933 = vmatpush1.msra.mxu0 0.0
        %4934 = vmatprep.subr.mxu0 0.0
        %4935 = vmatpush1.msra.mxu0 0.0
        %4936 = vmatprep.subr.mxu0 0.0
        %4937 = vmatpush1.msra.mxu0 0.0
        %4938 = vmatprep.subr.mxu0 0.0
        %4939 = vmatpush1.msra.mxu0 0.0
        %4940 = vmatprep.subr.mxu0 0.0
        %4941 = vmatpush1.msra.mxu0 0.0
        %4942 = vmatprep.subr.mxu0 0.0
        %4943 = vmatpush1.msra.mxu0 0.0
        %4944 = vmatprep.subr.mxu0 0.0
        %4945 = vmatpush1.msra.mxu0 0.0
        %4946 = vmatprep.subr.mxu0 0.0
        %4947 = vmatpush1.msra.mxu0 0.0
        %4948 = vmatprep.mubr.f32.mxu0 0.0
        %4949 = vmatmul.mubr.f32.gmra.mrb[0].mxu0 %v4861
        %v4950 = vpop.f32.mrb[0].mxu0
        %v4951 = vadd.f32 0.0, %v4950
        %v4952 = vpop.f32.mrb[0].mxu0
        %4953 = vmatprep.mubr.f32.mxu0 0.0
        %4954 = vmatmul.mubr.f32.gmra.mrb[0].mxu0 %v4864
        %v4955 = vpop.f32.mrb[0].mxu0
        %v4956 = vadd.f32 0.0, %v4955
        %v4957 = vpop.f32.mrb[0].mxu0
        %4958 = vmatprep.mubr.f32.mxu0 0.0
        %4959 = vmatmul.mubr.f32.gmra.mrb[0].mxu0 %v4867
        %v4960 = vpop.f32.mrb[0].mxu0
        %v4961 = vadd.f32 0.0, %v4960
        %v4962 = vpop.f32.mrb[0].mxu0
        %4963 = vmatprep.mubr.f32.mxu0 0.0
        %4964 = vmatmul.mubr.f32.gmra.mrb[0].mxu0 %v4870
        %v4965 = vpop.f32.mrb[0].mxu0
        %v4966 = vadd.f32 0.0, %v4965
        %v4967 = vpop.f32.mrb[0].mxu0
        %4968 = vmatprep.mubr.f32.mxu0 0.0
        %4969 = vmatmul.mubr.f32.gmra.mrb[0].mxu0 %v4873
        %v4970 = vpop.f32.mrb[0].mxu0
        %v4971 = vadd.f32 0.0, %v4970
        %v4972 = vpop.f32.mrb[0].mxu0
        %4973 = vmatprep.mubr.f32.mxu0 0.0
        %4974 = vmatmul.mubr.f32.gmra.mrb[0].mxu0 %v4876
        %v4975 = vpop.f32.mrb[0].mxu0
        %v4976 = vadd.f32 0.0, %v4975
        %v4977 = vpop.f32.mrb[0].mxu0
        %4978 = vmatprep.mubr.f32.mxu0 0.0
        %4979 = vmatmul.mubr.f32.gmra.mrb[0].mxu0 %v4879
        %v4980 = vpop.f32.mrb[0].mxu0
        %v4981 = vadd.f32 0.0, %v4980
        %v4982 = vpop.f32.mrb[0].mxu0
        %4983 = vmatprep.mubr.f32.mxu0 0.0
        %4984 = vmatmul.mubr.f32.gmra.mrb[0].mxu0 %v4882
        %v4985 = vpop.f32.mrb[0].mxu0
        %v4986 = vadd.f32 0.0, %v4985
        %v4987 = vpop.f32.mrb[0].mxu0
        %4988 = vdwg.mxu0
        %v4989 = vld [vmem:[%s2 + $0x300] sm:$0xff]
        %v4990 = vld [vmem:[%s2 + $0x308] sm:$0xff]
        %v4991 = vld [vmem:[%s2 + $0x310] sm:$0xff]
        %v4992 = vld [vmem:[%s2 + $0x318] sm:$0xff]
        %v4993 = vld [vmem:[%s2 + $0x320] sm:$0xff]
        %v4994 = vld [vmem:[%s2 + $0x328] sm:$0xff]
        %v4995 = vld [vmem:[%s2 + $0x330] sm:$0xff]
        %v4996 = vld [vmem:[%s2 + $0x338] sm:$0xff]
        %v4997 = vld [vmem:[%s2 + $0x340] sm:$0xff]
        %v4998 = vld [vmem:[%s2 + $0x348] sm:$0xff]
        %v4999 = vld [vmem:[%s2 + $0x350] sm:$0xff]
        %v5000 = vld [vmem:[%s2 + $0x358] sm:$0xff]
        %v5001 = vld [vmem:[%s2 + $0x360] sm:$0xff]
        %v5002 = vld [vmem:[%s2 + $0x368] sm:$0xff]
        %v5003 = vld [vmem:[%s2 + $0x370] sm:$0xff]
        %v5004 = vld [vmem:[%s2 + $0x378] sm:$0xff]
        %v5005 = vld [vmem:[%s2 + $0x380] sm:$0xff]
        %v5006 = vld [vmem:[%s2 + $0x388] sm:$0xff]
        %v5007 = vld [vmem:[%s2 + $0x390] sm:$0xff]
        %v5008 = vld [vmem:[%s2 + $0x398] sm:$0xff]
        %v5009 = vld [vmem:[%s2 + $0x3a0] sm:$0xff]
        %v5010 = vld [vmem:[%s2 + $0x3a8] sm:$0xff]
        %v5011 = vld [vmem:[%s2 + $0x3b0] sm:$0xff]
        %v5012 = vld [vmem:[%s2 + $0x3b8] sm:$0xff]
        %v5014 = vsel %vm1802, %v4951, 0
        %v5017 = vsel %vm1802, %v4956, 0
        %v5020 = vsel %vm1802, %v4961, 0
        %v5023 = vsel %vm1802, %v4966, 0
        %v5026 = vsel %vm1802, %v4971, 0
        %v5029 = vsel %vm1802, %v4976, 0
        %v5032 = vsel %vm1802, %v4981, 0
        %v5035 = vsel %vm1802, %v4986, 0
        %5037 = vmatprep.subr.mxu0 %v4990
        %5038 = vmatpush1.msra.mxu0 %v4989
        %5039 = vmatprep.subr.mxu0 %v4993
        %5040 = vmatpush1.msra.mxu0 %v4992
        %5041 = vmatprep.subr.mxu0 %v4996
        %5042 = vmatpush1.msra.mxu0 %v4995
        %5043 = vmatprep.subr.mxu0 %v4999
        %5044 = vmatpush1.msra.mxu0 %v4998
        %5045 = vmatprep.subr.mxu0 %v5002
        %5046 = vmatpush1.msra.mxu0 %v5001
        %5047 = vmatprep.subr.mxu0 %v5005
        %5048 = vmatpush1.msra.mxu0 %v5004
        %5049 = vmatprep.subr.mxu0 %v5008
        %5050 = vmatpush1.msra.mxu0 %v5007
        %5051 = vmatprep.subr.mxu0 %v5011
        %5052 = vmatpush1.msra.mxu0 %v5010
        %5053 = vmatprep.subr.mxu0 0.0
        %5054 = vmatpush1.msra.mxu0 0.0
        %5055 = vmatprep.subr.mxu0 0.0
        %5056 = vmatpush1.msra.mxu0 0.0
        %5057 = vmatprep.subr.mxu0 0.0
        %5058 = vmatpush1.msra.mxu0 0.0
        %5059 = vmatprep.subr.mxu0 0.0
        %5060 = vmatpush1.msra.mxu0 0.0
        %5061 = vmatprep.subr.mxu0 0.0
        %5062 = vmatpush1.msra.mxu0 0.0
        %5063 = vmatprep.subr.mxu0 0.0
        %5064 = vmatpush1.msra.mxu0 0.0
        %5065 = vmatprep.subr.mxu0 0.0
        %5066 = vmatpush1.msra.mxu0 0.0
        %5067 = vmatprep.subr.mxu0 0.0
        %5068 = vmatpush1.msra.mxu0 0.0
        %5069 = vmatprep.subr.mxu0 0.0
        %5070 = vmatpush1.msra.mxu0 0.0
        %5071 = vmatprep.subr.mxu0 0.0
        %5072 = vmatpush1.msra.mxu0 0.0
        %5073 = vmatprep.subr.mxu0 0.0
        %5074 = vmatpush1.msra.mxu0 0.0
        %5075 = vmatprep.subr.mxu0 0.0
        %5076 = vmatpush1.msra.mxu0 0.0
        %5077 = vmatprep.subr.mxu0 0.0
        %5078 = vmatpush1.msra.mxu0 0.0
        %5079 = vmatprep.subr.mxu0 0.0
        %5080 = vmatpush1.msra.mxu0 0.0
        %5081 = vmatprep.subr.mxu0 0.0
        %5082 = vmatpush1.msra.mxu0 0.0
        %5083 = vmatprep.subr.mxu0 0.0
        %5084 = vmatpush1.msra.mxu0 0.0
        %5085 = vmatprep.subr.mxu0 0.0
        %5086 = vmatpush1.msra.mxu0 0.0
        %5087 = vmatprep.subr.mxu0 0.0
        %5088 = vmatpush1.msra.mxu0 0.0
        %5089 = vmatprep.subr.mxu0 0.0
        %5090 = vmatpush1.msra.mxu0 0.0
        %5091 = vmatprep.subr.mxu0 0.0
        %5092 = vmatpush1.msra.mxu0 0.0
        %5093 = vmatprep.subr.mxu0 0.0
        %5094 = vmatpush1.msra.mxu0 0.0
        %5095 = vmatprep.subr.mxu0 0.0
        %5096 = vmatpush1.msra.mxu0 0.0
        %5097 = vmatprep.subr.mxu0 0.0
        %5098 = vmatpush1.msra.mxu0 0.0
        %5099 = vmatprep.subr.mxu0 0.0
        %5100 = vmatpush1.msra.mxu0 0.0
        %5101 = vmatprep.mubr.f32.mxu0 0.0
        %5102 = vmatmul.mubr.f32.gmra.mrb[0].mxu0 %v5014
        %v5103 = vpop.f32.mrb[0].mxu0
        %v5104 = vadd.f32 0.0, %v5103
        %v5105 = vpop.f32.mrb[0].mxu0
        %v5106 = vadd.f32 0.0, %v5105
        %5107 = vmatprep.mubr.f32.mxu0 0.0
        %5108 = vmatmul.mubr.f32.gmra.mrb[0].mxu0 %v5017
        %v5109 = vpop.f32.mrb[0].mxu0
        %v5110 = vadd.f32 0.0, %v5109
        %v5111 = vpop.f32.mrb[0].mxu0
        %v5112 = vadd.f32 0.0, %v5111
        %5113 = vmatprep.mubr.f32.mxu0 0.0
        %5114 = vmatmul.mubr.f32.gmra.mrb[0].mxu0 %v5020
        %v5115 = vpop.f32.mrb[0].mxu0
        %v5116 = vadd.f32 0.0, %v5115
        %v5117 = vpop.f32.mrb[0].mxu0
        %v5118 = vadd.f32 0.0, %v5117
        %5119 = vmatprep.mubr.f32.mxu0 0.0
        %5120 = vmatmul.mubr.f32.gmra.mrb[0].mxu0 %v5023
        %v5121 = vpop.f32.mrb[0].mxu0
        %v5122 = vadd.f32 0.0, %v5121
        %v5123 = vpop.f32.mrb[0].mxu0
        %v5124 = vadd.f32 0.0, %v5123
        %5125 = vmatprep.mubr.f32.mxu0 0.0
        %5126 = vmatmul.mubr.f32.gmra.mrb[0].mxu0 %v5026
        %v5127 = vpop.f32.mrb[0].mxu0
        %v5128 = vadd.f32 0.0, %v5127
        %v5129 = vpop.f32.mrb[0].mxu0
        %v5130 = vadd.f32 0.0, %v5129
        %5131 = vmatprep.mubr.f32.mxu0 0.0
        %5132 = vmatmul.mubr.f32.gmra.mrb[0].mxu0 %v5029
        %v5133 = vpop.f32.mrb[0].mxu0
        %v5134 = vadd.f32 0.0, %v5133
        %v5135 = vpop.f32.mrb[0].mxu0
        %v5136 = vadd.f32 0.0, %v5135
        %5137 = vmatprep.mubr.f32.mxu0 0.0
        %5138 = vmatmul.mubr.f32.gmra.mrb[0].mxu0 %v5032
        %v5139 = vpop.f32.mrb[0].mxu0
        %v5140 = vadd.f32 0.0, %v5139
        %v5141 = vpop.f32.mrb[0].mxu0
        %v5142 = vadd.f32 0.0, %v5141
        %5143 = vmatprep.mubr.f32.mxu0 0.0
        %5144 = vmatmul.mubr.f32.gmra.mrb[0].mxu0 %v5035
        %v5145 = vpop.f32.mrb[0].mxu0
        %v5146 = vadd.f32 0.0, %v5145
        %v5147 = vpop.f32.mrb[0].mxu0
        %v5148 = vadd.f32 0.0, %v5147
        %5149 = vdwg.mxu0
        %5150 = vmatprep.subr.mxu0 0.0
        %5151 = vmatpush1.msra.mxu0 %v4991
        %5152 = vmatprep.subr.mxu0 0.0
        %5153 = vmatpush1.msra.mxu0 %v4994
        %5154 = vmatprep.subr.mxu0 0.0
        %5155 = vmatpush1.msra.mxu0 %v4997
        %5156 = vmatprep.subr.mxu0 0.0
        %5157 = vmatpush1.msra.mxu0 %v5000
        %5158 = vmatprep.subr.mxu0 0.0
        %5159 = vmatpush1.msra.mxu0 %v5003
        %5160 = vmatprep.subr.mxu0 0.0
        %5161 = vmatpush1.msra.mxu0 %v5006
        %5162 = vmatprep.subr.mxu0 0.0
        %5163 = vmatpush1.msra.mxu0 %v5009
        %5164 = vmatprep.subr.mxu0 0.0
        %5165 = vmatpush1.msra.mxu0 %v5012
        %5166 = vmatprep.subr.mxu0 0.0
        %5167 = vmatpush1.msra.mxu0 0.0
        %5168 = vmatprep.subr.mxu0 0.0
        %5169 = vmatpush1.msra.mxu0 0.0
        %5170 = vmatprep.subr.mxu0 0.0
        %5171 = vmatpush1.msra.mxu0 0.0
        %5172 = vmatprep.subr.mxu0 0.0
        %5173 = vmatpush1.msra.mxu0 0.0
        %5174 = vmatprep.subr.mxu0 0.0
        %5175 = vmatpush1.msra.mxu0 0.0
        %5176 = vmatprep.subr.mxu0 0.0
        %5177 = vmatpush1.msra.mxu0 0.0
        %5178 = vmatprep.subr.mxu0 0.0
        %5179 = vmatpush1.msra.mxu0 0.0
        %5180 = vmatprep.subr.mxu0 0.0
        %5181 = vmatpush1.msra.mxu0 0.0
        %5182 = vmatprep.subr.mxu0 0.0
        %5183 = vmatpush1.msra.mxu0 0.0
        %5184 = vmatprep.subr.mxu0 0.0
        %5185 = vmatpush1.msra.mxu0 0.0
        %5186 = vmatprep.subr.mxu0 0.0
        %5187 = vmatpush1.msra.mxu0 0.0
        %5188 = vmatprep.subr.mxu0 0.0
        %5189 = vmatpush1.msra.mxu0 0.0
        %5190 = vmatprep.subr.mxu0 0.0
        %5191 = vmatpush1.msra.mxu0 0.0
        %5192 = vmatprep.subr.mxu0 0.0
        %5193 = vmatpush1.msra.mxu0 0.0
        %5194 = vmatprep.subr.mxu0 0.0
        %5195 = vmatpush1.msra.mxu0 0.0
        %5196 = vmatprep.subr.mxu0 0.0
        %5197 = vmatpush1.msra.mxu0 0.0
        %5198 = vmatprep.subr.mxu0 0.0
        %5199 = vmatpush1.msra.mxu0 0.0
        %5200 = vmatprep.subr.mxu0 0.0
        %5201 = vmatpush1.msra.mxu0 0.0
        %5202 = vmatprep.subr.mxu0 0.0
        %5203 = vmatpush1.msra.mxu0 0.0
        %5204 = vmatprep.subr.mxu0 0.0
        %5205 = vmatpush1.msra.mxu0 0.0
        %5206 = vmatprep.subr.mxu0 0.0
        %5207 = vmatpush1.msra.mxu0 0.0
        %5208 = vmatprep.subr.mxu0 0.0
        %5209 = vmatpush1.msra.mxu0 0.0
        %5210 = vmatprep.subr.mxu0 0.0
        %5211 = vmatpush1.msra.mxu0 0.0
        %5212 = vmatprep.subr.mxu0 0.0
        %5213 = vmatpush1.msra.mxu0 0.0
        %5214 = vmatprep.mubr.f32.mxu0 0.0
        %5215 = vmatmul.mubr.f32.gmra.mrb[0].mxu0 %v5014
        %v5216 = vpop.f32.mrb[0].mxu0
        %v5217 = vadd.f32 0.0, %v5216
        %v5218 = vpop.f32.mrb[0].mxu0
        %5219 = vmatprep.mubr.f32.mxu0 0.0
        %5220 = vmatmul.mubr.f32.gmra.mrb[0].mxu0 %v5017
        %v5221 = vpop.f32.mrb[0].mxu0
        %v5222 = vadd.f32 0.0, %v5221
        %v5223 = vpop.f32.mrb[0].mxu0
        %5224 = vmatprep.mubr.f32.mxu0 0.0
        %5225 = vmatmul.mubr.f32.gmra.mrb[0].mxu0 %v5020
        %v5226 = vpop.f32.mrb[0].mxu0
        %v5227 = vadd.f32 0.0, %v5226
        %v5228 = vpop.f32.mrb[0].mxu0
        %5229 = vmatprep.mubr.f32.mxu0 0.0
        %5230 = vmatmul.mubr.f32.gmra.mrb[0].mxu0 %v5023
        %v5231 = vpop.f32.mrb[0].mxu0
        %v5232 = vadd.f32 0.0, %v5231
        %v5233 = vpop.f32.mrb[0].mxu0
        %5234 = vmatprep.mubr.f32.mxu0 0.0
        %5235 = vmatmul.mubr.f32.gmra.mrb[0].mxu0 %v5026
        %v5236 = vpop.f32.mrb[0].mxu0
        %v5237 = vadd.f32 0.0, %v5236
        %v5238 = vpop.f32.mrb[0].mxu0
        %5239 = vmatprep.mubr.f32.mxu0 0.0
        %5240 = vmatmul.mubr.f32.gmra.mrb[0].mxu0 %v5029
        %v5241 = vpop.f32.mrb[0].mxu0
        %v5242 = vadd.f32 0.0, %v5241
        %v5243 = vpop.f32.mrb[0].mxu0
        %5244 = vmatprep.mubr.f32.mxu0 0.0
        %5245 = vmatmul.mubr.f32.gmra.mrb[0].mxu0 %v5032
        %v5246 = vpop.f32.mrb[0].mxu0
        %v5247 = vadd.f32 0.0, %v5246
        %v5248 = vpop.f32.mrb[0].mxu0
        %5249 = vmatprep.mubr.f32.mxu0 0.0
        %5250 = vmatmul.mubr.f32.gmra.mrb[0].mxu0 %v5035
        %v5251 = vpop.f32.mrb[0].mxu0
        %v5252 = vadd.f32 0.0, %v5251
        %v5253 = vpop.f32.mrb[0].mxu0
        %5254 = vdwg.mxu0
        %v5255 = vadd.f32 %v4579, %v5104
        %v5256 = vadd.f32 %v4580, %v5106
        %v5257 = vadd.f32 %v4581, %v5217
        %v5258 = vadd.f32 %v4582, %v5110
        %v5259 = vadd.f32 %v4583, %v5112
        %v5260 = vadd.f32 %v4584, %v5222
        %v5261 = vadd.f32 %v4585, %v5116
        %v5262 = vadd.f32 %v4586, %v5118
        %v5263 = vadd.f32 %v4587, %v5227
        %v5264 = vadd.f32 %v4588, %v5122
        %v5265 = vadd.f32 %v4589, %v5124
        %v5266 = vadd.f32 %v4590, %v5232
        %v5267 = vadd.f32 %v4591, %v5128
        %v5268 = vadd.f32 %v4592, %v5130
        %v5269 = vadd.f32 %v4593, %v5237
        %v5270 = vadd.f32 %v4594, %v5134
        %v5271 = vadd.f32 %v4595, %v5136
        %v5272 = vadd.f32 %v4596, %v5242
        %v5273 = vadd.f32 %v4597, %v5140
        %v5274 = vadd.f32 %v4598, %v5142
        %v5275 = vadd.f32 %v4599, %v5247
        %v5276 = vadd.f32 %v4600, %v5146
        %v5277 = vadd.f32 %v4601, %v5148
        %v5278 = vadd.f32 %v4602, %v5252
        %5279 = vrot.lane.b32.xlu0 %v1058, 64
        %v5280 = vpop.permute.xlu0 %5279
        %5281 = vrot.lane.b32.xlu0 %v1064, 64
        %v5282 = vpop.permute.xlu0 %5281
        %5283 = vrot.lane.b32.xlu0 %v1070, 64
        %v5284 = vpop.permute.xlu0 %5283
        %5285 = vrot.lane.b32.xlu0 %v1076, 64
        %v5286 = vpop.permute.xlu0 %5285
        %5287 = vrot.lane.b32.xlu0 %v1082, 64
        %v5288 = vpop.permute.xlu0 %5287
        %5289 = vrot.lane.b32.xlu0 %v1088, 64
        %v5290 = vpop.permute.xlu0 %5289
        %5291 = vrot.lane.b32.xlu0 %v1094, 64
        %v5292 = vpop.permute.xlu0 %5291
        %5293 = vrot.lane.b32.xlu0 %v1100, 64
        %v5294 = vpop.permute.xlu0 %5293
        %5295 = vrot.lane.b32.xlu0 %v1286, 64
        %v5296 = vpop.permute.xlu0 %5295
        %5297 = vrot.lane.b32.xlu0 %v1292, 64
        %v5298 = vpop.permute.xlu0 %5297
        %5299 = vrot.lane.b32.xlu0 %v1298, 64
        %v5300 = vpop.permute.xlu0 %5299
        %5301 = vrot.lane.b32.xlu0 %v1304, 64
        %v5302 = vpop.permute.xlu0 %5301
        %5303 = vrot.lane.b32.xlu0 %v1310, 64
        %v5304 = vpop.permute.xlu0 %5303
        %5305 = vrot.lane.b32.xlu0 %v1316, 64
        %v5306 = vpop.permute.xlu0 %5305
        %5307 = vrot.lane.b32.xlu0 %v1322, 64
        %v5308 = vpop.permute.xlu0 %5307
        %5309 = vrot.lane.b32.xlu0 %v1328, 64
        %v5310 = vpop.permute.xlu0 %5309
        %v5311 = vsel %vm1802, %v5280, 0
        %v5313 = vsel %vm1802, %v5282, 0
        %v5315 = vsel %vm1802, %v5284, 0
        %v5317 = vsel %vm1802, %v5286, 0
        %v5319 = vsel %vm1802, %v5288, 0
        %v5321 = vsel %vm1802, %v5290, 0
        %v5323 = vsel %vm1802, %v5292, 0
        %v5325 = vsel %vm1802, %v5294, 0
        %v5327 = vsel %vm1802, %v5296, 0
        %v5329 = vsel %vm1802, %v5298, 0
        %v5331 = vsel %vm1802, %v5300, 0
        %v5333 = vsel %vm1802, %v5302, 0
        %v5335 = vsel %vm1802, %v5304, 0
        %v5337 = vsel %vm1802, %v5306, 0
        %v5339 = vsel %vm1802, %v5308, 0
        %v5341 = vsel %vm1802, %v5310, 0
        %5343 = vmatprep.subr.mxu0 0.0
        %5344 = vmatpush1.xpose.msra.mxu0 %v5327
        %5345 = vmatprep.subr.mxu0 0.0
        %5346 = vmatpush1.xpose.msra.mxu0 %v5329
        %5347 = vmatprep.subr.mxu0 0.0
        %5348 = vmatpush1.xpose.msra.mxu0 %v5331
        %5349 = vmatprep.subr.mxu0 0.0
        %5350 = vmatpush1.xpose.msra.mxu0 %v5333
        %5351 = vmatprep.subr.mxu0 0.0
        %5352 = vmatpush1.xpose.msra.mxu0 %v5335
        %5353 = vmatprep.subr.mxu0 0.0
        %5354 = vmatpush1.xpose.msra.mxu0 %v5337
        %5355 = vmatprep.subr.mxu0 0.0
        %5356 = vmatpush1.xpose.msra.mxu0 %v5339
        %5357 = vmatprep.subr.mxu0 0.0
        %5358 = vmatpush1.xpose.msra.mxu0 %v5341
        %5359 = vmatprep.subr.mxu0 0.0
        %5360 = vmatpush1.xpose.msra.mxu0 0.0
        %5361 = vmatprep.subr.mxu0 0.0
        %5362 = vmatpush1.xpose.msra.mxu0 0.0
        %5363 = vmatprep.subr.mxu0 0.0
        %5364 = vmatpush1.xpose.msra.mxu0 0.0
        %5365 = vmatprep.subr.mxu0 0.0
        %5366 = vmatpush1.xpose.msra.mxu0 0.0
        %5367 = vmatprep.subr.mxu0 0.0
        %5368 = vmatpush1.xpose.msra.mxu0 0.0
        %5369 = vmatprep.subr.mxu0 0.0
        %5370 = vmatpush1.xpose.msra.mxu0 0.0
        %5371 = vmatprep.subr.mxu0 0.0
        %5372 = vmatpush1.xpose.msra.mxu0 0.0
        %5373 = vmatprep.subr.mxu0 0.0
        %5374 = vmatpush1.xpose.msra.mxu0 0.0
        %5375 = vmatprep.subr.mxu0 0.0
        %5376 = vmatpush1.xpose.msra.mxu0 0.0
        %5377 = vmatprep.subr.mxu0 0.0
        %5378 = vmatpush1.xpose.msra.mxu0 0.0
        %5379 = vmatprep.subr.mxu0 0.0
        %5380 = vmatpush1.xpose.msra.mxu0 0.0
        %5381 = vmatprep.subr.mxu0 0.0
        %5382 = vmatpush1.xpose.msra.mxu0 0.0
        %5383 = vmatprep.subr.mxu0 0.0
        %5384 = vmatpush1.xpose.msra.mxu0 0.0
        %5385 = vmatprep.subr.mxu0 0.0
        %5386 = vmatpush1.xpose.msra.mxu0 0.0
        %5387 = vmatprep.subr.mxu0 0.0
        %5388 = vmatpush1.xpose.msra.mxu0 0.0
        %5389 = vmatprep.subr.mxu0 0.0
        %5390 = vmatpush1.xpose.msra.mxu0 0.0
        %5391 = vmatprep.subr.mxu0 0.0
        %5392 = vmatpush1.xpose.msra.mxu0 0.0
        %5393 = vmatprep.subr.mxu0 0.0
        %5394 = vmatpush1.xpose.msra.mxu0 0.0
        %5395 = vmatprep.subr.mxu0 0.0
        %5396 = vmatpush1.xpose.msra.mxu0 0.0
        %5397 = vmatprep.subr.mxu0 0.0
        %5398 = vmatpush1.xpose.msra.mxu0 0.0
        %5399 = vmatprep.subr.mxu0 0.0
        %5400 = vmatpush1.xpose.msra.mxu0 0.0
        %5401 = vmatprep.subr.mxu0 0.0
        %5402 = vmatpush1.xpose.msra.mxu0 0.0
        %5403 = vmatprep.subr.mxu0 0.0
        %5404 = vmatpush1.xpose.msra.mxu0 0.0
        %5405 = vmatprep.subr.mxu0 0.0
        %5406 = vmatpush1.xpose.msra.mxu0 0.0
        %5407 = vmatprep.mubr.f32.mxu0 0.0
        %5408 = vmatmul.mubr.f32.gmra.mrb[0].mxu0 %v5311
        %v5409 = vpop.f32.mrb[0].mxu0
        %v5410 = vadd.f32 0.0, %v5409
        %v5411 = vpop.f32.mrb[0].mxu0
        %5412 = vmatprep.mubr.f32.mxu0 0.0
        %5413 = vmatmul.mubr.f32.gmra.mrb[0].mxu0 %v5313
        %v5414 = vpop.f32.mrb[0].mxu0
        %v5415 = vadd.f32 0.0, %v5414
        %v5416 = vpop.f32.mrb[0].mxu0
        %5417 = vmatprep.mubr.f32.mxu0 0.0
        %5418 = vmatmul.mubr.f32.gmra.mrb[0].mxu0 %v5315
        %v5419 = vpop.f32.mrb[0].mxu0
        %v5420 = vadd.f32 0.0, %v5419
        %v5421 = vpop.f32.mrb[0].mxu0
        %5422 = vmatprep.mubr.f32.mxu0 0.0
        %5423 = vmatmul.mubr.f32.gmra.mrb[0].mxu0 %v5317
        %v5424 = vpop.f32.mrb[0].mxu0
        %v5425 = vadd.f32 0.0, %v5424
        %v5426 = vpop.f32.mrb[0].mxu0
        %5427 = vmatprep.mubr.f32.mxu0 0.0
        %5428 = vmatmul.mubr.f32.gmra.mrb[0].mxu0 %v5319
        %v5429 = vpop.f32.mrb[0].mxu0
        %v5430 = vadd.f32 0.0, %v5429
        %v5431 = vpop.f32.mrb[0].mxu0
        %5432 = vmatprep.mubr.f32.mxu0 0.0
        %5433 = vmatmul.mubr.f32.gmra.mrb[0].mxu0 %v5321
        %v5434 = vpop.f32.mrb[0].mxu0
        %v5435 = vadd.f32 0.0, %v5434
        %v5436 = vpop.f32.mrb[0].mxu0
        %5437 = vmatprep.mubr.f32.mxu0 0.0
        %5438 = vmatmul.mubr.f32.gmra.mrb[0].mxu0 %v5323
        %v5439 = vpop.f32.mrb[0].mxu0
        %v5440 = vadd.f32 0.0, %v5439
        %v5441 = vpop.f32.mrb[0].mxu0
        %5442 = vmatprep.mubr.f32.mxu0 0.0
        %5443 = vmatmul.mubr.f32.gmra.mrb[0].mxu0 %v5325
        %v5444 = vpop.f32.mrb[0].mxu0
        %v5445 = vadd.f32 0.0, %v5444
        %v5446 = vpop.f32.mrb[0].mxu0
        %5447 = vdwg.mxu0
        %v5448 = vmul.f32 %v5410, 0.05103104
        %v5449 = vmul.f32 %v5415, 0.05103104
        %v5450 = vmul.f32 %v5420, 0.05103104
        %v5451 = vmul.f32 %v5425, 0.05103104
        %v5452 = vmul.f32 %v5430, 0.05103104
        %v5453 = vmul.f32 %v5435, 0.05103104
        %v5454 = vmul.f32 %v5440, 0.05103104
        %v5455 = vmul.f32 %v5445, 0.05103104
        %v5456 = vsel %vm1777, %v5448, -inf
        %v5457 = vsel %vm1778, %v5449, -inf
        %v5458 = vsel %vm1779, %v5450, -inf
        %v5459 = vsel %vm1780, %v5451, -inf
        %v5460 = vsel %vm1781, %v5452, -inf
        %v5461 = vsel %vm1782, %v5453, -inf
        %v5462 = vsel %vm1783, %v5454, -inf
        %v5463 = vsel %vm1784, %v5455, -inf
        %v5464 = vsel %vm1802, %v5456, -inf
        %5465 = vmax.xlane.f32.xlu0 %v5464
        %v5466 = vpop.xlane.xlu0 %5465
        %v5467 = vsel %vm1802, %v5457, -inf
        %5468 = vmax.xlane.f32.xlu0 %v5467
        %v5469 = vpop.xlane.xlu0 %5468
        %v5470 = vsel %vm1802, %v5458, -inf
        %5471 = vmax.xlane.f32.xlu0 %v5470
        %v5472 = vpop.xlane.xlu0 %5471
        %v5473 = vsel %vm1802, %v5459, -inf
        %5474 = vmax.xlane.f32.xlu0 %v5473
        %v5475 = vpop.xlane.xlu0 %5474
        %v5476 = vsel %vm1802, %v5460, -inf
        %5477 = vmax.xlane.f32.xlu0 %v5476
        %v5478 = vpop.xlane.xlu0 %5477
        %v5479 = vsel %vm1802, %v5461, -inf
        %5480 = vmax.xlane.f32.xlu0 %v5479
        %v5481 = vpop.xlane.xlu0 %5480
        %v5482 = vsel %vm1802, %v5462, -inf
        %5483 = vmax.xlane.f32.xlu0 %v5482
        %v5484 = vpop.xlane.xlu0 %5483
        %v5485 = vsel %vm1802, %v5463, -inf
        %5486 = vmax.xlane.f32.xlu0 %v5485
        %v5487 = vpop.xlane.xlu0 %5486
        %v5488 = vsub.f32 %v5456, %v5466
        %v5489 = vsub.f32 %v5457, %v5469
        %v5490 = vsub.f32 %v5458, %v5472
        %v5491 = vsub.f32 %v5459, %v5475
        %v5492 = vsub.f32 %v5460, %v5478
        %v5493 = vsub.f32 %v5461, %v5481
        %v5494 = vsub.f32 %v5462, %v5484
        %v5495 = vsub.f32 %v5463, %v5487
        %v5496 = vmul.f32 %v5488, 1.442695
        %v5497 = vpow.pop %v5496
        %v5498 = vmul.f32 %v5489, 1.442695
        %v5499 = vpow.pop %v5498
        %v5500 = vmul.f32 %v5490, 1.442695
        %v5501 = vpow.pop %v5500
        %v5502 = vmul.f32 %v5491, 1.442695
        %v5503 = vpow.pop %v5502
        %v5504 = vmul.f32 %v5492, 1.442695
        %v5505 = vpow.pop %v5504
        %v5506 = vmul.f32 %v5493, 1.442695
        %v5507 = vpow.pop %v5506
        %v5508 = vmul.f32 %v5494, 1.442695
        %v5509 = vpow.pop %v5508
        %v5510 = vmul.f32 %v5495, 1.442695
        %v5511 = vpow.pop %v5510
        %v5512 = vsel %vm1802, %v5497, 0.0
        %5513 = vadd.xlane.f32.xlu0 %v5512
        %v5514 = vpop.xlane.xlu0 %5513
        %v5515 = vsel %vm1802, %v5499, 0.0
        %5516 = vadd.xlane.f32.xlu0 %v5515
        %v5517 = vpop.xlane.xlu0 %5516
        %v5518 = vsel %vm1802, %v5501, 0.0
        %5519 = vadd.xlane.f32.xlu0 %v5518
        %v5520 = vpop.xlane.xlu0 %5519
        %v5521 = vsel %vm1802, %v5503, 0.0
        %5522 = vadd.xlane.f32.xlu0 %v5521
        %v5523 = vpop.xlane.xlu0 %5522
        %v5524 = vsel %vm1802, %v5505, 0.0
        %5525 = vadd.xlane.f32.xlu0 %v5524
        %v5526 = vpop.xlane.xlu0 %5525
        %v5527 = vsel %vm1802, %v5507, 0.0
        %5528 = vadd.xlane.f32.xlu0 %v5527
        %v5529 = vpop.xlane.xlu0 %5528
        %v5530 = vsel %vm1802, %v5509, 0.0
        %5531 = vadd.xlane.f32.xlu0 %v5530
        %v5532 = vpop.xlane.xlu0 %5531
        %v5533 = vsel %vm1802, %v5511, 0.0
        %5534 = vadd.xlane.f32.xlu0 %v5533
        %v5535 = vpop.xlane.xlu0 %5534
        %v5536 = vrcp.pop %v5514
        %v5537 = vrcp.pop %v5517
        %v5538 = vrcp.pop %v5520
        %v5539 = vrcp.pop %v5523
        %v5540 = vrcp.pop %v5526
        %v5541 = vrcp.pop %v5529
        %v5542 = vrcp.pop %v5532
        %v5543 = vrcp.pop %v5535
        %v5544 = vmul.f32 %v5497, %v5536
        %v5545 = vmul.f32 %v5499, %v5537
        %v5546 = vmul.f32 %v5501, %v5538
        %v5547 = vmul.f32 %v5503, %v5539
        %v5548 = vmul.f32 %v5505, %v5540
        %v5549 = vmul.f32 %v5507, %v5541
        %v5550 = vmul.f32 %v5509, %v5542
        %v5551 = vmul.f32 %v5511, %v5543
        %5560 = vrot.lane.b32.xlu0 %v1728, 64
        %v5561 = vpop.permute.xlu0 %5560
        %5562 = vrot.lane.b32.xlu0 %v1733, 64
        %v5563 = vpop.permute.xlu0 %5562
        %5564 = vrot.lane.b32.xlu0 %v1738, 64
        %v5565 = vpop.permute.xlu0 %5564
        %5566 = vrot.lane.b32.xlu0 %v1743, 64
        %v5567 = vpop.permute.xlu0 %5566
        %5568 = vrot.lane.b32.xlu0 %v1748, 64
        %v5569 = vpop.permute.xlu0 %5568
        %5570 = vrot.lane.b32.xlu0 %v1753, 64
        %v5571 = vpop.permute.xlu0 %5570
        %5572 = vrot.lane.b32.xlu0 %v1758, 64
        %v5573 = vpop.permute.xlu0 %5572
        %5574 = vrot.lane.b32.xlu0 %v1763, 64
        %v5575 = vpop.permute.xlu0 %5574
        %v5585 = vsel %vm1802, %v5544, 0
        %v5588 = vsel %vm1802, %v5545, 0
        %v5591 = vsel %vm1802, %v5546, 0
        %v5594 = vsel %vm1802, %v5547, 0
        %v5597 = vsel %vm1802, %v5548, 0
        %v5600 = vsel %vm1802, %v5549, 0
        %v5603 = vsel %vm1802, %v5550, 0
        %v5606 = vsel %vm1802, %v5551, 0
        %5608 = vmatprep.subr.mxu0 0.0
        %5609 = vmatpush1.msra.mxu0 %v5561
        %5610 = vmatprep.subr.mxu0 0.0
        %5611 = vmatpush1.msra.mxu0 %v5563
        %5612 = vmatprep.subr.mxu0 0.0
        %5613 = vmatpush1.msra.mxu0 %v5565
        %5614 = vmatprep.subr.mxu0 0.0
        %5615 = vmatpush1.msra.mxu0 %v5567
        %5616 = vmatprep.subr.mxu0 0.0
        %5617 = vmatpush1.msra.mxu0 %v5569
        %5618 = vmatprep.subr.mxu0 0.0
        %5619 = vmatpush1.msra.mxu0 %v5571
        %5620 = vmatprep.subr.mxu0 0.0
        %5621 = vmatpush1.msra.mxu0 %v5573
        %5622 = vmatprep.subr.mxu0 0.0
        %5623 = vmatpush1.msra.mxu0 %v5575
        %5624 = vmatprep.subr.mxu0 0.0
        %5625 = vmatpush1.msra.mxu0 0.0
        %5626 = vmatprep.subr.mxu0 0.0
        %5627 = vmatpush1.msra.mxu0 0.0
        %5628 = vmatprep.subr.mxu0 0.0
        %5629 = vmatpush1.msra.mxu0 0.0
        %5630 = vmatprep.subr.mxu0 0.0
        %5631 = vmatpush1.msra.mxu0 0.0
        %5632 = vmatprep.subr.mxu0 0.0
        %5633 = vmatpush1.msra.mxu0 0.0
        %5634 = vmatprep.subr.mxu0 0.0
        %5635 = vmatpush1.msra.mxu0 0.0
        %5636 = vmatprep.subr.mxu0 0.0
        %5637 = vmatpush1.msra.mxu0 0.0
        %5638 = vmatprep.subr.mxu0 0.0
        %5639 = vmatpush1.msra.mxu0 0.0
        %5640 = vmatprep.subr.mxu0 0.0
        %5641 = vmatpush1.msra.mxu0 0.0
        %5642 = vmatprep.subr.mxu0 0.0
        %5643 = vmatpush1.msra.mxu0 0.0
        %5644 = vmatprep.subr.mxu0 0.0
        %5645 = vmatpush1.msra.mxu0 0.0
        %5646 = vmatprep.subr.mxu0 0.0
        %5647 = vmatpush1.msra.mxu0 0.0
        %5648 = vmatprep.subr.mxu0 0.0
        %5649 = vmatpush1.msra.mxu0 0.0
        %5650 = vmatprep.subr.mxu0 0.0
        %5651 = vmatpush1.msra.mxu0 0.0
        %5652 = vmatprep.subr.mxu0 0.0
        %5653 = vmatpush1.msra.mxu0 0.0
        %5654 = vmatprep.subr.mxu0 0.0
        %5655 = vmatpush1.msra.mxu0 0.0
        %5656 = vmatprep.subr.mxu0 0.0
        %5657 = vmatpush1.msra.mxu0 0.0
        %5658 = vmatprep.subr.mxu0 0.0
        %5659 = vmatpush1.msra.mxu0 0.0
        %5660 = vmatprep.subr.mxu0 0.0
        %5661 = vmatpush1.msra.mxu0 0.0
        %5662 = vmatprep.subr.mxu0 0.0
        %5663 = vmatpush1.msra.mxu0 0.0
        %5664 = vmatprep.subr.mxu0 0.0
        %5665 = vmatpush1.msra.mxu0 0.0
        %5666 = vmatprep.subr.mxu0 0.0
        %5667 = vmatpush1.msra.mxu0 0.0
        %5668 = vmatprep.subr.mxu0 0.0
        %5669 = vmatpush1.msra.mxu0 0.0
        %5670 = vmatprep.subr.mxu0 0.0
        %5671 = vmatpush1.msra.mxu0 0.0
        %5672 = vmatprep.mubr.f32.mxu0 0.0
        %5673 = vmatmul.mubr.f32.gmra.mrb[0].mxu0 %v5585
        %v5674 = vpop.f32.mrb[0].mxu0
        %v5675 = vadd.f32 0.0, %v5674
        %v5676 = vpop.f32.mrb[0].mxu0
        %5677 = vmatprep.mubr.f32.mxu0 0.0
        %5678 = vmatmul.mubr.f32.gmra.mrb[0].mxu0 %v5588
        %v5679 = vpop.f32.mrb[0].mxu0
        %v5680 = vadd.f32 0.0, %v5679
        %v5681 = vpop.f32.mrb[0].mxu0
        %5682 = vmatprep.mubr.f32.mxu0 0.0
        %5683 = vmatmul.mubr.f32.gmra.mrb[0].mxu0 %v5591
        %v5684 = vpop.f32.mrb[0].mxu0
        %v5685 = vadd.f32 0.0, %v5684
        %v5686 = vpop.f32.mrb[0].mxu0
        %5687 = vmatprep.mubr.f32.mxu0 0.0
        %5688 = vmatmul.mubr.f32.gmra.mrb[0].mxu0 %v5594
        %v5689 = vpop.f32.mrb[0].mxu0
        %v5690 = vadd.f32 0.0, %v5689
        %v5691 = vpop.f32.mrb[0].mxu0
        %5692 = vmatprep.mubr.f32.mxu0 0.0
        %5693 = vmatmul.mubr.f32.gmra.mrb[0].mxu0 %v5597
        %v5694 = vpop.f32.mrb[0].mxu0
        %v5695 = vadd.f32 0.0, %v5694
        %v5696 = vpop.f32.mrb[0].mxu0
        %5697 = vmatprep.mubr.f32.mxu0 0.0
        %5698 = vmatmul.mubr.f32.gmra.mrb[0].mxu0 %v5600
        %v5699 = vpop.f32.mrb[0].mxu0
        %v5700 = vadd.f32 0.0, %v5699
        %v5701 = vpop.f32.mrb[0].mxu0
        %5702 = vmatprep.mubr.f32.mxu0 0.0
        %5703 = vmatmul.mubr.f32.gmra.mrb[0].mxu0 %v5603
        %v5704 = vpop.f32.mrb[0].mxu0
        %v5705 = vadd.f32 0.0, %v5704
        %v5706 = vpop.f32.mrb[0].mxu0
        %5707 = vmatprep.mubr.f32.mxu0 0.0
        %5708 = vmatmul.mubr.f32.gmra.mrb[0].mxu0 %v5606
        %v5709 = vpop.f32.mrb[0].mxu0
        %v5710 = vadd.f32 0.0, %v5709
        %v5711 = vpop.f32.mrb[0].mxu0
        %5712 = vdwg.mxu0
        %v5713 = vld [vmem:[%s2 + $0x3c0] sm:$0xff]
        %v5714 = vld [vmem:[%s2 + $0x3c8] sm:$0xff]
        %v5715 = vld [vmem:[%s2 + $0x3d0] sm:$0xff]
        %v5716 = vld [vmem:[%s2 + $0x3d8] sm:$0xff]
        %v5717 = vld [vmem:[%s2 + $0x3e0] sm:$0xff]
        %v5718 = vld [vmem:[%s2 + $0x3e8] sm:$0xff]
        %v5719 = vld [vmem:[%s2 + $0x3f0] sm:$0xff]
        %v5720 = vld [vmem:[%s2 + $0x3f8] sm:$0xff]
        %v5721 = vld [vmem:[%s2 + $0x400] sm:$0xff]
        %v5722 = vld [vmem:[%s2 + $0x408] sm:$0xff]
        %v5723 = vld [vmem:[%s2 + $0x410] sm:$0xff]
        %v5724 = vld [vmem:[%s2 + $0x418] sm:$0xff]
        %v5725 = vld [vmem:[%s2 + $0x420] sm:$0xff]
        %v5726 = vld [vmem:[%s2 + $0x428] sm:$0xff]
        %v5727 = vld [vmem:[%s2 + $0x430] sm:$0xff]
        %v5728 = vld [vmem:[%s2 + $0x438] sm:$0xff]
        %v5729 = vld [vmem:[%s2 + $0x440] sm:$0xff]
        %v5730 = vld [vmem:[%s2 + $0x448] sm:$0xff]
        %v5731 = vld [vmem:[%s2 + $0x450] sm:$0xff]
        %v5732 = vld [vmem:[%s2 + $0x458] sm:$0xff]
        %v5733 = vld [vmem:[%s2 + $0x460] sm:$0xff]
        %v5734 = vld [vmem:[%s2 + $0x468] sm:$0xff]
        %v5735 = vld [vmem:[%s2 + $0x470] sm:$0xff]
        %v5736 = vld [vmem:[%s2 + $0x478] sm:$0xff]
        %v5738 = vsel %vm1802, %v5675, 0
        %v5741 = vsel %vm1802, %v5680, 0
        %v5744 = vsel %vm1802, %v5685, 0
        %v5747 = vsel %vm1802, %v5690, 0
        %v5750 = vsel %vm1802, %v5695, 0
        %v5753 = vsel %vm1802, %v5700, 0
        %v5756 = vsel %vm1802, %v5705, 0
        %v5759 = vsel %vm1802, %v5710, 0
        %5761 = vmatprep.subr.mxu0 %v5714
        %5762 = vmatpush1.msra.mxu0 %v5713
        %5763 = vmatprep.subr.mxu0 %v5717
        %5764 = vmatpush1.msra.mxu0 %v5716
        %5765 = vmatprep.subr.mxu0 %v5720
        %5766 = vmatpush1.msra.mxu0 %v5719
        %5767 = vmatprep.subr.mxu0 %v5723
        %5768 = vmatpush1.msra.mxu0 %v5722
        %5769 = vmatprep.subr.mxu0 %v5726
        %5770 = vmatpush1.msra.mxu0 %v5725
        %5771 = vmatprep.subr.mxu0 %v5729
        %5772 = vmatpush1.msra.mxu0 %v5728
        %5773 = vmatprep.subr.mxu0 %v5732
        %5774 = vmatpush1.msra.mxu0 %v5731
        %5775 = vmatprep.subr.mxu0 %v5735
        %5776 = vmatpush1.msra.mxu0 %v5734
        %5777 = vmatprep.subr.mxu0 0.0
        %5778 = vmatpush1.msra.mxu0 0.0
        %5779 = vmatprep.subr.mxu0 0.0
        %5780 = vmatpush1.msra.mxu0 0.0
        %5781 = vmatprep.subr.mxu0 0.0
        %5782 = vmatpush1.msra.mxu0 0.0
        %5783 = vmatprep.subr.mxu0 0.0
        %5784 = vmatpush1.msra.mxu0 0.0
        %5785 = vmatprep.subr.mxu0 0.0
        %5786 = vmatpush1.msra.mxu0 0.0
        %5787 = vmatprep.subr.mxu0 0.0
        %5788 = vmatpush1.msra.mxu0 0.0
        %5789 = vmatprep.subr.mxu0 0.0
        %5790 = vmatpush1.msra.mxu0 0.0
        %5791 = vmatprep.subr.mxu0 0.0
        %5792 = vmatpush1.msra.mxu0 0.0
        %5793 = vmatprep.subr.mxu0 0.0
        %5794 = vmatpush1.msra.mxu0 0.0
        %5795 = vmatprep.subr.mxu0 0.0
        %5796 = vmatpush1.msra.mxu0 0.0
        %5797 = vmatprep.subr.mxu0 0.0
        %5798 = vmatpush1.msra.mxu0 0.0
        %5799 = vmatprep.subr.mxu0 0.0
        %5800 = vmatpush1.msra.mxu0 0.0
        %5801 = vmatprep.subr.mxu0 0.0
        %5802 = vmatpush1.msra.mxu0 0.0
        %5803 = vmatprep.subr.mxu0 0.0
        %5804 = vmatpush1.msra.mxu0 0.0
        %5805 = vmatprep.subr.mxu0 0.0
        %5806 = vmatpush1.msra.mxu0 0.0
        %5807 = vmatprep.subr.mxu0 0.0
        %5808 = vmatpush1.msra.mxu0 0.0
        %5809 = vmatprep.subr.mxu0 0.0
        %5810 = vmatpush1.msra.mxu0 0.0
        %5811 = vmatprep.subr.mxu0 0.0
        %5812 = vmatpush1.msra.mxu0 0.0
        %5813 = vmatprep.subr.mxu0 0.0
        %5814 = vmatpush1.msra.mxu0 0.0
        %5815 = vmatprep.subr.mxu0 0.0
        %5816 = vmatpush1.msra.mxu0 0.0
        %5817 = vmatprep.subr.mxu0 0.0
        %5818 = vmatpush1.msra.mxu0 0.0
        %5819 = vmatprep.subr.mxu0 0.0
        %5820 = vmatpush1.msra.mxu0 0.0
        %5821 = vmatprep.subr.mxu0 0.0
        %5822 = vmatpush1.msra.mxu0 0.0
        %5823 = vmatprep.subr.mxu0 0.0
        %5824 = vmatpush1.msra.mxu0 0.0
        %5825 = vmatprep.mubr.f32.mxu0 0.0
        %5826 = vmatmul.mubr.f32.gmra.mrb[0].mxu0 %v5738
        %v5827 = vpop.f32.mrb[0].mxu0
        %v5828 = vadd.f32 0.0, %v5827
        %v5829 = vpop.f32.mrb[0].mxu0
        %v5830 = vadd.f32 0.0, %v5829
        %5831 = vmatprep.mubr.f32.mxu0 0.0
        %5832 = vmatmul.mubr.f32.gmra.mrb[0].mxu0 %v5741
        %v5833 = vpop.f32.mrb[0].mxu0
        %v5834 = vadd.f32 0.0, %v5833
        %v5835 = vpop.f32.mrb[0].mxu0
        %v5836 = vadd.f32 0.0, %v5835
        %5837 = vmatprep.mubr.f32.mxu0 0.0
        %5838 = vmatmul.mubr.f32.gmra.mrb[0].mxu0 %v5744
        %v5839 = vpop.f32.mrb[0].mxu0
        %v5840 = vadd.f32 0.0, %v5839
        %v5841 = vpop.f32.mrb[0].mxu0
        %v5842 = vadd.f32 0.0, %v5841
        %5843 = vmatprep.mubr.f32.mxu0 0.0
        %5844 = vmatmul.mubr.f32.gmra.mrb[0].mxu0 %v5747
        %v5845 = vpop.f32.mrb[0].mxu0
        %v5846 = vadd.f32 0.0, %v5845
        %v5847 = vpop.f32.mrb[0].mxu0
        %v5848 = vadd.f32 0.0, %v5847
        %5849 = vmatprep.mubr.f32.mxu0 0.0
        %5850 = vmatmul.mubr.f32.gmra.mrb[0].mxu0 %v5750
        %v5851 = vpop.f32.mrb[0].mxu0
        %v5852 = vadd.f32 0.0, %v5851
        %v5853 = vpop.f32.mrb[0].mxu0
        %v5854 = vadd.f32 0.0, %v5853
        %5855 = vmatprep.mubr.f32.mxu0 0.0
        %5856 = vmatmul.mubr.f32.gmra.mrb[0].mxu0 %v5753
        %v5857 = vpop.f32.mrb[0].mxu0
        %v5858 = vadd.f32 0.0, %v5857
        %v5859 = vpop.f32.mrb[0].mxu0
        %v5860 = vadd.f32 0.0, %v5859
        %5861 = vmatprep.mubr.f32.mxu0 0.0
        %5862 = vmatmul.mubr.f32.gmra.mrb[0].mxu0 %v5756
        %v5863 = vpop.f32.mrb[0].mxu0
        %v5864 = vadd.f32 0.0, %v5863
        %v5865 = vpop.f32.mrb[0].mxu0
        %v5866 = vadd.f32 0.0, %v5865
        %5867 = vmatprep.mubr.f32.mxu0 0.0
        %5868 = vmatmul.mubr.f32.gmra.mrb[0].mxu0 %v5759
        %v5869 = vpop.f32.mrb[0].mxu0
        %v5870 = vadd.f32 0.0, %v5869
        %v5871 = vpop.f32.mrb[0].mxu0
        %v5872 = vadd.f32 0.0, %v5871
        %5873 = vdwg.mxu0
        %5874 = vmatprep.subr.mxu0 0.0
        %5875 = vmatpush1.msra.mxu0 %v5715
        %5876 = vmatprep.subr.mxu0 0.0
        %5877 = vmatpush1.msra.mxu0 %v5718
        %5878 = vmatprep.subr.mxu0 0.0
        %5879 = vmatpush1.msra.mxu0 %v5721
        %5880 = vmatprep.subr.mxu0 0.0
        %5881 = vmatpush1.msra.mxu0 %v5724
        %5882 = vmatprep.subr.mxu0 0.0
        %5883 = vmatpush1.msra.mxu0 %v5727
        %5884 = vmatprep.subr.mxu0 0.0
        %5885 = vmatpush1.msra.mxu0 %v5730
        %5886 = vmatprep.subr.mxu0 0.0
        %5887 = vmatpush1.msra.mxu0 %v5733
        %5888 = vmatprep.subr.mxu0 0.0
        %5889 = vmatpush1.msra.mxu0 %v5736
        %5890 = vmatprep.subr.mxu0 0.0
        %5891 = vmatpush1.msra.mxu0 0.0
        %5892 = vmatprep.subr.mxu0 0.0
        %5893 = vmatpush1.msra.mxu0 0.0
        %5894 = vmatprep.subr.mxu0 0.0
        %5895 = vmatpush1.msra.mxu0 0.0
        %5896 = vmatprep.subr.mxu0 0.0
        %5897 = vmatpush1.msra.mxu0 0.0
        %5898 = vmatprep.subr.mxu0 0.0
        %5899 = vmatpush1.msra.mxu0 0.0
        %5900 = vmatprep.subr.mxu0 0.0
        %5901 = vmatpush1.msra.mxu0 0.0
        %5902 = vmatprep.subr.mxu0 0.0
        %5903 = vmatpush1.msra.mxu0 0.0
        %5904 = vmatprep.subr.mxu0 0.0
        %5905 = vmatpush1.msra.mxu0 0.0
        %5906 = vmatprep.subr.mxu0 0.0
        %5907 = vmatpush1.msra.mxu0 0.0
        %5908 = vmatprep.subr.mxu0 0.0
        %5909 = vmatpush1.msra.mxu0 0.0
        %5910 = vmatprep.subr.mxu0 0.0
        %5911 = vmatpush1.msra.mxu0 0.0
        %5912 = vmatprep.subr.mxu0 0.0
        %5913 = vmatpush1.msra.mxu0 0.0
        %5914 = vmatprep.subr.mxu0 0.0
        %5915 = vmatpush1.msra.mxu0 0.0
        %5916 = vmatprep.subr.mxu0 0.0
        %5917 = vmatpush1.msra.mxu0 0.0
        %5918 = vmatprep.subr.mxu0 0.0
        %5919 = vmatpush1.msra.mxu0 0.0
        %5920 = vmatprep.subr.mxu0 0.0
        %5921 = vmatpush1.msra.mxu0 0.0
        %5922 = vmatprep.subr.mxu0 0.0
        %5923 = vmatpush1.msra.mxu0 0.0
        %5924 = vmatprep.subr.mxu0 0.0
        %5925 = vmatpush1.msra.mxu0 0.0
        %5926 = vmatprep.subr.mxu0 0.0
        %5927 = vmatpush1.msra.mxu0 0.0
        %5928 = vmatprep.subr.mxu0 0.0
        %5929 = vmatpush1.msra.mxu0 0.0
        %5930 = vmatprep.subr.mxu0 0.0
        %5931 = vmatpush1.msra.mxu0 0.0
        %5932 = vmatprep.subr.mxu0 0.0
        %5933 = vmatpush1.msra.mxu0 0.0
        %5934 = vmatprep.subr.mxu0 0.0
        %5935 = vmatpush1.msra.mxu0 0.0
        %5936 = vmatprep.subr.mxu0 0.0
        %5937 = vmatpush1.msra.mxu0 0.0
        %5938 = vmatprep.mubr.f32.mxu0 0.0
        %5939 = vmatmul.mubr.f32.gmra.mrb[0].mxu0 %v5738
        %v5940 = vpop.f32.mrb[0].mxu0
        %v5941 = vadd.f32 0.0, %v5940
        %v5942 = vpop.f32.mrb[0].mxu0
        %5943 = vmatprep.mubr.f32.mxu0 0.0
        %5944 = vmatmul.mubr.f32.gmra.mrb[0].mxu0 %v5741
        %v5945 = vpop.f32.mrb[0].mxu0
        %v5946 = vadd.f32 0.0, %v5945
        %v5947 = vpop.f32.mrb[0].mxu0
        %5948 = vmatprep.mubr.f32.mxu0 0.0
        %5949 = vmatmul.mubr.f32.gmra.mrb[0].mxu0 %v5744
        %v5950 = vpop.f32.mrb[0].mxu0
        %v5951 = vadd.f32 0.0, %v5950
        %v5952 = vpop.f32.mrb[0].mxu0
        %5953 = vmatprep.mubr.f32.mxu0 0.0
        %5954 = vmatmul.mubr.f32.gmra.mrb[0].mxu0 %v5747
        %v5955 = vpop.f32.mrb[0].mxu0
        %v5956 = vadd.f32 0.0, %v5955
        %v5957 = vpop.f32.mrb[0].mxu0
        %5958 = vmatprep.mubr.f32.mxu0 0.0
        %5959 = vmatmul.mubr.f32.gmra.mrb[0].mxu0 %v5750
        %v5960 = vpop.f32.mrb[0].mxu0
        %v5961 = vadd.f32 0.0, %v5960
        %v5962 = vpop.f32.mrb[0].mxu0
        %5963 = vmatprep.mubr.f32.mxu0 0.0
        %5964 = vmatmul.mubr.f32.gmra.mrb[0].mxu0 %v5753
        %v5965 = vpop.f32.mrb[0].mxu0
        %v5966 = vadd.f32 0.0, %v5965
        %v5967 = vpop.f32.mrb[0].mxu0
        %5968 = vmatprep.mubr.f32.mxu0 0.0
        %5969 = vmatmul.mubr.f32.gmra.mrb[0].mxu0 %v5756
        %v5970 = vpop.f32.mrb[0].mxu0
        %v5971 = vadd.f32 0.0, %v5970
        %v5972 = vpop.f32.mrb[0].mxu0
        %5973 = vmatprep.mubr.f32.mxu0 0.0
        %5974 = vmatmul.mubr.f32.gmra.mrb[0].mxu0 %v5759
        %v5975 = vpop.f32.mrb[0].mxu0
        %v5976 = vadd.f32 0.0, %v5975
        %v5977 = vpop.f32.mrb[0].mxu0
        %5978 = vdwg.mxu0
        %v5979 = vadd.f32 %v5255, %v5828
        %v5980 = vadd.f32 %v5256, %v5830
        %v5981 = vadd.f32 %v5257, %v5941
        %v5982 = vadd.f32 %v5258, %v5834
        %v5983 = vadd.f32 %v5259, %v5836
        %v5984 = vadd.f32 %v5260, %v5946
        %v5985 = vadd.f32 %v5261, %v5840
        %v5986 = vadd.f32 %v5262, %v5842
        %v5987 = vadd.f32 %v5263, %v5951
        %v5988 = vadd.f32 %v5264, %v5846
        %v5989 = vadd.f32 %v5265, %v5848
        %v5990 = vadd.f32 %v5266, %v5956
        %v5991 = vadd.f32 %v5267, %v5852
        %v5992 = vadd.f32 %v5268, %v5854
        %v5993 = vadd.f32 %v5269, %v5961
        %v5994 = vadd.f32 %v5270, %v5858
        %v5995 = vadd.f32 %v5271, %v5860
        %v5996 = vadd.f32 %v5272, %v5966
        %v5997 = vadd.f32 %v5273, %v5864
        %v5998 = vadd.f32 %v5274, %v5866
        %v5999 = vadd.f32 %v5275, %v5971
        %v6000 = vadd.f32 %v5276, %v5870
        %v6001 = vadd.f32 %v5277, %v5872
        %v6002 = vadd.f32 %v5278, %v5976
        %6003 = vst [vmem:[%s190] sm:$0xff] %v5979
        %6004 = vst [vmem:[%s190 + $0x8] sm:$0xff] %v5980
        %6005 = vst [vmem:[%s190 + $0x10] sm:$0xff] %v5981
        %6006 = vst [vmem:[%s190 + $0x18] sm:$0xff] %v5982
        %6007 = vst [vmem:[%s190 + $0x20] sm:$0xff] %v5983
        %6008 = vst [vmem:[%s190 + $0x28] sm:$0xff] %v5984
        %6009 = vst [vmem:[%s190 + $0x30] sm:$0xff] %v5985
        %6010 = vst [vmem:[%s190 + $0x38] sm:$0xff] %v5986
        %6011 = vst [vmem:[%s190 + $0x40] sm:$0xff] %v5987
        %6012 = vst [vmem:[%s190 + $0x48] sm:$0xff] %v5988
        %6013 = vst [vmem:[%s190 + $0x50] sm:$0xff] %v5989
        %6014 = vst [vmem:[%s190 + $0x58] sm:$0xff] %v5990
        %6015 = vst [vmem:[%s190 + $0x60] sm:$0xff] %v5991
        %6016 = vst [vmem:[%s190 + $0x68] sm:$0xff] %v5992
        %6017 = vst [vmem:[%s190 + $0x70] sm:$0xff] %v5993
        %6018 = vst [vmem:[%s190 + $0x78] sm:$0xff] %v5994
        %6019 = vst [vmem:[%s190 + $0x80] sm:$0xff] %v5995
        %6020 = vst [vmem:[%s190 + $0x88] sm:$0xff] %v5996
        %6021 = vst [vmem:[%s190 + $0x90] sm:$0xff] %v5997
        %6022 = vst [vmem:[%s190 + $0x98] sm:$0xff] %v5998
        %6023 = vst [vmem:[%s190 + $0xa0] sm:$0xff] %v5999
        %6024 = vst [vmem:[%s190 + $0xa8] sm:$0xff] %v6000
        %6025 = vst [vmem:[%s190 + $0xb0] sm:$0xff] %v6001
        %6026 = vst [vmem:[%s190 + $0xb8] sm:$0xff] %v6002
        %s6027 = sand.u32 %s115, 1
        %s6028 = scalar_lea.sflag [#allocation3], %s6027
        %s6029 = sand.u32 %s115, 1
        %s6030 = smul.addr %s6029, 192
        %s6031 = scalar_lea.vmem [#allocation2], %s6030
        // Predicated region
        $region37: #{multi_head_attention.1} parent=35 // pred_check
          %p6032 = pneg %p125
        $region38: #{multi_head_attention.1} parent=35 // pred_check_branch
          %6034 = sbr.rel (%p6032) target = $region40
        $region39: #{multi_head_attention.1} parent=35 // pred_region
          %s6036 = ssub.s32 3072, 3072
          %6037 = vsyncadd %s6028, %s6036
          %s6038 = smul.addr %s18, 24
          %s6039 = smul.addr %s6038, 128
          %s6040 = scalar_lea.hbm %s4, %s6039
          %s6041 = sshll.u32 %s6031, 4
          %s6042 = int_to_ptr.vmem [resolvable:$true] %s6041
          %6047 = dma.vmem_to_hbm [thread:$0]  %s6042, 3072, %s6040, %s6028, 384, 384, 24
        $region40: #{multi_head_attention.1} parent=35 // pred_fallthru
          _
      $region36: #{multi_head_attention.1} parent=5 // pred_fallthru
        _
      %p6048 = scmp.le.s32.totalorder 2, %s13
      // Predicated region
      $region41: #{multi_head_attention.1} parent=5 // pred_check
        %p6049 = pneg %p6048
      $region42: #{multi_head_attention.1} parent=5 // pred_check_branch
        %6051 = sbr.rel (%p6049) target = $region44
      $region43: #{multi_head_attention.1} parent=5 // pred_region
        %s6052 = ssub.s32 %s13, 2
        // Predicated region
        $region45: #{multi_head_attention.1} parent=43 // pred_check
          %p6053 = pneg %p131
        $region46: #{multi_head_attention.1} parent=43 // pred_check_branch
          %6055 = sbr.rel (%p6053) target = $region48
        $region47: #{multi_head_attention.1} parent=43 // pred_region
          %s6056 = sand.u32 %s116, 1
          %s6057 = scalar_lea.sflag [#allocation3], %s6056
          %s6058 = sand.u32 %s116, 1
          %s6059 = smul.addr %s6058, 192
          %s6060 = scalar_lea.vmem [#allocation2], %s6059
          %6061 = dma.done %s6057, 3072
        $region48: #{multi_head_attention.1} parent=43 // pred_fallthru
          _
      $region44: #{multi_head_attention.1} parent=5 // pred_fallthru
        _
    $region6: #{multi_head_attention.1} parent=1 // loop_footer
      %s17 = sadd.s32 1, %s13
    $region7: #{multi_head_attention.1} parent=1 // loop_footer_branch
      %12 = sbr.rel target = $region3
    $region8: #{multi_head_attention.1} parent=1 // loop_exit
      _
    %6062 = vsyncpa [#allocation3], 1
    %s6063 = scalar_lea.sflag [#allocation3], 1
    %6064 = vsyncpa %s6063, 1

</llo_original>
